<compile_context>
chip_gen: v7x
topology: tpu7x:2x2x1
jax: 0.10.0
libtpu: 0.0.40
codegen_flags: <defaults>
</compile_context>

<pallas_src>
import math
from functools import partial

import jax
import jax.numpy as jnp
from jax.experimental import pallas as pl
from jax.experimental.pallas import tpu as pltpu


def _round_up(v, m):
    return -(-v // m) * m


# ------------------------------ fused kernel ------------------------------- #

def _fused_kernel(x1_ref, w1_ref, b1_ref, w2_ref, b2_ref, wf_ref, bo_ref,
                  o_ref, h1e_ref, h1o_ref, h1es_ref, h2_ref,
                  *, tt2, nf1, nf2, cch):
    """One (batch, time-tile) grid step.

    x1_ref : (2, F1, U, 9)    conv1 im2col: [time-parity, freq col, row, tap]
    w1_ref : (9, C)           conv1 weight  (tap = ki*3+kj)
    b1_ref : (1, C)
    w2_ref : (3, 3*C, C)      conv2 weight per time tap ki, rows = (kj, cin)
    b2_ref : (1, C)
    wf_ref : (F2*C, odim_p)   final Linear, torch (c*F2+f2) ordering folded in
    bo_ref : (1, odim_p)
    o_ref  : (TT2, odim_p)
    h1e/h1o: (U, F1*C)        conv1 output, even/odd time rows (lane = f1*C+c)
    h1es   : (TT2, F1*C)      h1e shifted by one row (for conv2 time tap ki=2)
    h2     : (TT2, F2*C)      conv2 output staging for the final Linear
    """
    f32 = jnp.float32
    mmdt = h1e_ref.dtype

    # ---------------- conv1 + ReLU (MXU, per freq column) ------------------
    w1 = w1_ref[...]
    b1 = b1_ref[...]
    for p in range(2):
        dst = h1e_ref if p == 0 else h1o_ref
        for j in range(nf1):
            acc = jnp.dot(x1_ref[p, j], w1, preferred_element_type=f32)
            dst[:, j * cch:(j + 1) * cch] = (
                jnp.maximum(acc + b1, 0.0).astype(mmdt))

    # One shifted copy so every conv2 lhs slice below is sublane-aligned.
    h1es_ref[0:tt2, :] = h1e_ref[1:tt2 + 1, :]

    # -------------- conv2 + ReLU (3 zero-copy K=3C matmuls per f2) ---------
    b2 = b2_ref[...]
    for j2 in range(nf2):
        lo = 2 * j2 * cch
        acc = jnp.dot(h1e_ref[0:tt2, lo:lo + 3 * cch], w2_ref[0],
                      preferred_element_type=f32)
        acc = acc + jnp.dot(h1o_ref[0:tt2, lo:lo + 3 * cch], w2_ref[1],
                            preferred_element_type=f32)
        acc = acc + jnp.dot(h1es_ref[0:tt2, lo:lo + 3 * cch], w2_ref[2],
                            preferred_element_type=f32)
        h2_ref[:, j2 * cch:(j2 + 1) * cch] = (
            jnp.maximum(acc + b2, 0.0).astype(mmdt))

    # -------------------- final Linear (one big matmul) --------------------
    y = jnp.dot(h2_ref[...], wf_ref[...], preferred_element_type=f32)
    o_ref[...] = (y + bo_ref[...]).astype(o_ref.dtype)


# ------------------------------ public forward ----------------------------- #

def conv2d_subsampling_wo_posenc(x, x_mask, params, kernels, strides,
                                 *, time_tile=128, matmul_dtype=jnp.float32):
    """x: (B, T, idim) f32; x_mask: (B, 1, T) or None. Returns (y, mask)."""
    kernels, strides = tuple(kernels), tuple(strides)
    assert kernels == (3, 3) and strides == (2, 2), \
        "fused kernel is specialized to kernels=[3,3], strides=[2,2]"

    B, T, idim = x.shape
    (w1, b1), (w2, b2) = params["conv"]
    w_out, b_out = params["out"]
    C = w1.shape[0]
    odim = w_out.shape[0]

    T1 = (T - 3) // 2 + 1
    F1 = (idim - 3) // 2 + 1
    T2 = (T1 - 3) // 2 + 1
    F2 = (F1 - 3) // 2 + 1
    assert T2 >= 1 and F2 >= 1, "input too small for two stride-2 3x3 convs"

    # ---- tiling: TT2 conv2-output rows per grid step (multiple of 8) -------
    TT2 = _round_up(max(8, min(time_tile, T2)), 8)
    NT = -(-T2 // TT2)
    T2p = NT * TT2
    U = TT2 + 1                            # conv1 rows needed per time parity
    odim_p = _round_up(odim, 128)          # lane-dense output stores

    # ---- input prep: conv1 im2col, parity-split per tile, one gather -------
    T1all = 2 * T2p + 2
    Tpad = max(2 * T1all + 1, T)
    Fpad = max(idim, 2 * F1 + 1)
    xp = jnp.pad(x, ((0, 0), (0, Tpad - T), (0, Fpad - idim)))
    taps = [xp[:, a: a + 2 * T1all: 2, bb: bb + 2 * F1: 2]
            for a in range(3) for bb in range(3)]
    x1 = jnp.stack(taps, axis=-1)                              # (B, T1all, F1, 9)
    t_idx = (2 * TT2 * jnp.arange(NT)[:, None, None]
             + jnp.arange(2)[None, :, None]
             + 2 * jnp.arange(U)[None, None, :]).reshape(-1)   # (NT*2*U,)
    x1 = jnp.take(x1, t_idx, axis=1)
    x1 = x1.reshape(B, NT, 2, U, F1, 9)
    x1 = jnp.transpose(x1, (0, 1, 2, 4, 3, 5)).astype(matmul_dtype)

    # ---- weight re-layout (torch transpose folded into the Linear weight) --
    w1p = jnp.transpose(w1[:, 0].reshape(C, 9), (1, 0)).astype(matmul_dtype)
    b1p = b1.reshape(1, C).astype(jnp.float32)
    w2p = jnp.transpose(w2, (2, 3, 1, 0)).reshape(3, 3 * C, C).astype(matmul_dtype)
    b2p = b2.reshape(1, C).astype(jnp.float32)
    wfp = jnp.transpose(w_out.reshape(odim, C, F2), (2, 1, 0)).reshape(F2 * C, odim)
    wfp = jnp.pad(wfp, ((0, 0), (0, odim_p - odim))).astype(matmul_dtype)
    bop = jnp.pad(b_out, (0, odim_p - odim)).reshape(1, odim_p).astype(jnp.float32)

    kernel = partial(_fused_kernel, tt2=TT2, nf1=F1, nf2=F2, cch=C)

    # Advisory cost (weights counted once; x1 counted at true HBM size).
    itm = jnp.dtype(matmul_dtype).itemsize
    flops = 2 * B * NT * (2 * F1 * U * 9 * C
                          + F2 * TT2 * 9 * C * C
                          + TT2 * F2 * C * odim_p)
    bytes_accessed = int(x1.size * itm + (w1p.size + w2p.size + wfp.size) * itm
                         + B * T2p * odim_p * 4)

    # Rough per-step VMEM need (x1 lane-padded to 128; inputs double-buffered).
    vmem_need = (2 * (2 * F1 * U * 128 * 4)
                 + 2 * (w1p.size + w2p.size + wfp.size) * itm
                 + 2 * TT2 * odim_p * 4
                 + (3 * U + TT2) * F1 * C * itm
                 + TT2 * F2 * C * itm
                 + (1 << 20))
    vmem_limit = int(min(max(vmem_need, 32 * 1024 * 1024), 127 * 1024 * 1024))

    y_pad = pl.pallas_call(
        kernel,
        out_shape=jax.ShapeDtypeStruct((B, T2p, odim_p), jnp.float32),
        grid_spec=pltpu.PrefetchScalarGridSpec(
            num_scalar_prefetch=0,
            grid=(B, NT),
            in_specs=[
                pl.BlockSpec((None, None, 2, F1, U, 9),
                             lambda b, t: (b, t, 0, 0, 0, 0)),
                pl.BlockSpec((9, C), lambda b, t: (0, 0)),
                pl.BlockSpec((1, C), lambda b, t: (0, 0)),
                pl.BlockSpec((3, 3 * C, C), lambda b, t: (0, 0, 0)),
                pl.BlockSpec((1, C), lambda b, t: (0, 0)),
                pl.BlockSpec((F2 * C, odim_p), lambda b, t: (0, 0)),
                pl.BlockSpec((1, odim_p), lambda b, t: (0, 0)),
            ],
            out_specs=pl.BlockSpec((None, TT2, odim_p), lambda b, t: (b, t, 0)),
            scratch_shapes=[
                pltpu.VMEM((U, F1 * C), matmul_dtype),     # h1e  (even rows)
                pltpu.VMEM((U, F1 * C), matmul_dtype),     # h1o  (odd rows)
                pltpu.VMEM((TT2, F1 * C), matmul_dtype),   # h1es (even, +1 shift)
                pltpu.VMEM((TT2, F2 * C), matmul_dtype),   # h2 staging
            ],
        ),
        compiler_params=pltpu.CompilerParams(
            dimension_semantics=("parallel", "parallel"),
            vmem_limit_bytes=vmem_limit),
        cost_estimate=pl.CostEstimate(flops=flops, transcendentals=0,
                                      bytes_accessed=bytes_accessed),
    )(x1, w1p, b1p, w2p, b2p, wfp, bop)

    y = y_pad[:, :T2, :odim]

    if x_mask is None:
        return y, None
    for k, s in zip(kernels, strides):
        x_mask = x_mask[:, :, : -(k - 1): s] if k > 1 else x_mask[:, :, ::s]
    return y, x_mask


# --------------------------- deterministic init ---------------------------- #

def init_params(key, idim, odim, kernels, strides):
    params = {"conv": []}
    olen = idim
    c_in = 1
    keys = jax.random.split(key, len(kernels) + 1)
    for i, (k, s) in enumerate(zip(kernels, strides)):
        fan_in = c_in * k * k
        bound = 1.0 / math.sqrt(fan_in)
        kw, kb = jax.random.split(keys[i])
        w = jax.random.uniform(kw, (odim, c_in, k, k), jnp.float32, -bound, bound)
        b = jax.random.uniform(kb, (odim,), jnp.float32, -bound, bound)
        params["conv"].append((w, b))
        olen = math.floor((olen - k) / s + 1)
        c_in = odim
    fan_in = odim * olen
    bound = 1.0 / math.sqrt(fan_in)
    kw, kb = jax.random.split(keys[-1])
    w = jax.random.uniform(kw, (odim, fan_in), jnp.float32, -bound, bound)
    b = jax.random.uniform(kb, (odim,), jnp.float32, -bound, bound)
    params["out"] = (w, b)
    return params, olen


# ------------------------------ JAX reference ------------------------------ #

def reference_forward(x, x_mask, params, kernels, strides):
    h = x[:, None, :, :]  # NCHW
    for (w, b), k, s in zip(params["conv"], kernels, strides):
        h = jax.lax.conv_general_dilated(
            h, w, (s, s), "VALID", dimension_numbers=("NCHW", "OIHW", "NCHW"))
        h = jnp.maximum(h + b[None, :, None, None], 0.0)
    B, C, T, F = h.shape
    h = jnp.transpose(h, (0, 2, 1, 3)).reshape(B, T, C * F)
    w, b = params["out"]
    y = h @ w.T + b
    if x_mask is None:
        return y, None
    for k, s in zip(kernels, strides):
        x_mask = x_mask[:, :, : -(k - 1): s] if k > 1 else x_mask[:, :, ::s]
    return y, x_mask


# ---------------------------------- main ----------------------------------- #

if __name__ == "__main__":
    kernels = [3, 3]
    strides = [2, 2]
    key = jax.random.PRNGKey(0)

    # Config 1: small shapes, single time tile.
    B, T, idim, odim = 2, 16, 16, 32
    k_params, k_x, key = jax.random.split(key, 3)
    params, _ = init_params(k_params, idim, odim, kernels, strides)
    x = jax.random.normal(k_x, (B, T, idim), jnp.float32)
    x_mask = jnp.ones((B, 1, T), dtype=bool)

    y, m = conv2d_subsampling_wo_posenc(x, x_mask, params, kernels, strides)
    y = jax.block_until_ready(y)
    m = jax.block_until_ready(m)
    y_ref, m_ref = reference_forward(x, x_mask, params, kernels, strides)
    assert y.shape == y_ref.shape, (y.shape, y_ref.shape)
    assert m.shape == m_ref.shape, (m.shape, m_ref.shape)
    assert jnp.allclose(y, y_ref, atol=1e-4, rtol=1e-4), "mismatch vs reference"
    assert bool(jnp.all(m == m_ref)), "mask mismatch vs reference"

    # Config 2: longer sequence, time_tile=8 -> multiple tiles + padding.
    B2, T2_, idim2, odim2 = 2, 64, 16, 32
    k_params2, k_x2, key = jax.random.split(key, 3)
    params2, _ = init_params(k_params2, idim2, odim2, kernels, strides)
    x2 = jax.random.normal(k_x2, (B2, T2_, idim2), jnp.float32)
    x2_mask = jnp.ones((B2, 1, T2_), dtype=bool)
    y2, m2 = conv2d_subsampling_wo_posenc(
        x2, x2_mask, params2, kernels, strides, time_tile=8)
    y2 = jax.block_until_ready(y2)
    y2_ref, m2_ref = reference_forward(x2, x2_mask, params2, kernels, strides)
    assert y2.shape == y2_ref.shape, (y2.shape, y2_ref.shape)
    assert jnp.allclose(y2, y2_ref, atol=1e-4, rtol=1e-4), "tiled mismatch"
    assert bool(jnp.all(m2 == m2_ref)), "tiled mask mismatch"

    # bf16 MXU path (production default on v6e/v7x): compile/run smoke test.
    y3, _ = conv2d_subsampling_wo_posenc(
        x2, None, params2, kernels, strides, time_tile=8,
        matmul_dtype=jnp.bfloat16)
    jax.block_until_ready(y3)

    print("KERNEL_OK")
</pallas_src>

<mosaic_0001>
module attributes {stable_mosaic.version = 11 : i64} {
  func.func @_fused_kernel(%arg0: i32, %arg1: i32, %arg2: memref<1x1x2x7x9x9xf32, #tpu.memory_space<vmem>>, %arg3: memref<9x32xf32, #tpu.memory_space<vmem>>, %arg4: memref<1x32xf32, #tpu.memory_space<vmem>>, %arg5: memref<3x96x32xf32, #tpu.memory_space<vmem>>, %arg6: memref<1x32xf32, #tpu.memory_space<vmem>>, %arg7: memref<96x128xf32, #tpu.memory_space<vmem>>, %arg8: memref<1x128xf32, #tpu.memory_space<vmem>>, %arg9: memref<1x8x128xf32, #tpu.memory_space<vmem>>, %arg10: memref<9x224xf32, #tpu.memory_space<vmem>>, %arg11: memref<9x224xf32, #tpu.memory_space<vmem>>, %arg12: memref<8x224xf32, #tpu.memory_space<vmem>>, %arg13: memref<8x96xf32, #tpu.memory_space<vmem>>) attributes {dimension_semantics = [#tpu.dimension_semantics<parallel>, #tpu.dimension_semantics<parallel>], iteration_bounds = array<i64: 2, 1>, scalar_prefetch = 0 : i64, scratch_operands = 4 : i64, tpu.core_type = #tpu.core_type<tc>, window_params = [{transform_indices = @transform_0, window_bounds = array<i64: 1, 1, 2, 7, 9, 9>}, {pipeline_mode = #tpu.pipeline_mode<synchronous>, transform_indices = @transform_1, window_bounds = array<i64: 9, 32>}, {pipeline_mode = #tpu.pipeline_mode<synchronous>, transform_indices = @transform_2, window_bounds = array<i64: 1, 32>}, {pipeline_mode = #tpu.pipeline_mode<synchronous>, transform_indices = @transform_3, window_bounds = array<i64: 3, 96, 32>}, {pipeline_mode = #tpu.pipeline_mode<synchronous>, transform_indices = @transform_4, window_bounds = array<i64: 1, 32>}, {pipeline_mode = #tpu.pipeline_mode<synchronous>, transform_indices = @transform_5, window_bounds = array<i64: 96, 128>}, {pipeline_mode = #tpu.pipeline_mode<synchronous>, transform_indices = @transform_6, window_bounds = array<i64: 1, 128>}, {transform_indices = @transform_7, window_bounds = array<i64: 1, 8, 128>}]} {
    %c0 = arith.constant 0 : index
    %c0_0 = arith.constant 0 : index
    %0 = vector.load %arg3[%c0, %c0_0] : memref<9x32xf32, #tpu.memory_space<vmem>>, vector<9x32xf32>
    %c0_1 = arith.constant 0 : index
    %c0_2 = arith.constant 0 : index
    %1 = vector.load %arg4[%c0_1, %c0_2] : memref<1x32xf32, #tpu.memory_space<vmem>>, vector<1x32xf32>
    %c0_3 = arith.constant 0 : index
    %c0_4 = arith.constant 0 : index
    %c0_5 = arith.constant 0 : index
    %c0_6 = arith.constant 0 : index
    %c0_7 = arith.constant 0 : index
    %c0_8 = arith.constant 0 : index
    %2 = vector.load %arg2[%c0_3, %c0_4, %c0_5, %c0_6, %c0_7, %c0_8] : memref<1x1x2x7x9x9xf32, #tpu.memory_space<vmem>>, vector<1x1x1x1x9x9xf32>
    %3 = vector.shape_cast %2 : vector<1x1x1x1x9x9xf32> to vector<9x9xf32>
    %cst = arith.constant dense<0.000000e+00> : vector<9x32xf32>
    %4 = tpu.matmul %3, %0, %cst {dimension_numbers = #tpu.dot_dimension_numbers<[1], [0], [0], [1], [0, 0, 1, 1], [], []>} : vector<9x9xf32>, vector<9x32xf32>, vector<9x32xf32> -> vector<9x32xf32>
    %5 = vector.broadcast %1 : vector<1x32xf32> to vector<9x32xf32>
    %6 = arith.addf %4, %5 : vector<9x32xf32>
    %cst_9 = arith.constant 0.000000e+00 : f32
    %7 = vector.broadcast %cst_9 : f32 to vector<9x32xf32>
    %8 = arith.maximumf %6, %7 : vector<9x32xf32>
    %c0_10 = arith.constant 0 : index
    %c0_11 = arith.constant 0 : index
    %9 = vector.load %arg10[%c0_10, %c0_11] : memref<9x224xf32, #tpu.memory_space<vmem>>, vector<9x32xf32>
    tpu.vector_store %arg10[%c0_10, %c0_11], %8 {strides = array<i32>} : memref<9x224xf32, #tpu.memory_space<vmem>>, vector<9x32xf32>,
    %c0_12 = arith.constant 0 : index
    %c0_13 = arith.constant 0 : index
    %c0_14 = arith.constant 0 : index
    %c1 = arith.constant 1 : index
    %c0_15 = arith.constant 0 : index
    %c0_16 = arith.constant 0 : index
    %10 = vector.load %arg2[%c0_12, %c0_13, %c0_14, %c1, %c0_15, %c0_16] : memref<1x1x2x7x9x9xf32, #tpu.memory_space<vmem>>, vector<1x1x1x1x9x9xf32>
    %11 = vector.shape_cast %10 : vector<1x1x1x1x9x9xf32> to vector<9x9xf32>
    %cst_17 = arith.constant dense<0.000000e+00> : vector<9x32xf32>
    %12 = tpu.matmul %11, %0, %cst_17 {dimension_numbers = #tpu.dot_dimension_numbers<[1], [0], [0], [1], [0, 0, 1, 1], [], []>} : vector<9x9xf32>, vector<9x32xf32>, vector<9x32xf32> -> vector<9x32xf32>
    %13 = vector.broadcast %1 : vector<1x32xf32> to vector<9x32xf32>
    %14 = arith.addf %12, %13 : vector<9x32xf32>
    %cst_18 = arith.constant 0.000000e+00 : f32
    %15 = vector.broadcast %cst_18 : f32 to vector<9x32xf32>
    %16 = arith.maximumf %14, %15 : vector<9x32xf32>
    %c0_19 = arith.constant 0 : index
    %c32 = arith.constant 32 : index
    %17 = vector.load %arg10[%c0_19, %c32] : memref<9x224xf32, #tpu.memory_space<vmem>>, vector<9x32xf32>
    tpu.vector_store %arg10[%c0_19, %c32], %16 {strides = array<i32>} : memref<9x224xf32, #tpu.memory_space<vmem>>, vector<9x32xf32>,
    %c0_20 = arith.constant 0 : index
    %c0_21 = arith.constant 0 : index
    %c0_22 = arith.constant 0 : index
    %c2 = arith.constant 2 : index
    %c0_23 = arith.constant 0 : index
    %c0_24 = arith.constant 0 : index
    %18 = vector.load %arg2[%c0_20, %c0_21, %c0_22, %c2, %c0_23, %c0_24] : memref<1x1x2x7x9x9xf32, #tpu.memory_space<vmem>>, vector<1x1x1x1x9x9xf32>
    %19 = vector.shape_cast %18 : vector<1x1x1x1x9x9xf32> to vector<9x9xf32>
    %cst_25 = arith.constant dense<0.000000e+00> : vector<9x32xf32>
    %20 = tpu.matmul %19, %0, %cst_25 {dimension_numbers = #tpu.dot_dimension_numbers<[1], [0], [0], [1], [0, 0, 1, 1], [], []>} : vector<9x9xf32>, vector<9x32xf32>, vector<9x32xf32> -> vector<9x32xf32>
    %21 = vector.broadcast %1 : vector<1x32xf32> to vector<9x32xf32>
    %22 = arith.addf %20, %21 : vector<9x32xf32>
    %cst_26 = arith.constant 0.000000e+00 : f32
    %23 = vector.broadcast %cst_26 : f32 to vector<9x32xf32>
    %24 = arith.maximumf %22, %23 : vector<9x32xf32>
    %c0_27 = arith.constant 0 : index
    %c64 = arith.constant 64 : index
    %25 = vector.load %arg10[%c0_27, %c64] : memref<9x224xf32, #tpu.memory_space<vmem>>, vector<9x32xf32>
    tpu.vector_store %arg10[%c0_27, %c64], %24 {strides = array<i32>} : memref<9x224xf32, #tpu.memory_space<vmem>>, vector<9x32xf32>,
    %c0_28 = arith.constant 0 : index
    %c0_29 = arith.constant 0 : index
    %c0_30 = arith.constant 0 : index
    %c3 = arith.constant 3 : index
    %c0_31 = arith.constant 0 : index
    %c0_32 = arith.constant 0 : index
    %26 = vector.load %arg2[%c0_28, %c0_29, %c0_30, %c3, %c0_31, %c0_32] : memref<1x1x2x7x9x9xf32, #tpu.memory_space<vmem>>, vector<1x1x1x1x9x9xf32>
    %27 = vector.shape_cast %26 : vector<1x1x1x1x9x9xf32> to vector<9x9xf32>
    %cst_33 = arith.constant dense<0.000000e+00> : vector<9x32xf32>
    %28 = tpu.matmul %27, %0, %cst_33 {dimension_numbers = #tpu.dot_dimension_numbers<[1], [0], [0], [1], [0, 0, 1, 1], [], []>} : vector<9x9xf32>, vector<9x32xf32>, vector<9x32xf32> -> vector<9x32xf32>
    %29 = vector.broadcast %1 : vector<1x32xf32> to vector<9x32xf32>
    %30 = arith.addf %28, %29 : vector<9x32xf32>
    %cst_34 = arith.constant 0.000000e+00 : f32
    %31 = vector.broadcast %cst_34 : f32 to vector<9x32xf32>
    %32 = arith.maximumf %30, %31 : vector<9x32xf32>
    %c0_35 = arith.constant 0 : index
    %c96 = arith.constant 96 : index
    %33 = vector.load %arg10[%c0_35, %c96] : memref<9x224xf32, #tpu.memory_space<vmem>>, vector<9x32xf32>
    tpu.vector_store %arg10[%c0_35, %c96], %32 {strides = array<i32>} : memref<9x224xf32, #tpu.memory_space<vmem>>, vector<9x32xf32>,
    %c0_36 = arith.constant 0 : index
    %c0_37 = arith.constant 0 : index
    %c0_38 = arith.constant 0 : index
    %c4 = arith.constant 4 : index
    %c0_39 = arith.constant 0 : index
    %c0_40 = arith.constant 0 : index
    %34 = vector.load %arg2[%c0_36, %c0_37, %c0_38, %c4, %c0_39, %c0_40] : memref<1x1x2x7x9x9xf32, #tpu.memory_space<vmem>>, vector<1x1x1x1x9x9xf32>
    %35 = vector.shape_cast %34 : vector<1x1x1x1x9x9xf32> to vector<9x9xf32>
    %cst_41 = arith.constant dense<0.000000e+00> : vector<9x32xf32>
    %36 = tpu.matmul %35, %0, %cst_41 {dimension_numbers = #tpu.dot_dimension_numbers<[1], [0], [0], [1], [0, 0, 1, 1], [], []>} : vector<9x9xf32>, vector<9x32xf32>, vector<9x32xf32> -> vector<9x32xf32>
    %37 = vector.broadcast %1 : vector<1x32xf32> to vector<9x32xf32>
    %38 = arith.addf %36, %37 : vector<9x32xf32>
    %cst_42 = arith.constant 0.000000e+00 : f32
    %39 = vector.broadcast %cst_42 : f32 to vector<9x32xf32>
    %40 = arith.maximumf %38, %39 : vector<9x32xf32>
    %c0_43 = arith.constant 0 : index
    %c128 = arith.constant 128 : index
    %41 = vector.load %arg10[%c0_43, %c128] : memref<9x224xf32, #tpu.memory_space<vmem>>, vector<9x32xf32>
    tpu.vector_store %arg10[%c0_43, %c128], %40 {strides = array<i32>} : memref<9x224xf32, #tpu.memory_space<vmem>>, vector<9x32xf32>,
    %c0_44 = arith.constant 0 : index
    %c0_45 = arith.constant 0 : index
    %c0_46 = arith.constant 0 : index
    %c5 = arith.constant 5 : index
    %c0_47 = arith.constant 0 : index
    %c0_48 = arith.constant 0 : index
    %42 = vector.load %arg2[%c0_44, %c0_45, %c0_46, %c5, %c0_47, %c0_48] : memref<1x1x2x7x9x9xf32, #tpu.memory_space<vmem>>, vector<1x1x1x1x9x9xf32>
    %43 = vector.shape_cast %42 : vector<1x1x1x1x9x9xf32> to vector<9x9xf32>
    %cst_49 = arith.constant dense<0.000000e+00> : vector<9x32xf32>
    %44 = tpu.matmul %43, %0, %cst_49 {dimension_numbers = #tpu.dot_dimension_numbers<[1], [0], [0], [1], [0, 0, 1, 1], [], []>} : vector<9x9xf32>, vector<9x32xf32>, vector<9x32xf32> -> vector<9x32xf32>
    %45 = vector.broadcast %1 : vector<1x32xf32> to vector<9x32xf32>
    %46 = arith.addf %44, %45 : vector<9x32xf32>
    %cst_50 = arith.constant 0.000000e+00 : f32
    %47 = vector.broadcast %cst_50 : f32 to vector<9x32xf32>
    %48 = arith.maximumf %46, %47 : vector<9x32xf32>
    %c0_51 = arith.constant 0 : index
    %c160 = arith.constant 160 : index
    %49 = vector.load %arg10[%c0_51, %c160] : memref<9x224xf32, #tpu.memory_space<vmem>>, vector<9x32xf32>
    tpu.vector_store %arg10[%c0_51, %c160], %48 {strides = array<i32>} : memref<9x224xf32, #tpu.memory_space<vmem>>, vector<9x32xf32>,
    %c0_52 = arith.constant 0 : index
    %c0_53 = arith.constant 0 : index
    %c0_54 = arith.constant 0 : index
    %c6 = arith.constant 6 : index
    %c0_55 = arith.constant 0 : index
    %c0_56 = arith.constant 0 : index
    %50 = vector.load %arg2[%c0_52, %c0_53, %c0_54, %c6, %c0_55, %c0_56] : memref<1x1x2x7x9x9xf32, #tpu.memory_space<vmem>>, vector<1x1x1x1x9x9xf32>
    %51 = vector.shape_cast %50 : vector<1x1x1x1x9x9xf32> to vector<9x9xf32>
    %cst_57 = arith.constant dense<0.000000e+00> : vector<9x32xf32>
    %52 = tpu.matmul %51, %0, %cst_57 {dimension_numbers = #tpu.dot_dimension_numbers<[1], [0], [0], [1], [0, 0, 1, 1], [], []>} : vector<9x9xf32>, vector<9x32xf32>, vector<9x32xf32> -> vector<9x32xf32>
    %53 = vector.broadcast %1 : vector<1x32xf32> to vector<9x32xf32>
    %54 = arith.addf %52, %53 : vector<9x32xf32>
    %cst_58 = arith.constant 0.000000e+00 : f32
    %55 = vector.broadcast %cst_58 : f32 to vector<9x32xf32>
    %56 = arith.maximumf %54, %55 : vector<9x32xf32>
    %c0_59 = arith.constant 0 : index
    %c192 = arith.constant 192 : index
    %57 = vector.load %arg10[%c0_59, %c192] : memref<9x224xf32, #tpu.memory_space<vmem>>, vector<9x32xf32>
    tpu.vector_store %arg10[%c0_59, %c192], %56 {strides = array<i32>} : memref<9x224xf32, #tpu.memory_space<vmem>>, vector<9x32xf32>,
    %c0_60 = arith.constant 0 : index
    %c0_61 = arith.constant 0 : index
    %c1_62 = arith.constant 1 : index
    %c0_63 = arith.constant 0 : index
    %c0_64 = arith.constant 0 : index
    %c0_65 = arith.constant 0 : index
    %58 = vector.load %arg2[%c0_60, %c0_61, %c1_62, %c0_63, %c0_64, %c0_65] : memref<1x1x2x7x9x9xf32, #tpu.memory_space<vmem>>, vector<1x1x1x1x9x9xf32>
    %59 = vector.shape_cast %58 : vector<1x1x1x1x9x9xf32> to vector<9x9xf32>
    %cst_66 = arith.constant dense<0.000000e+00> : vector<9x32xf32>
    %60 = tpu.matmul %59, %0, %cst_66 {dimension_numbers = #tpu.dot_dimension_numbers<[1], [0], [0], [1], [0, 0, 1, 1], [], []>} : vector<9x9xf32>, vector<9x32xf32>, vector<9x32xf32> -> vector<9x32xf32>
    %61 = vector.broadcast %1 : vector<1x32xf32> to vector<9x32xf32>
    %62 = arith.addf %60, %61 : vector<9x32xf32>
    %cst_67 = arith.constant 0.000000e+00 : f32
    %63 = vector.broadcast %cst_67 : f32 to vector<9x32xf32>
    %64 = arith.maximumf %62, %63 : vector<9x32xf32>
    %c0_68 = arith.constant 0 : index
    %c0_69 = arith.constant 0 : index
    %65 = vector.load %arg11[%c0_68, %c0_69] : memref<9x224xf32, #tpu.memory_space<vmem>>, vector<9x32xf32>
    tpu.vector_store %arg11[%c0_68, %c0_69], %64 {strides = array<i32>} : memref<9x224xf32, #tpu.memory_space<vmem>>, vector<9x32xf32>,
    %c0_70 = arith.constant 0 : index
    %c0_71 = arith.constant 0 : index
    %c1_72 = arith.constant 1 : index
    %c1_73 = arith.constant 1 : index
    %c0_74 = arith.constant 0 : index
    %c0_75 = arith.constant 0 : index
    %66 = vector.load %arg2[%c0_70, %c0_71, %c1_72, %c1_73, %c0_74, %c0_75] : memref<1x1x2x7x9x9xf32, #tpu.memory_space<vmem>>, vector<1x1x1x1x9x9xf32>
    %67 = vector.shape_cast %66 : vector<1x1x1x1x9x9xf32> to vector<9x9xf32>
    %cst_76 = arith.constant dense<0.000000e+00> : vector<9x32xf32>
    %68 = tpu.matmul %67, %0, %cst_76 {dimension_numbers = #tpu.dot_dimension_numbers<[1], [0], [0], [1], [0, 0, 1, 1], [], []>} : vector<9x9xf32>, vector<9x32xf32>, vector<9x32xf32> -> vector<9x32xf32>
    %69 = vector.broadcast %1 : vector<1x32xf32> to vector<9x32xf32>
    %70 = arith.addf %68, %69 : vector<9x32xf32>
    %cst_77 = arith.constant 0.000000e+00 : f32
    %71 = vector.broadcast %cst_77 : f32 to vector<9x32xf32>
    %72 = arith.maximumf %70, %71 : vector<9x32xf32>
    %c0_78 = arith.constant 0 : index
    %c32_79 = arith.constant 32 : index
    %73 = vector.load %arg11[%c0_78, %c32_79] : memref<9x224xf32, #tpu.memory_space<vmem>>, vector<9x32xf32>
    tpu.vector_store %arg11[%c0_78, %c32_79], %72 {strides = array<i32>} : memref<9x224xf32, #tpu.memory_space<vmem>>, vector<9x32xf32>,
    %c0_80 = arith.constant 0 : index
    %c0_81 = arith.constant 0 : index
    %c1_82 = arith.constant 1 : index
    %c2_83 = arith.constant 2 : index
    %c0_84 = arith.constant 0 : index
    %c0_85 = arith.constant 0 : index
    %74 = vector.load %arg2[%c0_80, %c0_81, %c1_82, %c2_83, %c0_84, %c0_85] : memref<1x1x2x7x9x9xf32, #tpu.memory_space<vmem>>, vector<1x1x1x1x9x9xf32>
    %75 = vector.shape_cast %74 : vector<1x1x1x1x9x9xf32> to vector<9x9xf32>
    %cst_86 = arith.constant dense<0.000000e+00> : vector<9x32xf32>
    %76 = tpu.matmul %75, %0, %cst_86 {dimension_numbers = #tpu.dot_dimension_numbers<[1], [0], [0], [1], [0, 0, 1, 1], [], []>} : vector<9x9xf32>, vector<9x32xf32>, vector<9x32xf32> -> vector<9x32xf32>
    %77 = vector.broadcast %1 : vector<1x32xf32> to vector<9x32xf32>
    %78 = arith.addf %76, %77 : vector<9x32xf32>
    %cst_87 = arith.constant 0.000000e+00 : f32
    %79 = vector.broadcast %cst_87 : f32 to vector<9x32xf32>
    %80 = arith.maximumf %78, %79 : vector<9x32xf32>
    %c0_88 = arith.constant 0 : index
    %c64_89 = arith.constant 64 : index
    %81 = vector.load %arg11[%c0_88, %c64_89] : memref<9x224xf32, #tpu.memory_space<vmem>>, vector<9x32xf32>
    tpu.vector_store %arg11[%c0_88, %c64_89], %80 {strides = array<i32>} : memref<9x224xf32, #tpu.memory_space<vmem>>, vector<9x32xf32>,
    %c0_90 = arith.constant 0 : index
    %c0_91 = arith.constant 0 : index
    %c1_92 = arith.constant 1 : index
    %c3_93 = arith.constant 3 : index
    %c0_94 = arith.constant 0 : index
    %c0_95 = arith.constant 0 : index
    %82 = vector.load %arg2[%c0_90, %c0_91, %c1_92, %c3_93, %c0_94, %c0_95] : memref<1x1x2x7x9x9xf32, #tpu.memory_space<vmem>>, vector<1x1x1x1x9x9xf32>
    %83 = vector.shape_cast %82 : vector<1x1x1x1x9x9xf32> to vector<9x9xf32>
    %cst_96 = arith.constant dense<0.000000e+00> : vector<9x32xf32>
    %84 = tpu.matmul %83, %0, %cst_96 {dimension_numbers = #tpu.dot_dimension_numbers<[1], [0], [0], [1], [0, 0, 1, 1], [], []>} : vector<9x9xf32>, vector<9x32xf32>, vector<9x32xf32> -> vector<9x32xf32>
    %85 = vector.broadcast %1 : vector<1x32xf32> to vector<9x32xf32>
    %86 = arith.addf %84, %85 : vector<9x32xf32>
    %cst_97 = arith.constant 0.000000e+00 : f32
    %87 = vector.broadcast %cst_97 : f32 to vector<9x32xf32>
    %88 = arith.maximumf %86, %87 : vector<9x32xf32>
    %c0_98 = arith.constant 0 : index
    %c96_99 = arith.constant 96 : index
    %89 = vector.load %arg11[%c0_98, %c96_99] : memref<9x224xf32, #tpu.memory_space<vmem>>, vector<9x32xf32>
    tpu.vector_store %arg11[%c0_98, %c96_99], %88 {strides = array<i32>} : memref<9x224xf32, #tpu.memory_space<vmem>>, vector<9x32xf32>,
    %c0_100 = arith.constant 0 : index
    %c0_101 = arith.constant 0 : index
    %c1_102 = arith.constant 1 : index
    %c4_103 = arith.constant 4 : index
    %c0_104 = arith.constant 0 : index
    %c0_105 = arith.constant 0 : index
    %90 = vector.load %arg2[%c0_100, %c0_101, %c1_102, %c4_103, %c0_104, %c0_105] : memref<1x1x2x7x9x9xf32, #tpu.memory_space<vmem>>, vector<1x1x1x1x9x9xf32>
    %91 = vector.shape_cast %90 : vector<1x1x1x1x9x9xf32> to vector<9x9xf32>
    %cst_106 = arith.constant dense<0.000000e+00> : vector<9x32xf32>
    %92 = tpu.matmul %91, %0, %cst_106 {dimension_numbers = #tpu.dot_dimension_numbers<[1], [0], [0], [1], [0, 0, 1, 1], [], []>} : vector<9x9xf32>, vector<9x32xf32>, vector<9x32xf32> -> vector<9x32xf32>
    %93 = vector.broadcast %1 : vector<1x32xf32> to vector<9x32xf32>
    %94 = arith.addf %92, %93 : vector<9x32xf32>
    %cst_107 = arith.constant 0.000000e+00 : f32
    %95 = vector.broadcast %cst_107 : f32 to vector<9x32xf32>
    %96 = arith.maximumf %94, %95 : vector<9x32xf32>
    %c0_108 = arith.constant 0 : index
    %c128_109 = arith.constant 128 : index
    %97 = vector.load %arg11[%c0_108, %c128_109] : memref<9x224xf32, #tpu.memory_space<vmem>>, vector<9x32xf32>
    tpu.vector_store %arg11[%c0_108, %c128_109], %96 {strides = array<i32>} : memref<9x224xf32, #tpu.memory_space<vmem>>, vector<9x32xf32>,
    %c0_110 = arith.constant 0 : index
    %c0_111 = arith.constant 0 : index
    %c1_112 = arith.constant 1 : index
    %c5_113 = arith.constant 5 : index
    %c0_114 = arith.constant 0 : index
    %c0_115 = arith.constant 0 : index
    %98 = vector.load %arg2[%c0_110, %c0_111, %c1_112, %c5_113, %c0_114, %c0_115] : memref<1x1x2x7x9x9xf32, #tpu.memory_space<vmem>>, vector<1x1x1x1x9x9xf32>
    %99 = vector.shape_cast %98 : vector<1x1x1x1x9x9xf32> to vector<9x9xf32>
    %cst_116 = arith.constant dense<0.000000e+00> : vector<9x32xf32>
    %100 = tpu.matmul %99, %0, %cst_116 {dimension_numbers = #tpu.dot_dimension_numbers<[1], [0], [0], [1], [0, 0, 1, 1], [], []>} : vector<9x9xf32>, vector<9x32xf32>, vector<9x32xf32> -> vector<9x32xf32>
    %101 = vector.broadcast %1 : vector<1x32xf32> to vector<9x32xf32>
    %102 = arith.addf %100, %101 : vector<9x32xf32>
    %cst_117 = arith.constant 0.000000e+00 : f32
    %103 = vector.broadcast %cst_117 : f32 to vector<9x32xf32>
    %104 = arith.maximumf %102, %103 : vector<9x32xf32>
    %c0_118 = arith.constant 0 : index
    %c160_119 = arith.constant 160 : index
    %105 = vector.load %arg11[%c0_118, %c160_119] : memref<9x224xf32, #tpu.memory_space<vmem>>, vector<9x32xf32>
    tpu.vector_store %arg11[%c0_118, %c160_119], %104 {strides = array<i32>} : memref<9x224xf32, #tpu.memory_space<vmem>>, vector<9x32xf32>,
    %c0_120 = arith.constant 0 : index
    %c0_121 = arith.constant 0 : index
    %c1_122 = arith.constant 1 : index
    %c6_123 = arith.constant 6 : index
    %c0_124 = arith.constant 0 : index
    %c0_125 = arith.constant 0 : index
    %106 = vector.load %arg2[%c0_120, %c0_121, %c1_122, %c6_123, %c0_124, %c0_125] : memref<1x1x2x7x9x9xf32, #tpu.memory_space<vmem>>, vector<1x1x1x1x9x9xf32>
    %107 = vector.shape_cast %106 : vector<1x1x1x1x9x9xf32> to vector<9x9xf32>
    %cst_126 = arith.constant dense<0.000000e+00> : vector<9x32xf32>
    %108 = tpu.matmul %107, %0, %cst_126 {dimension_numbers = #tpu.dot_dimension_numbers<[1], [0], [0], [1], [0, 0, 1, 1], [], []>} : vector<9x9xf32>, vector<9x32xf32>, vector<9x32xf32> -> vector<9x32xf32>
    %109 = vector.broadcast %1 : vector<1x32xf32> to vector<9x32xf32>
    %110 = arith.addf %108, %109 : vector<9x32xf32>
    %cst_127 = arith.constant 0.000000e+00 : f32
    %111 = vector.broadcast %cst_127 : f32 to vector<9x32xf32>
    %112 = arith.maximumf %110, %111 : vector<9x32xf32>
    %c0_128 = arith.constant 0 : index
    %c192_129 = arith.constant 192 : index
    %113 = vector.load %arg11[%c0_128, %c192_129] : memref<9x224xf32, #tpu.memory_space<vmem>>, vector<9x32xf32>
    tpu.vector_store %arg11[%c0_128, %c192_129], %112 {strides = array<i32>} : memref<9x224xf32, #tpu.memory_space<vmem>>, vector<9x32xf32>,
    %c1_130 = arith.constant 1 : index
    %c0_131 = arith.constant 0 : index
    %114 = vector.load %arg10[%c1_130, %c0_131] : memref<9x224xf32, #tpu.memory_space<vmem>>, vector<8x224xf32>
    %c0_132 = arith.constant 0 : index
    %c0_133 = arith.constant 0 : index
    %115 = vector.load %arg12[%c0_132, %c0_133] : memref<8x224xf32, #tpu.memory_space<vmem>>, vector<8x224xf32>
    tpu.vector_store %arg12[%c0_132, %c0_133], %114 {strides = array<i32>} : memref<8x224xf32, #tpu.memory_space<vmem>>, vector<8x224xf32>,
    %c0_134 = arith.constant 0 : index
    %c0_135 = arith.constant 0 : index
    %116 = vector.load %arg6[%c0_134, %c0_135] : memref<1x32xf32, #tpu.memory_space<vmem>>, vector<1x32xf32>
    %c0_136 = arith.constant 0 : index
    %c0_137 = arith.constant 0 : index
    %117 = vector.load %arg10[%c0_136, %c0_137] : memref<9x224xf32, #tpu.memory_space<vmem>>, vector<8x96xf32>
    %c0_138 = arith.constant 0 : index
    %c0_139 = arith.constant 0 : index
    %c0_140 = arith.constant 0 : index
    %118 = vector.load %arg5[%c0_138, %c0_139, %c0_140] : memref<3x96x32xf32, #tpu.memory_space<vmem>>, vector<1x96x32xf32>
    %119 = vector.shape_cast %118 : vector<1x96x32xf32> to vector<96x32xf32>
    %cst_141 = arith.constant dense<0.000000e+00> : vector<8x32xf32>
    %120 = tpu.matmul %117, %119, %cst_141 {dimension_numbers = #tpu.dot_dimension_numbers<[1], [0], [0], [1], [0, 0, 1, 1], [], []>} : vector<8x96xf32>, vector<96x32xf32>, vector<8x32xf32> -> vector<8x32xf32>
    %c0_142 = arith.constant 0 : index
    %c0_143 = arith.constant 0 : index
    %121 = vector.load %arg11[%c0_142, %c0_143] : memref<9x224xf32, #tpu.memory_space<vmem>>, vector<8x96xf32>
    %c1_144 = arith.constant 1 : index
    %c0_145 = arith.constant 0 : index
    %c0_146 = arith.constant 0 : index
    %122 = vector.load %arg5[%c1_144, %c0_145, %c0_146] : memref<3x96x32xf32, #tpu.memory_space<vmem>>, vector<1x96x32xf32>
    %123 = vector.shape_cast %122 : vector<1x96x32xf32> to vector<96x32xf32>
    %cst_147 = arith.constant dense<0.000000e+00> : vector<8x32xf32>
    %124 = tpu.matmul %121, %123, %cst_147 {dimension_numbers = #tpu.dot_dimension_numbers<[1], [0], [0], [1], [0, 0, 1, 1], [], []>} : vector<8x96xf32>, vector<96x32xf32>, vector<8x32xf32> -> vector<8x32xf32>
    %125 = arith.addf %120, %124 : vector<8x32xf32>
    %c0_148 = arith.constant 0 : index
    %c0_149 = arith.constant 0 : index
    %126 = vector.load %arg12[%c0_148, %c0_149] : memref<8x224xf32, #tpu.memory_space<vmem>>, vector<8x96xf32>
    %c2_150 = arith.constant 2 : index
    %c0_151 = arith.constant 0 : index
    %c0_152 = arith.constant 0 : index
    %127 = vector.load %arg5[%c2_150, %c0_151, %c0_152] : memref<3x96x32xf32, #tpu.memory_space<vmem>>, vector<1x96x32xf32>
    %128 = vector.shape_cast %127 : vector<1x96x32xf32> to vector<96x32xf32>
    %cst_153 = arith.constant dense<0.000000e+00> : vector<8x32xf32>
    %129 = tpu.matmul %126, %128, %cst_153 {dimension_numbers = #tpu.dot_dimension_numbers<[1], [0], [0], [1], [0, 0, 1, 1], [], []>} : vector<8x96xf32>, vector<96x32xf32>, vector<8x32xf32> -> vector<8x32xf32>
    %130 = arith.addf %125, %129 : vector<8x32xf32>
    %131 = vector.broadcast %116 : vector<1x32xf32> to vector<8x32xf32>
    %132 = arith.addf %130, %131 : vector<8x32xf32>
    %cst_154 = arith.constant 0.000000e+00 : f32
    %133 = vector.broadcast %cst_154 : f32 to vector<8x32xf32>
    %134 = arith.maximumf %132, %133 : vector<8x32xf32>
    %c0_155 = arith.constant 0 : index
    %c0_156 = arith.constant 0 : index
    %135 = vector.load %arg13[%c0_155, %c0_156] : memref<8x96xf32, #tpu.memory_space<vmem>>, vector<8x32xf32>
    tpu.vector_store %arg13[%c0_155, %c0_156], %134 {strides = array<i32>} : memref<8x96xf32, #tpu.memory_space<vmem>>, vector<8x32xf32>,
    %c0_157 = arith.constant 0 : index
    %c64_158 = arith.constant 64 : index
    %136 = vector.load %arg10[%c0_157, %c64_158] : memref<9x224xf32, #tpu.memory_space<vmem>>, vector<8x96xf32>
    %c0_159 = arith.constant 0 : index
    %c0_160 = arith.constant 0 : index
    %c0_161 = arith.constant 0 : index
    %137 = vector.load %arg5[%c0_159, %c0_160, %c0_161] : memref<3x96x32xf32, #tpu.memory_space<vmem>>, vector<1x96x32xf32>
    %138 = vector.shape_cast %137 : vector<1x96x32xf32> to vector<96x32xf32>
    %cst_162 = arith.constant dense<0.000000e+00> : vector<8x32xf32>
    %139 = tpu.matmul %136, %138, %cst_162 {dimension_numbers = #tpu.dot_dimension_numbers<[1], [0], [0], [1], [0, 0, 1, 1], [], []>} : vector<8x96xf32>, vector<96x32xf32>, vector<8x32xf32> -> vector<8x32xf32>
    %c0_163 = arith.constant 0 : index
    %c64_164 = arith.constant 64 : index
    %140 = vector.load %arg11[%c0_163, %c64_164] : memref<9x224xf32, #tpu.memory_space<vmem>>, vector<8x96xf32>
    %c1_165 = arith.constant 1 : index
    %c0_166 = arith.constant 0 : index
    %c0_167 = arith.constant 0 : index
    %141 = vector.load %arg5[%c1_165, %c0_166, %c0_167] : memref<3x96x32xf32, #tpu.memory_space<vmem>>, vector<1x96x32xf32>
    %142 = vector.shape_cast %141 : vector<1x96x32xf32> to vector<96x32xf32>
    %cst_168 = arith.constant dense<0.000000e+00> : vector<8x32xf32>
    %143 = tpu.matmul %140, %142, %cst_168 {dimension_numbers = #tpu.dot_dimension_numbers<[1], [0], [0], [1], [0, 0, 1, 1], [], []>} : vector<8x96xf32>, vector<96x32xf32>, vector<8x32xf32> -> vector<8x32xf32>
    %144 = arith.addf %139, %143 : vector<8x32xf32>
    %c0_169 = arith.constant 0 : index
    %c64_170 = arith.constant 64 : index
    %145 = vector.load %arg12[%c0_169, %c64_170] : memref<8x224xf32, #tpu.memory_space<vmem>>, vector<8x96xf32>
    %c2_171 = arith.constant 2 : index
    %c0_172 = arith.constant 0 : index
    %c0_173 = arith.constant 0 : index
    %146 = vector.load %arg5[%c2_171, %c0_172, %c0_173] : memref<3x96x32xf32, #tpu.memory_space<vmem>>, vector<1x96x32xf32>
    %147 = vector.shape_cast %146 : vector<1x96x32xf32> to vector<96x32xf32>
    %cst_174 = arith.constant dense<0.000000e+00> : vector<8x32xf32>
    %148 = tpu.matmul %145, %147, %cst_174 {dimension_numbers = #tpu.dot_dimension_numbers<[1], [0], [0], [1], [0, 0, 1, 1], [], []>} : vector<8x96xf32>, vector<96x32xf32>, vector<8x32xf32> -> vector<8x32xf32>
    %149 = arith.addf %144, %148 : vector<8x32xf32>
    %150 = vector.broadcast %116 : vector<1x32xf32> to vector<8x32xf32>
    %151 = arith.addf %149, %150 : vector<8x32xf32>
    %cst_175 = arith.constant 0.000000e+00 : f32
    %152 = vector.broadcast %cst_175 : f32 to vector<8x32xf32>
    %153 = arith.maximumf %151, %152 : vector<8x32xf32>
    %c0_176 = arith.constant 0 : index
    %c32_177 = arith.constant 32 : index
    %154 = vector.load %arg13[%c0_176, %c32_177] : memref<8x96xf32, #tpu.memory_space<vmem>>, vector<8x32xf32>
    tpu.vector_store %arg13[%c0_176, %c32_177], %153 {strides = array<i32>} : memref<8x96xf32, #tpu.memory_space<vmem>>, vector<8x32xf32>,
    %c0_178 = arith.constant 0 : index
    %c128_179 = arith.constant 128 : index
    %155 = vector.load %arg10[%c0_178, %c128_179] : memref<9x224xf32, #tpu.memory_space<vmem>>, vector<8x96xf32>
    %c0_180 = arith.constant 0 : index
    %c0_181 = arith.constant 0 : index
    %c0_182 = arith.constant 0 : index
    %156 = vector.load %arg5[%c0_180, %c0_181, %c0_182] : memref<3x96x32xf32, #tpu.memory_space<vmem>>, vector<1x96x32xf32>
    %157 = vector.shape_cast %156 : vector<1x96x32xf32> to vector<96x32xf32>
    %cst_183 = arith.constant dense<0.000000e+00> : vector<8x32xf32>
    %158 = tpu.matmul %155, %157, %cst_183 {dimension_numbers = #tpu.dot_dimension_numbers<[1], [0], [0], [1], [0, 0, 1, 1], [], []>} : vector<8x96xf32>, vector<96x32xf32>, vector<8x32xf32> -> vector<8x32xf32>
    %c0_184 = arith.constant 0 : index
    %c128_185 = arith.constant 128 : index
    %159 = vector.load %arg11[%c0_184, %c128_185] : memref<9x224xf32, #tpu.memory_space<vmem>>, vector<8x96xf32>
    %c1_186 = arith.constant 1 : index
    %c0_187 = arith.constant 0 : index
    %c0_188 = arith.constant 0 : index
    %160 = vector.load %arg5[%c1_186, %c0_187, %c0_188] : memref<3x96x32xf32, #tpu.memory_space<vmem>>, vector<1x96x32xf32>
    %161 = vector.shape_cast %160 : vector<1x96x32xf32> to vector<96x32xf32>
    %cst_189 = arith.constant dense<0.000000e+00> : vector<8x32xf32>
    %162 = tpu.matmul %159, %161, %cst_189 {dimension_numbers = #tpu.dot_dimension_numbers<[1], [0], [0], [1], [0, 0, 1, 1], [], []>} : vector<8x96xf32>, vector<96x32xf32>, vector<8x32xf32> -> vector<8x32xf32>
    %163 = arith.addf %158, %162 : vector<8x32xf32>
    %c0_190 = arith.constant 0 : index
    %c128_191 = arith.constant 128 : index
    %164 = vector.load %arg12[%c0_190, %c128_191] : memref<8x224xf32, #tpu.memory_space<vmem>>, vector<8x96xf32>
    %c2_192 = arith.constant 2 : index
    %c0_193 = arith.constant 0 : index
    %c0_194 = arith.constant 0 : index
    %165 = vector.load %arg5[%c2_192, %c0_193, %c0_194] : memref<3x96x32xf32, #tpu.memory_space<vmem>>, vector<1x96x32xf32>
    %166 = vector.shape_cast %165 : vector<1x96x32xf32> to vector<96x32xf32>
    %cst_195 = arith.constant dense<0.000000e+00> : vector<8x32xf32>
    %167 = tpu.matmul %164, %166, %cst_195 {dimension_numbers = #tpu.dot_dimension_numbers<[1], [0], [0], [1], [0, 0, 1, 1], [], []>} : vector<8x96xf32>, vector<96x32xf32>, vector<8x32xf32> -> vector<8x32xf32>
    %168 = arith.addf %163, %167 : vector<8x32xf32>
    %169 = vector.broadcast %116 : vector<1x32xf32> to vector<8x32xf32>
    %170 = arith.addf %168, %169 : vector<8x32xf32>
    %cst_196 = arith.constant 0.000000e+00 : f32
    %171 = vector.broadcast %cst_196 : f32 to vector<8x32xf32>
    %172 = arith.maximumf %170, %171 : vector<8x32xf32>
    %c0_197 = arith.constant 0 : index
    %c64_198 = arith.constant 64 : index
    %173 = vector.load %arg13[%c0_197, %c64_198] : memref<8x96xf32, #tpu.memory_space<vmem>>, vector<8x32xf32>
    tpu.vector_store %arg13[%c0_197, %c64_198], %172 {strides = array<i32>} : memref<8x96xf32, #tpu.memory_space<vmem>>, vector<8x32xf32>,
    %c0_199 = arith.constant 0 : index
    %c0_200 = arith.constant 0 : index
    %174 = vector.load %arg13[%c0_199, %c0_200] : memref<8x96xf32, #tpu.memory_space<vmem>>, vector<8x96xf32>
    %c0_201 = arith.constant 0 : index
    %c0_202 = arith.constant 0 : index
    %175 = vector.load %arg7[%c0_201, %c0_202] : memref<96x128xf32, #tpu.memory_space<vmem>>, vector<96x128xf32>
    %cst_203 = arith.constant dense<0.000000e+00> : vector<8x128xf32>
    %176 = tpu.matmul %174, %175, %cst_203 {dimension_numbers = #tpu.dot_dimension_numbers<[1], [0], [0], [1], [0, 0, 1, 1], [], []>} : vector<8x96xf32>, vector<96x128xf32>, vector<8x128xf32> -> vector<8x128xf32>
    %c0_204 = arith.constant 0 : index
    %c0_205 = arith.constant 0 : index
    %177 = vector.load %arg8[%c0_204, %c0_205] : memref<1x128xf32, #tpu.memory_space<vmem>>, vector<1x128xf32>
    %178 = vector.broadcast %177 : vector<1x128xf32> to vector<8x128xf32>
    %179 = arith.addf %176, %178 : vector<8x128xf32>
    %c0_206 = arith.constant 0 : index
    %c0_207 = arith.constant 0 : index
    %c0_208 = arith.constant 0 : index
    %180 = vector.load %arg9[%c0_206, %c0_207, %c0_208] : memref<1x8x128xf32, #tpu.memory_space<vmem>>, vector<1x8x128xf32>
    %181 = vector.shape_cast %180 : vector<1x8x128xf32> to vector<8x128xf32>
    %182 = vector.shape_cast %179 : vector<8x128xf32> to vector<1x8x128xf32>
    tpu.vector_store %arg9[%c0_206, %c0_207, %c0_208], %182 {strides = array<i32>} : memref<1x8x128xf32, #tpu.memory_space<vmem>>, vector<1x8x128xf32>,
    return
  }
  func.func @transform_0(%arg0: i32, %arg1: i32) -> (i32, i32, i32, i32, i32, i32) {
    %c0_i32 = arith.constant 0 : i32
    %c0_i32_0 = arith.constant 0 : i32
    %c0_i32_1 = arith.constant 0 : i32
    %c0_i32_2 = arith.constant 0 : i32
    %c0_i32_3 = arith.constant 0 : i32
    return %arg0, %arg1, %c0_i32, %c0_i32_0, %c0_i32_1, %c0_i32_2 : i32, i32, i32, i32, i32, i32
  }
  func.func @transform_1(%arg0: i32, %arg1: i32) -> (i32, i32) {
    %c0_i32 = arith.constant 0 : i32
    %c0_i32_0 = arith.constant 0 : i32
    %c0_i32_1 = arith.constant 0 : i32
    return %c0_i32, %c0_i32_0 : i32, i32
  }
  func.func @transform_2(%arg0: i32, %arg1: i32) -> (i32, i32) {
    %c0_i32 = arith.constant 0 : i32
    %c0_i32_0 = arith.constant 0 : i32
    %c0_i32_1 = arith.constant 0 : i32
    return %c0_i32, %c0_i32_0 : i32, i32
  }
  func.func @transform_3(%arg0: i32, %arg1: i32) -> (i32, i32, i32) {
    %c0_i32 = arith.constant 0 : i32
    %c0_i32_0 = arith.constant 0 : i32
    %c0_i32_1 = arith.constant 0 : i32
    %c0_i32_2 = arith.constant 0 : i32
    return %c0_i32, %c0_i32_0, %c0_i32_1 : i32, i32, i32
  }
  func.func @transform_4(%arg0: i32, %arg1: i32) -> (i32, i32) {
    %c0_i32 = arith.constant 0 : i32
    %c0_i32_0 = arith.constant 0 : i32
    %c0_i32_1 = arith.constant 0 : i32
    return %c0_i32, %c0_i32_0 : i32, i32
  }
  func.func @transform_5(%arg0: i32, %arg1: i32) -> (i32, i32) {
    %c0_i32 = arith.constant 0 : i32
    %c0_i32_0 = arith.constant 0 : i32
    %c0_i32_1 = arith.constant 0 : i32
    return %c0_i32, %c0_i32_0 : i32, i32
  }
  func.func @transform_6(%arg0: i32, %arg1: i32) -> (i32, i32) {
    %c0_i32 = arith.constant 0 : i32
    %c0_i32_0 = arith.constant 0 : i32
    %c0_i32_1 = arith.constant 0 : i32
    return %c0_i32, %c0_i32_0 : i32, i32
  }
  func.func @transform_7(%arg0: i32, %arg1: i32) -> (i32, i32, i32) {
    %c0_i32 = arith.constant 0 : i32
    %c0_i32_0 = arith.constant 0 : i32
    return %arg0, %arg1, %c0_i32 : i32, i32, i32
  }
}

</mosaic_0001>

<llo_original>
// kernel: tpu_custom_call.1
$region0: #{tpu_custom_call.1}
  #allocation0 [shape = 'u32[]', space=smem, size = 0x4, offset = 0x4, fixed_abs, tag = 'smem constant byte address 0x4 - core index']
  #allocation1 [shape = 'u32[144,128]{1,0:T(1,128)}', space=vmem, size = 0x12000, scoped, tag = 'internal scratch']
  #allocation2 [shape = 'f32[9,224]{1,0:T(8,128)}', space=vmem, size = 0x4000, scoped, tag = 'scratch operand']
  #allocation3 [shape = 'f32[9,224]{1,0:T(8,128)}', space=vmem, size = 0x4000, scoped, tag = 'scratch operand']
  #allocation4 [shape = 'f32[8,224]{1,0:T(8,128)}', space=vmem, size = 0x2000, scoped, tag = 'scratch operand']
  #allocation5 [shape = 'f32[8,96]{1,0:T(8,128)}', space=vmem, size = 0x1000, scoped, tag = 'scratch operand']
  %s0 = inlined_call_operand.vmem [shape: f32[2,1,2,7,9,9], index: 0, kind: input, shape index: {}]
  %s1 = inlined_call_operand.vmem [shape: f32[9,32], index: 1, kind: input, shape index: {}]
  %s2 = inlined_call_operand.vmem [shape: f32[1,32], index: 2, kind: input, shape index: {}]
  %s3 = inlined_call_operand.vmem [shape: f32[3,96,32], index: 3, kind: input, shape index: {}]
  %s4 = inlined_call_operand.vmem [shape: f32[1,32], index: 4, kind: input, shape index: {}]
  %s5 = inlined_call_operand.vmem [shape: f32[96,128], index: 5, kind: input, shape index: {}]
  %s6 = inlined_call_operand.vmem [shape: f32[1,128], index: 6, kind: input, shape index: {}]
  %s7 = inlined_call_operand.hbm [shape: f32[2,8,128], index: 7, kind: output, shape index: {}]
  %s8 = sld [smem:[#allocation0]]
  $region61: #{tpu_custom_call.1} parent=0
    _
  %s10 = ssub.s32 1, %s8
  %s11 = scalar_select 0, %s10, %s8
  $region1: #{tpu_custom_call.1} parent=0
    #allocation6 [shape = 'u8[8192]{0}', space=vmem, size = 0x2000, scoped, tag = 'output window, operand 0']
    #allocation7 [shape = 's32[2]{0}', space=sflag, size = 0x8, scoped, tag = 'scoped memory for tpu_custom_call.1']
    %12 = vsyncpa [#allocation7], 0
    %s13 = scalar_lea.sflag [#allocation7], 1
    %14 = vsyncpa %s13, 0
    loop: start=0, step=1, limit=4
    $region2: #{tpu_custom_call.1} parent=1 // loop_pre_header
      _
    $region3: #{tpu_custom_call.1} parent=1 // loop_header
      %s16 = sphi 0, %s20
      %p17 = scmp.ge.s32.totalorder %s16, 4
      %s23 = sphi 0, %s35
      %s24 = sphi 0, %s31
      %s25 = sphi 0, %s23
      %s26 = sphi 0, %s24
      %s27 = sphi 0, %s25
      %s28 = sphi 0, %s26
      %s40 = sphi 0, %s42
      %s43 = sphi 0, %s40
      %s44 = sphi 0, %s43
      %s60 = sphi 0, %s44
      %s64 = sphi 0, %s64
      %s66 = sphi 0, %s64
      %s67 = sphi 0, %s66
      %s81 = sphi 0, %s67
      %s85 = sphi 0, %s85
      %s87 = sphi 0, %s85
      %s88 = sphi 0, %s87
      %s102 = sphi 0, %s88
      %s106 = sphi 0, %s106
      %s108 = sphi 0, %s106
      %s109 = sphi 0, %s108
      %s123 = sphi 0, %s109
      %s127 = sphi 0, %s127
      %s129 = sphi 0, %s127
      %s130 = sphi 0, %s129
      %s144 = sphi 0, %s130
      %s148 = sphi 0, %s148
      %s150 = sphi 0, %s148
      %s151 = sphi 0, %s150
      %s165 = sphi 0, %s151
      %s169 = sphi 0, %s169
      %s171 = sphi 0, %s169
      %s172 = sphi 0, %s171
      %s186 = sphi 0, %s172
      %s194 = sphi 0, %s196
      %s197 = sphi 0, %s194
      %s198 = sphi 0, %s197
      %s214 = sphi 0, %s198
    $region4: #{tpu_custom_call.1} parent=1 // loop_header_branch
      %19 = sbr.rel (%p17) target = $region8
    $region5: #{tpu_custom_call.1} parent=1 // loop_body
      %s21 = ssub.s32 %s16, 1
      %s22 = ssub.s32 %s16, 2
      %s29 = sadd.s32 1, %s24
      %p30 = scmp.ge.s32.totalorder %s29, 1
      %s31 = scalar_select %p30, 0, %s29
      %s32 = sadd.s32 1, %s23
      %s33 = scalar_select %p30, %s32, %s23
      %p34 = scmp.ge.s32.totalorder %s33, 2
      %s35 = scalar_select %p34, 0, %s33
      %s36 = ssub.s32 %s23, %s35
      %s37 = ssub.s32 %s24, %s31
      %s38 = sor.u32 %s36, %s37
      %p39 = scmp.eq.s32.totalorder %s38, 0
      %s41 = sadd.s32 %s40, 1
      %s42 = scalar_select %p39, %s40, %s41
      %p45 = pneg %p39
      %p46 = scmp.eq.s32.totalorder %s16, 1
      %p47 = por %p45, %p46
      %p48 = scmp.ne.s32.totalorder %s40, %s43
      %p49 = scmp.eq.s32.totalorder %s16, 0
      %p50 = por %p48, %p49
      %p51 = scmp.ne.s32.totalorder %s40, %s43
      %p52 = scmp.eq.s32.totalorder %s21, 1
      %p53 = por %p51, %p52
      %p54 = scmp.ne.s32.totalorder %s43, %s44
      %p55 = scmp.eq.s32.totalorder %s21, 0
      %p56 = por %p54, %p55
      %p57 = scmp.ne.s32.totalorder %s43, %s44
      %p58 = scmp.eq.s32.totalorder %s22, 1
      %p59 = por %p57, %p58
      %p61 = scmp.ne.s32.totalorder %s44, %s60
      %p62 = scmp.eq.s32.totalorder %s22, 0
      %p63 = por %p61, %p62
      %s65 = sadd.s32 %s64, 1
      %p68 = scmp.eq.s32.totalorder %s16, 1
      %p69 = scmp.ne.s32.totalorder %s64, %s66
      %p70 = scmp.eq.s32.totalorder %s16, 0
      %p71 = por %p69, %p70
      %p72 = scmp.ne.s32.totalorder %s64, %s66
      %p73 = scmp.eq.s32.totalorder %s21, 1
      %p74 = por %p72, %p73
      %p75 = scmp.ne.s32.totalorder %s66, %s67
      %p76 = scmp.eq.s32.totalorder %s21, 0
      %p77 = por %p75, %p76
      %p78 = scmp.ne.s32.totalorder %s66, %s67
      %p79 = scmp.eq.s32.totalorder %s22, 1
      %p80 = por %p78, %p79
      %p82 = scmp.ne.s32.totalorder %s67, %s81
      %p83 = scmp.eq.s32.totalorder %s22, 0
      %p84 = por %p82, %p83
      %s86 = sadd.s32 %s85, 1
      %p89 = scmp.eq.s32.totalorder %s16, 1
      %p90 = scmp.ne.s32.totalorder %s85, %s87
      %p91 = scmp.eq.s32.totalorder %s16, 0
      %p92 = por %p90, %p91
      %p93 = scmp.ne.s32.totalorder %s85, %s87
      %p94 = scmp.eq.s32.totalorder %s21, 1
      %p95 = por %p93, %p94
      %p96 = scmp.ne.s32.totalorder %s87, %s88
      %p97 = scmp.eq.s32.totalorder %s21, 0
      %p98 = por %p96, %p97
      %p99 = scmp.ne.s32.totalorder %s87, %s88
      %p100 = scmp.eq.s32.totalorder %s22, 1
      %p101 = por %p99, %p100
      %p103 = scmp.ne.s32.totalorder %s88, %s102
      %p104 = scmp.eq.s32.totalorder %s22, 0
      %p105 = por %p103, %p104
      %s107 = sadd.s32 %s106, 1
      %p110 = scmp.eq.s32.totalorder %s16, 1
      %p111 = scmp.ne.s32.totalorder %s106, %s108
      %p112 = scmp.eq.s32.totalorder %s16, 0
      %p113 = por %p111, %p112
      %p114 = scmp.ne.s32.totalorder %s106, %s108
      %p115 = scmp.eq.s32.totalorder %s21, 1
      %p116 = por %p114, %p115
      %p117 = scmp.ne.s32.totalorder %s108, %s109
      %p118 = scmp.eq.s32.totalorder %s21, 0
      %p119 = por %p117, %p118
      %p120 = scmp.ne.s32.totalorder %s108, %s109
      %p121 = scmp.eq.s32.totalorder %s22, 1
      %p122 = por %p120, %p121
      %p124 = scmp.ne.s32.totalorder %s109, %s123
      %p125 = scmp.eq.s32.totalorder %s22, 0
      %p126 = por %p124, %p125
      %s128 = sadd.s32 %s127, 1
      %p131 = scmp.eq.s32.totalorder %s16, 1
      %p132 = scmp.ne.s32.totalorder %s127, %s129
      %p133 = scmp.eq.s32.totalorder %s16, 0
      %p134 = por %p132, %p133
      %p135 = scmp.ne.s32.totalorder %s127, %s129
      %p136 = scmp.eq.s32.totalorder %s21, 1
      %p137 = por %p135, %p136
      %p138 = scmp.ne.s32.totalorder %s129, %s130
      %p139 = scmp.eq.s32.totalorder %s21, 0
      %p140 = por %p138, %p139
      %p141 = scmp.ne.s32.totalorder %s129, %s130
      %p142 = scmp.eq.s32.totalorder %s22, 1
      %p143 = por %p141, %p142
      %p145 = scmp.ne.s32.totalorder %s130, %s144
      %p146 = scmp.eq.s32.totalorder %s22, 0
      %p147 = por %p145, %p146
      %s149 = sadd.s32 %s148, 1
      %p152 = scmp.eq.s32.totalorder %s16, 1
      %p153 = scmp.ne.s32.totalorder %s148, %s150
      %p154 = scmp.eq.s32.totalorder %s16, 0
      %p155 = por %p153, %p154
      %p156 = scmp.ne.s32.totalorder %s148, %s150
      %p157 = scmp.eq.s32.totalorder %s21, 1
      %p158 = por %p156, %p157
      %p159 = scmp.ne.s32.totalorder %s150, %s151
      %p160 = scmp.eq.s32.totalorder %s21, 0
      %p161 = por %p159, %p160
      %p162 = scmp.ne.s32.totalorder %s150, %s151
      %p163 = scmp.eq.s32.totalorder %s22, 1
      %p164 = por %p162, %p163
      %p166 = scmp.ne.s32.totalorder %s151, %s165
      %p167 = scmp.eq.s32.totalorder %s22, 0
      %p168 = por %p166, %p167
      %s170 = sadd.s32 %s169, 1
      %p173 = scmp.eq.s32.totalorder %s16, 1
      %p174 = scmp.ne.s32.totalorder %s169, %s171
      %p175 = scmp.eq.s32.totalorder %s16, 0
      %p176 = por %p174, %p175
      %p177 = scmp.ne.s32.totalorder %s169, %s171
      %p178 = scmp.eq.s32.totalorder %s21, 1
      %p179 = por %p177, %p178
      %p180 = scmp.ne.s32.totalorder %s171, %s172
      %p181 = scmp.eq.s32.totalorder %s21, 0
      %p182 = por %p180, %p181
      %p183 = scmp.ne.s32.totalorder %s171, %s172
      %p184 = scmp.eq.s32.totalorder %s22, 1
      %p185 = por %p183, %p184
      %p187 = scmp.ne.s32.totalorder %s172, %s186
      %p188 = scmp.eq.s32.totalorder %s22, 0
      %p189 = por %p187, %p188
      %s190 = ssub.s32 %s23, %s35
      %s191 = ssub.s32 %s24, %s31
      %s192 = sor.u32 %s190, %s191
      %p193 = scmp.eq.s32.totalorder %s192, 0
      %s195 = sadd.s32 %s194, 1
      %s196 = scalar_select %p193, %s194, %s195
      %p199 = pneg %p193
      %p200 = scmp.eq.s32.totalorder %s16, 1
      %p201 = por %p199, %p200
      %p202 = scmp.ne.s32.totalorder %s194, %s197
      %p203 = scmp.eq.s32.totalorder %s16, 0
      %p204 = por %p202, %p203
      %p205 = scmp.ne.s32.totalorder %s194, %s197
      %p206 = scmp.eq.s32.totalorder %s21, 1
      %p207 = por %p205, %p206
      %p208 = scmp.ne.s32.totalorder %s197, %s198
      %p209 = scmp.eq.s32.totalorder %s21, 0
      %p210 = por %p208, %p209
      %p211 = scmp.ne.s32.totalorder %s197, %s198
      %p212 = scmp.eq.s32.totalorder %s22, 1
      %p213 = por %p211, %p212
      %p215 = scmp.ne.s32.totalorder %s198, %s214
      %p216 = scmp.eq.s32.totalorder %s22, 0
      %p217 = por %p215, %p216
      %p218 = scmp.le.s32.totalorder 1, %s16
      %p219 = scmp.lt.s32.totalorder %s16, 3
      %p220 = pnand %p218, %p219
      %p221 = pneg %p220
      // Predicated region
      $region9: #{tpu_custom_call.1} parent=5 // pred_check
        _
      $region10: #{tpu_custom_call.1} parent=5 // pred_check_branch
        %223 = sbr.rel (%p220) target = $region12
      $region11: #{tpu_custom_call.1} parent=5 // pred_region
        %s224 = ssub.s32 %s16, 1
        // Predicated region
        $region13: #{tpu_custom_call.1} parent=11 // pred_check
          %p225 = pneg %p77
        $region14: #{tpu_custom_call.1} parent=11 // pred_check_branch
          %227 = sbr.rel (%p225) target = $region16
        $region15: #{tpu_custom_call.1} parent=11 // pred_region
          _
        $region16: #{tpu_custom_call.1} parent=11 // pred_fallthru
          _
        // Predicated region
        $region17: #{tpu_custom_call.1} parent=11 // pred_check
          %p228 = pneg %p98
        $region18: #{tpu_custom_call.1} parent=11 // pred_check_branch
          %230 = sbr.rel (%p228) target = $region20
        $region19: #{tpu_custom_call.1} parent=11 // pred_region
          _
        $region20: #{tpu_custom_call.1} parent=11 // pred_fallthru
          _
        // Predicated region
        $region21: #{tpu_custom_call.1} parent=11 // pred_check
          %p231 = pneg %p119
        $region22: #{tpu_custom_call.1} parent=11 // pred_check_branch
          %233 = sbr.rel (%p231) target = $region24
        $region23: #{tpu_custom_call.1} parent=11 // pred_region
          _
        $region24: #{tpu_custom_call.1} parent=11 // pred_fallthru
          _
        // Predicated region
        $region25: #{tpu_custom_call.1} parent=11 // pred_check
          %p234 = pneg %p140
        $region26: #{tpu_custom_call.1} parent=11 // pred_check_branch
          %236 = sbr.rel (%p234) target = $region28
        $region27: #{tpu_custom_call.1} parent=11 // pred_region
          _
        $region28: #{tpu_custom_call.1} parent=11 // pred_fallthru
          _
        // Predicated region
        $region29: #{tpu_custom_call.1} parent=11 // pred_check
          %p237 = pneg %p161
        $region30: #{tpu_custom_call.1} parent=11 // pred_check_branch
          %239 = sbr.rel (%p237) target = $region32
        $region31: #{tpu_custom_call.1} parent=11 // pred_region
          _
        $region32: #{tpu_custom_call.1} parent=11 // pred_fallthru
          _
        // Predicated region
        $region33: #{tpu_custom_call.1} parent=11 // pred_check
          %p240 = pneg %p182
        $region34: #{tpu_custom_call.1} parent=11 // pred_check_branch
          %242 = sbr.rel (%p240) target = $region36
        $region35: #{tpu_custom_call.1} parent=11 // pred_region
          _
        $region36: #{tpu_custom_call.1} parent=11 // pred_fallthru
          _
      $region12: #{tpu_custom_call.1} parent=5 // pred_fallthru
        _
      %p243 = scmp.lt.s32.totalorder %s16, 2
      // Predicated region
      $region37: #{tpu_custom_call.1} parent=5 // pred_check
        %p244 = pneg %p243
      $region38: #{tpu_custom_call.1} parent=5 // pred_check_branch
        %246 = sbr.rel (%p244) target = $region40
      $region39: #{tpu_custom_call.1} parent=5 // pred_region
        // Predicated region
        $region41: #{tpu_custom_call.1} parent=39 // pred_check
          %p247 = pneg %p50
        $region42: #{tpu_custom_call.1} parent=39 // pred_check_branch
          %249 = sbr.rel (%p247) target = $region44
        $region43: #{tpu_custom_call.1} parent=39 // pred_region
          %p250 = scmp.lt.s32.totalorder %s23, 1
          %s251 = scalar_select %p250, %s23, 1
          %p252 = scmp.lt.s32.totalorder %s24, 0
          %s253 = scalar_select %p252, %s24, 0
          %s254 = smul.addr %s253, 28
          %s255 = smul.addr %s251, 28
          %s256 = sadd.s32 %s254, %s255
          %s257 = smul.addr %s256, 8
          %s258 = scalar_lea.vmem %s0, %s257
        $region44: #{tpu_custom_call.1} parent=39 // pred_fallthru
          _
      $region40: #{tpu_custom_call.1} parent=5 // pred_fallthru
        _
      %p259 = scmp.le.s32.totalorder 1, %s16
      %p260 = scmp.lt.s32.totalorder %s16, 3
      %p261 = pnand %p259, %p260
      %p262 = pneg %p261
      // Predicated region
      $region45: #{tpu_custom_call.1} parent=5 // pred_check
        _
      $region46: #{tpu_custom_call.1} parent=5 // pred_check_branch
        %264 = sbr.rel (%p261) target = $region48
      $region47: #{tpu_custom_call.1} parent=5 // pred_region
        %s265 = ssub.s32 %s16, 1
        %p266 = scmp.lt.s32.totalorder %s25, 1
        %s267 = scalar_select %p266, %s25, 1
        %p268 = scmp.lt.s32.totalorder %s26, 0
        %s269 = scalar_select %p268, %s26, 0
        %s270 = smul.addr %s269, 28
        %s271 = smul.addr %s267, 28
        %s272 = sadd.s32 %s270, %s271
        %s273 = smul.addr %s272, 8
        %s274 = scalar_lea.vmem %s0, %s273
        %p275 = pneg %p56
        %p276 = pneg %p53
        %p277 = pneg %p77
        %p278 = pneg %p74
        %p279 = pneg %p98
        %p280 = pneg %p95
        %p281 = pneg %p119
        %p282 = pneg %p116
        %p283 = pneg %p140
        %p284 = pneg %p137
        %p285 = pneg %p161
        %p286 = pneg %p158
        %p287 = pneg %p182
        %p288 = pneg %p179
        %p289 = pneg %p210
        %p290 = pneg %p207
        %s291 = sand.u32 %s197, 1
        %s292 = scalar_lea.sflag [#allocation7], %s291
        %s293 = sand.u32 %s197, 1
        %s294 = smul.addr %s293, 8
        %s295 = scalar_lea.vmem [#allocation6], %s294
        %p296 = scmp.lt.s32.totalorder %s25, 1
        %s297 = scalar_select %p296, %s25, 1
        %p298 = scmp.lt.s32.totalorder %s26, 0
        %s299 = scalar_select %p298, %s26, 0
        %s300 = smul.addr %s299, 28
        %s301 = smul.addr %s297, 28
        %s302 = sadd.s32 %s300, %s301
        %s303 = smul.addr %s302, 8
        %s304 = scalar_lea.vmem %s0, %s303
        %v305 = vld [vmem:[%s1] sm:$0xff]
        %v306 = vld [vmem:[%s1 + $0x8] sm:$0x1]
        %v307 = vld [vmem:[%s2] sm:$0x1]
        %v308 = vld [vmem:[%s304] sm:$0xff]
        %v309 = vld [vmem:[%s304 + $0x8] sm:$0x1]
        %v311 = vlaneseq
        %v312 = vshrl.u32 %v311, 7
        %v313 = vsub.s32 0, %v312
        %v314 = vrot.slane %v307, %v313
        %vm316 = vcmask 72704
        %v318 = vsel %vm316, %v308, 0
        %v321 = vsel %vm316, %v309, 0
        %vm323 = vcmask 1040384
        %v325 = vsel %vm323, %v306, 0
        %327 = vmatprep.subr.mxu0 0.0
        %328 = vmatpush1.msra.mxu0 %v305
        %329 = vmatprep.subr.mxu0 0.0
        %330 = vmatpush1.msra.mxu0 %v325
        %331 = vmatprep.subr.mxu0 0.0
        %332 = vmatpush1.msra.mxu0 0.0
        %333 = vmatprep.subr.mxu0 0.0
        %334 = vmatpush1.msra.mxu0 0.0
        %335 = vmatprep.subr.mxu0 0.0
        %336 = vmatpush1.msra.mxu0 0.0
        %337 = vmatprep.subr.mxu0 0.0
        %338 = vmatpush1.msra.mxu0 0.0
        %339 = vmatprep.subr.mxu0 0.0
        %340 = vmatpush1.msra.mxu0 0.0
        %341 = vmatprep.subr.mxu0 0.0
        %342 = vmatpush1.msra.mxu0 0.0
        %343 = vmatprep.subr.mxu0 0.0
        %344 = vmatpush1.msra.mxu0 0.0
        %345 = vmatprep.subr.mxu0 0.0
        %346 = vmatpush1.msra.mxu0 0.0
        %347 = vmatprep.subr.mxu0 0.0
        %348 = vmatpush1.msra.mxu0 0.0
        %349 = vmatprep.subr.mxu0 0.0
        %350 = vmatpush1.msra.mxu0 0.0
        %351 = vmatprep.subr.mxu0 0.0
        %352 = vmatpush1.msra.mxu0 0.0
        %353 = vmatprep.subr.mxu0 0.0
        %354 = vmatpush1.msra.mxu0 0.0
        %355 = vmatprep.subr.mxu0 0.0
        %356 = vmatpush1.msra.mxu0 0.0
        %357 = vmatprep.subr.mxu0 0.0
        %358 = vmatpush1.msra.mxu0 0.0
        %359 = vmatprep.subr.mxu0 0.0
        %360 = vmatpush1.msra.mxu0 0.0
        %361 = vmatprep.subr.mxu0 0.0
        %362 = vmatpush1.msra.mxu0 0.0
        %363 = vmatprep.subr.mxu0 0.0
        %364 = vmatpush1.msra.mxu0 0.0
        %365 = vmatprep.subr.mxu0 0.0
        %366 = vmatpush1.msra.mxu0 0.0
        %367 = vmatprep.subr.mxu0 0.0
        %368 = vmatpush1.msra.mxu0 0.0
        %369 = vmatprep.subr.mxu0 0.0
        %370 = vmatpush1.msra.mxu0 0.0
        %371 = vmatprep.subr.mxu0 0.0
        %372 = vmatpush1.msra.mxu0 0.0
        %373 = vmatprep.subr.mxu0 0.0
        %374 = vmatpush1.msra.mxu0 0.0
        %375 = vmatprep.subr.mxu0 0.0
        %376 = vmatpush1.msra.mxu0 0.0
        %377 = vmatprep.subr.mxu0 0.0
        %378 = vmatpush1.msra.mxu0 0.0
        %379 = vmatprep.subr.mxu0 0.0
        %380 = vmatpush1.msra.mxu0 0.0
        %381 = vmatprep.subr.mxu0 0.0
        %382 = vmatpush1.msra.mxu0 0.0
        %383 = vmatprep.subr.mxu0 0.0
        %384 = vmatpush1.msra.mxu0 0.0
        %385 = vmatprep.subr.mxu0 0.0
        %386 = vmatpush1.msra.mxu0 0.0
        %387 = vmatprep.subr.mxu0 0.0
        %388 = vmatpush1.msra.mxu0 0.0
        %389 = vmatprep.subr.mxu0 0.0
        %390 = vmatpush1.msra.mxu0 0.0
        %391 = vmatprep.mubr.f32.mxu0 0.0
        %392 = vmatmul.mubr.f32.gmra.mrb[0].mxu0 %v318
        %v393 = vpop.f32.mrb[0].mxu0
        %v394 = vadd.f32 %v314, %v393
        %v395 = vpop.f32.mrb[0].mxu0
        %396 = vmatprep.mubr.f32.mxu0 0.0
        %397 = vmatmul.mubr.f32.gmra.mrb[0].mxu0 %v321
        %v398 = vpop.f32.mrb[0].mxu0
        %v399 = vadd.f32 %v314, %v398
        %v400 = vpop.f32.mrb[0].mxu0
        %401 = vdwg.mxu0
        %v402 = vmax.f32 %v394, 0.0
        %v403 = vmax.f32 %v399, 0.0
        %vm404 = vcmask 261120
        %405 = vst.msk [vmem:[#allocation2] sm:$0xff] %vm404, %v402
        %vm406 = vcmask 253952
        %407 = vst.msk [vmem:[#allocation2 + $0x10] sm:$0x1] %vm406, %v403
        %s408 = scalar_lea.vmem %s304, 16
        %v409 = vld [vmem:[%s408] sm:$0xff]
        %v410 = vld [vmem:[%s408 + $0x8] sm:$0x1]
        %v412 = vsel %vm316, %v409, 0
        %v415 = vsel %vm316, %v410, 0
        %417 = vmatprep.subr.mxu0 0.0
        %418 = vmatpush1.msra.mxu0 %v305
        %419 = vmatprep.subr.mxu0 0.0
        %420 = vmatpush1.msra.mxu0 %v325
        %421 = vmatprep.subr.mxu0 0.0
        %422 = vmatpush1.msra.mxu0 0.0
        %423 = vmatprep.subr.mxu0 0.0
        %424 = vmatpush1.msra.mxu0 0.0
        %425 = vmatprep.subr.mxu0 0.0
        %426 = vmatpush1.msra.mxu0 0.0
        %427 = vmatprep.subr.mxu0 0.0
        %428 = vmatpush1.msra.mxu0 0.0
        %429 = vmatprep.subr.mxu0 0.0
        %430 = vmatpush1.msra.mxu0 0.0
        %431 = vmatprep.subr.mxu0 0.0
        %432 = vmatpush1.msra.mxu0 0.0
        %433 = vmatprep.subr.mxu0 0.0
        %434 = vmatpush1.msra.mxu0 0.0
        %435 = vmatprep.subr.mxu0 0.0
        %436 = vmatpush1.msra.mxu0 0.0
        %437 = vmatprep.subr.mxu0 0.0
        %438 = vmatpush1.msra.mxu0 0.0
        %439 = vmatprep.subr.mxu0 0.0
        %440 = vmatpush1.msra.mxu0 0.0
        %441 = vmatprep.subr.mxu0 0.0
        %442 = vmatpush1.msra.mxu0 0.0
        %443 = vmatprep.subr.mxu0 0.0
        %444 = vmatpush1.msra.mxu0 0.0
        %445 = vmatprep.subr.mxu0 0.0
        %446 = vmatpush1.msra.mxu0 0.0
        %447 = vmatprep.subr.mxu0 0.0
        %448 = vmatpush1.msra.mxu0 0.0
        %449 = vmatprep.subr.mxu0 0.0
        %450 = vmatpush1.msra.mxu0 0.0
        %451 = vmatprep.subr.mxu0 0.0
        %452 = vmatpush1.msra.mxu0 0.0
        %453 = vmatprep.subr.mxu0 0.0
        %454 = vmatpush1.msra.mxu0 0.0
        %455 = vmatprep.subr.mxu0 0.0
        %456 = vmatpush1.msra.mxu0 0.0
        %457 = vmatprep.subr.mxu0 0.0
        %458 = vmatpush1.msra.mxu0 0.0
        %459 = vmatprep.subr.mxu0 0.0
        %460 = vmatpush1.msra.mxu0 0.0
        %461 = vmatprep.subr.mxu0 0.0
        %462 = vmatpush1.msra.mxu0 0.0
        %463 = vmatprep.subr.mxu0 0.0
        %464 = vmatpush1.msra.mxu0 0.0
        %465 = vmatprep.subr.mxu0 0.0
        %466 = vmatpush1.msra.mxu0 0.0
        %467 = vmatprep.subr.mxu0 0.0
        %468 = vmatpush1.msra.mxu0 0.0
        %469 = vmatprep.subr.mxu0 0.0
        %470 = vmatpush1.msra.mxu0 0.0
        %471 = vmatprep.subr.mxu0 0.0
        %472 = vmatpush1.msra.mxu0 0.0
        %473 = vmatprep.subr.mxu0 0.0
        %474 = vmatpush1.msra.mxu0 0.0
        %475 = vmatprep.subr.mxu0 0.0
        %476 = vmatpush1.msra.mxu0 0.0
        %477 = vmatprep.subr.mxu0 0.0
        %478 = vmatpush1.msra.mxu0 0.0
        %479 = vmatprep.subr.mxu0 0.0
        %480 = vmatpush1.msra.mxu0 0.0
        %481 = vmatprep.mubr.f32.mxu0 0.0
        %482 = vmatmul.mubr.f32.gmra.mrb[0].mxu0 %v412
        %v483 = vpop.f32.mrb[0].mxu0
        %v484 = vadd.f32 %v314, %v483
        %v485 = vpop.f32.mrb[0].mxu0
        %486 = vmatprep.mubr.f32.mxu0 0.0
        %487 = vmatmul.mubr.f32.gmra.mrb[0].mxu0 %v415
        %v488 = vpop.f32.mrb[0].mxu0
        %v489 = vadd.f32 %v314, %v488
        %v490 = vpop.f32.mrb[0].mxu0
        %491 = vdwg.mxu0
        %v492 = vmax.f32 %v484, 0.0
        %v493 = vmax.f32 %v489, 0.0
        %496 = vrot.lane.b32.xlu0 %v492, 32
        %v497 = vpop.permute.xlu0 %496
        %498 = vrot.lane.b32.xlu0 %v493, 32
        %v499 = vpop.permute.xlu0 %498
        %vm502 = vcmask 523520
        %503 = vst.msk [vmem:[#allocation2] sm:$0xff] %vm502, %v497
        %vm504 = vcmask 516352
        %505 = vst.msk [vmem:[#allocation2 + $0x10] sm:$0x1] %vm504, %v499
        %s506 = scalar_lea.vmem %s304, 32
        %v507 = vld [vmem:[%s506] sm:$0xff]
        %v508 = vld [vmem:[%s506 + $0x8] sm:$0x1]
        %v510 = vsel %vm316, %v507, 0
        %v513 = vsel %vm316, %v508, 0
        %515 = vmatprep.subr.mxu0 0.0
        %516 = vmatpush1.msra.mxu0 %v305
        %517 = vmatprep.subr.mxu0 0.0
        %518 = vmatpush1.msra.mxu0 %v325
        %519 = vmatprep.subr.mxu0 0.0
        %520 = vmatpush1.msra.mxu0 0.0
        %521 = vmatprep.subr.mxu0 0.0
        %522 = vmatpush1.msra.mxu0 0.0
        %523 = vmatprep.subr.mxu0 0.0
        %524 = vmatpush1.msra.mxu0 0.0
        %525 = vmatprep.subr.mxu0 0.0
        %526 = vmatpush1.msra.mxu0 0.0
        %527 = vmatprep.subr.mxu0 0.0
        %528 = vmatpush1.msra.mxu0 0.0
        %529 = vmatprep.subr.mxu0 0.0
        %530 = vmatpush1.msra.mxu0 0.0
        %531 = vmatprep.subr.mxu0 0.0
        %532 = vmatpush1.msra.mxu0 0.0
        %533 = vmatprep.subr.mxu0 0.0
        %534 = vmatpush1.msra.mxu0 0.0
        %535 = vmatprep.subr.mxu0 0.0
        %536 = vmatpush1.msra.mxu0 0.0
        %537 = vmatprep.subr.mxu0 0.0
        %538 = vmatpush1.msra.mxu0 0.0
        %539 = vmatprep.subr.mxu0 0.0
        %540 = vmatpush1.msra.mxu0 0.0
        %541 = vmatprep.subr.mxu0 0.0
        %542 = vmatpush1.msra.mxu0 0.0
        %543 = vmatprep.subr.mxu0 0.0
        %544 = vmatpush1.msra.mxu0 0.0
        %545 = vmatprep.subr.mxu0 0.0
        %546 = vmatpush1.msra.mxu0 0.0
        %547 = vmatprep.subr.mxu0 0.0
        %548 = vmatpush1.msra.mxu0 0.0
        %549 = vmatprep.subr.mxu0 0.0
        %550 = vmatpush1.msra.mxu0 0.0
        %551 = vmatprep.subr.mxu0 0.0
        %552 = vmatpush1.msra.mxu0 0.0
        %553 = vmatprep.subr.mxu0 0.0
        %554 = vmatpush1.msra.mxu0 0.0
        %555 = vmatprep.subr.mxu0 0.0
        %556 = vmatpush1.msra.mxu0 0.0
        %557 = vmatprep.subr.mxu0 0.0
        %558 = vmatpush1.msra.mxu0 0.0
        %559 = vmatprep.subr.mxu0 0.0
        %560 = vmatpush1.msra.mxu0 0.0
        %561 = vmatprep.subr.mxu0 0.0
        %562 = vmatpush1.msra.mxu0 0.0
        %563 = vmatprep.subr.mxu0 0.0
        %564 = vmatpush1.msra.mxu0 0.0
        %565 = vmatprep.subr.mxu0 0.0
        %566 = vmatpush1.msra.mxu0 0.0
        %567 = vmatprep.subr.mxu0 0.0
        %568 = vmatpush1.msra.mxu0 0.0
        %569 = vmatprep.subr.mxu0 0.0
        %570 = vmatpush1.msra.mxu0 0.0
        %571 = vmatprep.subr.mxu0 0.0
        %572 = vmatpush1.msra.mxu0 0.0
        %573 = vmatprep.subr.mxu0 0.0
        %574 = vmatpush1.msra.mxu0 0.0
        %575 = vmatprep.subr.mxu0 0.0
        %576 = vmatpush1.msra.mxu0 0.0
        %577 = vmatprep.subr.mxu0 0.0
        %578 = vmatpush1.msra.mxu0 0.0
        %579 = vmatprep.mubr.f32.mxu0 0.0
        %580 = vmatmul.mubr.f32.gmra.mrb[0].mxu0 %v510
        %v581 = vpop.f32.mrb[0].mxu0
        %v582 = vadd.f32 %v314, %v581
        %v583 = vpop.f32.mrb[0].mxu0
        %584 = vmatprep.mubr.f32.mxu0 0.0
        %585 = vmatmul.mubr.f32.gmra.mrb[0].mxu0 %v513
        %v586 = vpop.f32.mrb[0].mxu0
        %v587 = vadd.f32 %v314, %v586
        %v588 = vpop.f32.mrb[0].mxu0
        %589 = vdwg.mxu0
        %v590 = vmax.f32 %v582, 0.0
        %v591 = vmax.f32 %v587, 0.0
        %594 = vrot.lane.b32.xlu0 %v590, 64
        %v595 = vpop.permute.xlu0 %594
        %596 = vrot.lane.b32.xlu0 %v591, 64
        %v597 = vpop.permute.xlu0 %596
        %vm600 = vcmask 785920
        %601 = vst.msk [vmem:[#allocation2] sm:$0xff] %vm600, %v595
        %vm602 = vcmask 778752
        %603 = vst.msk [vmem:[#allocation2 + $0x10] sm:$0x1] %vm602, %v597
        %s604 = scalar_lea.vmem %s304, 48
        %v605 = vld [vmem:[%s604] sm:$0xff]
        %v606 = vld [vmem:[%s604 + $0x8] sm:$0x1]
        %v608 = vsel %vm316, %v605, 0
        %v611 = vsel %vm316, %v606, 0
        %613 = vmatprep.subr.mxu0 0.0
        %614 = vmatpush1.msra.mxu0 %v305
        %615 = vmatprep.subr.mxu0 0.0
        %616 = vmatpush1.msra.mxu0 %v325
        %617 = vmatprep.subr.mxu0 0.0
        %618 = vmatpush1.msra.mxu0 0.0
        %619 = vmatprep.subr.mxu0 0.0
        %620 = vmatpush1.msra.mxu0 0.0
        %621 = vmatprep.subr.mxu0 0.0
        %622 = vmatpush1.msra.mxu0 0.0
        %623 = vmatprep.subr.mxu0 0.0
        %624 = vmatpush1.msra.mxu0 0.0
        %625 = vmatprep.subr.mxu0 0.0
        %626 = vmatpush1.msra.mxu0 0.0
        %627 = vmatprep.subr.mxu0 0.0
        %628 = vmatpush1.msra.mxu0 0.0
        %629 = vmatprep.subr.mxu0 0.0
        %630 = vmatpush1.msra.mxu0 0.0
        %631 = vmatprep.subr.mxu0 0.0
        %632 = vmatpush1.msra.mxu0 0.0
        %633 = vmatprep.subr.mxu0 0.0
        %634 = vmatpush1.msra.mxu0 0.0
        %635 = vmatprep.subr.mxu0 0.0
        %636 = vmatpush1.msra.mxu0 0.0
        %637 = vmatprep.subr.mxu0 0.0
        %638 = vmatpush1.msra.mxu0 0.0
        %639 = vmatprep.subr.mxu0 0.0
        %640 = vmatpush1.msra.mxu0 0.0
        %641 = vmatprep.subr.mxu0 0.0
        %642 = vmatpush1.msra.mxu0 0.0
        %643 = vmatprep.subr.mxu0 0.0
        %644 = vmatpush1.msra.mxu0 0.0
        %645 = vmatprep.subr.mxu0 0.0
        %646 = vmatpush1.msra.mxu0 0.0
        %647 = vmatprep.subr.mxu0 0.0
        %648 = vmatpush1.msra.mxu0 0.0
        %649 = vmatprep.subr.mxu0 0.0
        %650 = vmatpush1.msra.mxu0 0.0
        %651 = vmatprep.subr.mxu0 0.0
        %652 = vmatpush1.msra.mxu0 0.0
        %653 = vmatprep.subr.mxu0 0.0
        %654 = vmatpush1.msra.mxu0 0.0
        %655 = vmatprep.subr.mxu0 0.0
        %656 = vmatpush1.msra.mxu0 0.0
        %657 = vmatprep.subr.mxu0 0.0
        %658 = vmatpush1.msra.mxu0 0.0
        %659 = vmatprep.subr.mxu0 0.0
        %660 = vmatpush1.msra.mxu0 0.0
        %661 = vmatprep.subr.mxu0 0.0
        %662 = vmatpush1.msra.mxu0 0.0
        %663 = vmatprep.subr.mxu0 0.0
        %664 = vmatpush1.msra.mxu0 0.0
        %665 = vmatprep.subr.mxu0 0.0
        %666 = vmatpush1.msra.mxu0 0.0
        %667 = vmatprep.subr.mxu0 0.0
        %668 = vmatpush1.msra.mxu0 0.0
        %669 = vmatprep.subr.mxu0 0.0
        %670 = vmatpush1.msra.mxu0 0.0
        %671 = vmatprep.subr.mxu0 0.0
        %672 = vmatpush1.msra.mxu0 0.0
        %673 = vmatprep.subr.mxu0 0.0
        %674 = vmatpush1.msra.mxu0 0.0
        %675 = vmatprep.subr.mxu0 0.0
        %676 = vmatpush1.msra.mxu0 0.0
        %677 = vmatprep.mubr.f32.mxu0 0.0
        %678 = vmatmul.mubr.f32.gmra.mrb[0].mxu0 %v608
        %v679 = vpop.f32.mrb[0].mxu0
        %v680 = vadd.f32 %v314, %v679
        %v681 = vpop.f32.mrb[0].mxu0
        %682 = vmatprep.mubr.f32.mxu0 0.0
        %683 = vmatmul.mubr.f32.gmra.mrb[0].mxu0 %v611
        %v684 = vpop.f32.mrb[0].mxu0
        %v685 = vadd.f32 %v314, %v684
        %v686 = vpop.f32.mrb[0].mxu0
        %687 = vdwg.mxu0
        %v688 = vmax.f32 %v680, 0.0
        %v689 = vmax.f32 %v685, 0.0
        %692 = vrot.lane.b32.xlu0 %v688, 96
        %v693 = vpop.permute.xlu0 %692
        %694 = vrot.lane.b32.xlu0 %v689, 96
        %v695 = vpop.permute.xlu0 %694
        %vm698 = vcmask 1048320
        %699 = vst.msk [vmem:[#allocation2] sm:$0xff] %vm698, %v693
        %vm700 = vcmask 1041152
        %701 = vst.msk [vmem:[#allocation2 + $0x10] sm:$0x1] %vm700, %v695
        %s702 = scalar_lea.vmem %s304, 64
        %v703 = vld [vmem:[%s702] sm:$0xff]
        %v704 = vld [vmem:[%s702 + $0x8] sm:$0x1]
        %v706 = vsel %vm316, %v703, 0
        %v709 = vsel %vm316, %v704, 0
        %711 = vmatprep.subr.mxu0 0.0
        %712 = vmatpush1.msra.mxu0 %v305
        %713 = vmatprep.subr.mxu0 0.0
        %714 = vmatpush1.msra.mxu0 %v325
        %715 = vmatprep.subr.mxu0 0.0
        %716 = vmatpush1.msra.mxu0 0.0
        %717 = vmatprep.subr.mxu0 0.0
        %718 = vmatpush1.msra.mxu0 0.0
        %719 = vmatprep.subr.mxu0 0.0
        %720 = vmatpush1.msra.mxu0 0.0
        %721 = vmatprep.subr.mxu0 0.0
        %722 = vmatpush1.msra.mxu0 0.0
        %723 = vmatprep.subr.mxu0 0.0
        %724 = vmatpush1.msra.mxu0 0.0
        %725 = vmatprep.subr.mxu0 0.0
        %726 = vmatpush1.msra.mxu0 0.0
        %727 = vmatprep.subr.mxu0 0.0
        %728 = vmatpush1.msra.mxu0 0.0
        %729 = vmatprep.subr.mxu0 0.0
        %730 = vmatpush1.msra.mxu0 0.0
        %731 = vmatprep.subr.mxu0 0.0
        %732 = vmatpush1.msra.mxu0 0.0
        %733 = vmatprep.subr.mxu0 0.0
        %734 = vmatpush1.msra.mxu0 0.0
        %735 = vmatprep.subr.mxu0 0.0
        %736 = vmatpush1.msra.mxu0 0.0
        %737 = vmatprep.subr.mxu0 0.0
        %738 = vmatpush1.msra.mxu0 0.0
        %739 = vmatprep.subr.mxu0 0.0
        %740 = vmatpush1.msra.mxu0 0.0
        %741 = vmatprep.subr.mxu0 0.0
        %742 = vmatpush1.msra.mxu0 0.0
        %743 = vmatprep.subr.mxu0 0.0
        %744 = vmatpush1.msra.mxu0 0.0
        %745 = vmatprep.subr.mxu0 0.0
        %746 = vmatpush1.msra.mxu0 0.0
        %747 = vmatprep.subr.mxu0 0.0
        %748 = vmatpush1.msra.mxu0 0.0
        %749 = vmatprep.subr.mxu0 0.0
        %750 = vmatpush1.msra.mxu0 0.0
        %751 = vmatprep.subr.mxu0 0.0
        %752 = vmatpush1.msra.mxu0 0.0
        %753 = vmatprep.subr.mxu0 0.0
        %754 = vmatpush1.msra.mxu0 0.0
        %755 = vmatprep.subr.mxu0 0.0
        %756 = vmatpush1.msra.mxu0 0.0
        %757 = vmatprep.subr.mxu0 0.0
        %758 = vmatpush1.msra.mxu0 0.0
        %759 = vmatprep.subr.mxu0 0.0
        %760 = vmatpush1.msra.mxu0 0.0
        %761 = vmatprep.subr.mxu0 0.0
        %762 = vmatpush1.msra.mxu0 0.0
        %763 = vmatprep.subr.mxu0 0.0
        %764 = vmatpush1.msra.mxu0 0.0
        %765 = vmatprep.subr.mxu0 0.0
        %766 = vmatpush1.msra.mxu0 0.0
        %767 = vmatprep.subr.mxu0 0.0
        %768 = vmatpush1.msra.mxu0 0.0
        %769 = vmatprep.subr.mxu0 0.0
        %770 = vmatpush1.msra.mxu0 0.0
        %771 = vmatprep.subr.mxu0 0.0
        %772 = vmatpush1.msra.mxu0 0.0
        %773 = vmatprep.subr.mxu0 0.0
        %774 = vmatpush1.msra.mxu0 0.0
        %775 = vmatprep.mubr.f32.mxu0 0.0
        %776 = vmatmul.mubr.f32.gmra.mrb[0].mxu0 %v706
        %v777 = vpop.f32.mrb[0].mxu0
        %v778 = vadd.f32 %v314, %v777
        %v779 = vpop.f32.mrb[0].mxu0
        %780 = vmatprep.mubr.f32.mxu0 0.0
        %781 = vmatmul.mubr.f32.gmra.mrb[0].mxu0 %v709
        %v782 = vpop.f32.mrb[0].mxu0
        %v783 = vadd.f32 %v314, %v782
        %v784 = vpop.f32.mrb[0].mxu0
        %785 = vdwg.mxu0
        %v786 = vmax.f32 %v778, 0.0
        %v787 = vmax.f32 %v783, 0.0
        %788 = vst.msk [vmem:[#allocation2 + $0x8] sm:$0xff] %vm404, %v786
        %789 = vst.msk [vmem:[#allocation2 + $0x18] sm:$0x1] %vm406, %v787
        %s790 = scalar_lea.vmem %s304, 80
        %v791 = vld [vmem:[%s790] sm:$0xff]
        %v792 = vld [vmem:[%s790 + $0x8] sm:$0x1]
        %v794 = vsel %vm316, %v791, 0
        %v797 = vsel %vm316, %v792, 0
        %799 = vmatprep.subr.mxu0 0.0
        %800 = vmatpush1.msra.mxu0 %v305
        %801 = vmatprep.subr.mxu0 0.0
        %802 = vmatpush1.msra.mxu0 %v325
        %803 = vmatprep.subr.mxu0 0.0
        %804 = vmatpush1.msra.mxu0 0.0
        %805 = vmatprep.subr.mxu0 0.0
        %806 = vmatpush1.msra.mxu0 0.0
        %807 = vmatprep.subr.mxu0 0.0
        %808 = vmatpush1.msra.mxu0 0.0
        %809 = vmatprep.subr.mxu0 0.0
        %810 = vmatpush1.msra.mxu0 0.0
        %811 = vmatprep.subr.mxu0 0.0
        %812 = vmatpush1.msra.mxu0 0.0
        %813 = vmatprep.subr.mxu0 0.0
        %814 = vmatpush1.msra.mxu0 0.0
        %815 = vmatprep.subr.mxu0 0.0
        %816 = vmatpush1.msra.mxu0 0.0
        %817 = vmatprep.subr.mxu0 0.0
        %818 = vmatpush1.msra.mxu0 0.0
        %819 = vmatprep.subr.mxu0 0.0
        %820 = vmatpush1.msra.mxu0 0.0
        %821 = vmatprep.subr.mxu0 0.0
        %822 = vmatpush1.msra.mxu0 0.0
        %823 = vmatprep.subr.mxu0 0.0
        %824 = vmatpush1.msra.mxu0 0.0
        %825 = vmatprep.subr.mxu0 0.0
        %826 = vmatpush1.msra.mxu0 0.0
        %827 = vmatprep.subr.mxu0 0.0
        %828 = vmatpush1.msra.mxu0 0.0
        %829 = vmatprep.subr.mxu0 0.0
        %830 = vmatpush1.msra.mxu0 0.0
        %831 = vmatprep.subr.mxu0 0.0
        %832 = vmatpush1.msra.mxu0 0.0
        %833 = vmatprep.subr.mxu0 0.0
        %834 = vmatpush1.msra.mxu0 0.0
        %835 = vmatprep.subr.mxu0 0.0
        %836 = vmatpush1.msra.mxu0 0.0
        %837 = vmatprep.subr.mxu0 0.0
        %838 = vmatpush1.msra.mxu0 0.0
        %839 = vmatprep.subr.mxu0 0.0
        %840 = vmatpush1.msra.mxu0 0.0
        %841 = vmatprep.subr.mxu0 0.0
        %842 = vmatpush1.msra.mxu0 0.0
        %843 = vmatprep.subr.mxu0 0.0
        %844 = vmatpush1.msra.mxu0 0.0
        %845 = vmatprep.subr.mxu0 0.0
        %846 = vmatpush1.msra.mxu0 0.0
        %847 = vmatprep.subr.mxu0 0.0
        %848 = vmatpush1.msra.mxu0 0.0
        %849 = vmatprep.subr.mxu0 0.0
        %850 = vmatpush1.msra.mxu0 0.0
        %851 = vmatprep.subr.mxu0 0.0
        %852 = vmatpush1.msra.mxu0 0.0
        %853 = vmatprep.subr.mxu0 0.0
        %854 = vmatpush1.msra.mxu0 0.0
        %855 = vmatprep.subr.mxu0 0.0
        %856 = vmatpush1.msra.mxu0 0.0
        %857 = vmatprep.subr.mxu0 0.0
        %858 = vmatpush1.msra.mxu0 0.0
        %859 = vmatprep.subr.mxu0 0.0
        %860 = vmatpush1.msra.mxu0 0.0
        %861 = vmatprep.subr.mxu0 0.0
        %862 = vmatpush1.msra.mxu0 0.0
        %863 = vmatprep.mubr.f32.mxu0 0.0
        %864 = vmatmul.mubr.f32.gmra.mrb[0].mxu0 %v794
        %v865 = vpop.f32.mrb[0].mxu0
        %v866 = vadd.f32 %v314, %v865
        %v867 = vpop.f32.mrb[0].mxu0
        %868 = vmatprep.mubr.f32.mxu0 0.0
        %869 = vmatmul.mubr.f32.gmra.mrb[0].mxu0 %v797
        %v870 = vpop.f32.mrb[0].mxu0
        %v871 = vadd.f32 %v314, %v870
        %v872 = vpop.f32.mrb[0].mxu0
        %873 = vdwg.mxu0
        %v874 = vmax.f32 %v866, 0.0
        %v875 = vmax.f32 %v871, 0.0
        %878 = vrot.lane.b32.xlu0 %v874, 32
        %v879 = vpop.permute.xlu0 %878
        %880 = vrot.lane.b32.xlu0 %v875, 32
        %v881 = vpop.permute.xlu0 %880
        %884 = vst.msk [vmem:[#allocation2 + $0x8] sm:$0xff] %vm502, %v879
        %885 = vst.msk [vmem:[#allocation2 + $0x18] sm:$0x1] %vm504, %v881
        %s886 = scalar_lea.vmem %s304, 96
        %v887 = vld [vmem:[%s886] sm:$0xff]
        %v888 = vld [vmem:[%s886 + $0x8] sm:$0x1]
        %v890 = vsel %vm316, %v887, 0
        %v893 = vsel %vm316, %v888, 0
        %895 = vmatprep.subr.mxu0 0.0
        %896 = vmatpush1.msra.mxu0 %v305
        %897 = vmatprep.subr.mxu0 0.0
        %898 = vmatpush1.msra.mxu0 %v325
        %899 = vmatprep.subr.mxu0 0.0
        %900 = vmatpush1.msra.mxu0 0.0
        %901 = vmatprep.subr.mxu0 0.0
        %902 = vmatpush1.msra.mxu0 0.0
        %903 = vmatprep.subr.mxu0 0.0
        %904 = vmatpush1.msra.mxu0 0.0
        %905 = vmatprep.subr.mxu0 0.0
        %906 = vmatpush1.msra.mxu0 0.0
        %907 = vmatprep.subr.mxu0 0.0
        %908 = vmatpush1.msra.mxu0 0.0
        %909 = vmatprep.subr.mxu0 0.0
        %910 = vmatpush1.msra.mxu0 0.0
        %911 = vmatprep.subr.mxu0 0.0
        %912 = vmatpush1.msra.mxu0 0.0
        %913 = vmatprep.subr.mxu0 0.0
        %914 = vmatpush1.msra.mxu0 0.0
        %915 = vmatprep.subr.mxu0 0.0
        %916 = vmatpush1.msra.mxu0 0.0
        %917 = vmatprep.subr.mxu0 0.0
        %918 = vmatpush1.msra.mxu0 0.0
        %919 = vmatprep.subr.mxu0 0.0
        %920 = vmatpush1.msra.mxu0 0.0
        %921 = vmatprep.subr.mxu0 0.0
        %922 = vmatpush1.msra.mxu0 0.0
        %923 = vmatprep.subr.mxu0 0.0
        %924 = vmatpush1.msra.mxu0 0.0
        %925 = vmatprep.subr.mxu0 0.0
        %926 = vmatpush1.msra.mxu0 0.0
        %927 = vmatprep.subr.mxu0 0.0
        %928 = vmatpush1.msra.mxu0 0.0
        %929 = vmatprep.subr.mxu0 0.0
        %930 = vmatpush1.msra.mxu0 0.0
        %931 = vmatprep.subr.mxu0 0.0
        %932 = vmatpush1.msra.mxu0 0.0
        %933 = vmatprep.subr.mxu0 0.0
        %934 = vmatpush1.msra.mxu0 0.0
        %935 = vmatprep.subr.mxu0 0.0
        %936 = vmatpush1.msra.mxu0 0.0
        %937 = vmatprep.subr.mxu0 0.0
        %938 = vmatpush1.msra.mxu0 0.0
        %939 = vmatprep.subr.mxu0 0.0
        %940 = vmatpush1.msra.mxu0 0.0
        %941 = vmatprep.subr.mxu0 0.0
        %942 = vmatpush1.msra.mxu0 0.0
        %943 = vmatprep.subr.mxu0 0.0
        %944 = vmatpush1.msra.mxu0 0.0
        %945 = vmatprep.subr.mxu0 0.0
        %946 = vmatpush1.msra.mxu0 0.0
        %947 = vmatprep.subr.mxu0 0.0
        %948 = vmatpush1.msra.mxu0 0.0
        %949 = vmatprep.subr.mxu0 0.0
        %950 = vmatpush1.msra.mxu0 0.0
        %951 = vmatprep.subr.mxu0 0.0
        %952 = vmatpush1.msra.mxu0 0.0
        %953 = vmatprep.subr.mxu0 0.0
        %954 = vmatpush1.msra.mxu0 0.0
        %955 = vmatprep.subr.mxu0 0.0
        %956 = vmatpush1.msra.mxu0 0.0
        %957 = vmatprep.subr.mxu0 0.0
        %958 = vmatpush1.msra.mxu0 0.0
        %959 = vmatprep.mubr.f32.mxu0 0.0
        %960 = vmatmul.mubr.f32.gmra.mrb[0].mxu0 %v890
        %v961 = vpop.f32.mrb[0].mxu0
        %v962 = vadd.f32 %v314, %v961
        %v963 = vpop.f32.mrb[0].mxu0
        %964 = vmatprep.mubr.f32.mxu0 0.0
        %965 = vmatmul.mubr.f32.gmra.mrb[0].mxu0 %v893
        %v966 = vpop.f32.mrb[0].mxu0
        %v967 = vadd.f32 %v314, %v966
        %v968 = vpop.f32.mrb[0].mxu0
        %969 = vdwg.mxu0
        %v970 = vmax.f32 %v962, 0.0
        %v971 = vmax.f32 %v967, 0.0
        %974 = vrot.lane.b32.xlu0 %v970, 64
        %v975 = vpop.permute.xlu0 %974
        %976 = vrot.lane.b32.xlu0 %v971, 64
        %v977 = vpop.permute.xlu0 %976
        %980 = vst.msk [vmem:[#allocation2 + $0x8] sm:$0xff] %vm600, %v975
        %981 = vst.msk [vmem:[#allocation2 + $0x18] sm:$0x1] %vm602, %v977
        %s982 = scalar_lea.vmem %s304, 112
        %v983 = vld [vmem:[%s982] sm:$0xff]
        %v984 = vld [vmem:[%s982 + $0x8] sm:$0x1]
        %v986 = vsel %vm316, %v983, 0
        %v989 = vsel %vm316, %v984, 0
        %991 = vmatprep.subr.mxu0 0.0
        %992 = vmatpush1.msra.mxu0 %v305
        %993 = vmatprep.subr.mxu0 0.0
        %994 = vmatpush1.msra.mxu0 %v325
        %995 = vmatprep.subr.mxu0 0.0
        %996 = vmatpush1.msra.mxu0 0.0
        %997 = vmatprep.subr.mxu0 0.0
        %998 = vmatpush1.msra.mxu0 0.0
        %999 = vmatprep.subr.mxu0 0.0
        %1000 = vmatpush1.msra.mxu0 0.0
        %1001 = vmatprep.subr.mxu0 0.0
        %1002 = vmatpush1.msra.mxu0 0.0
        %1003 = vmatprep.subr.mxu0 0.0
        %1004 = vmatpush1.msra.mxu0 0.0
        %1005 = vmatprep.subr.mxu0 0.0
        %1006 = vmatpush1.msra.mxu0 0.0
        %1007 = vmatprep.subr.mxu0 0.0
        %1008 = vmatpush1.msra.mxu0 0.0
        %1009 = vmatprep.subr.mxu0 0.0
        %1010 = vmatpush1.msra.mxu0 0.0
        %1011 = vmatprep.subr.mxu0 0.0
        %1012 = vmatpush1.msra.mxu0 0.0
        %1013 = vmatprep.subr.mxu0 0.0
        %1014 = vmatpush1.msra.mxu0 0.0
        %1015 = vmatprep.subr.mxu0 0.0
        %1016 = vmatpush1.msra.mxu0 0.0
        %1017 = vmatprep.subr.mxu0 0.0
        %1018 = vmatpush1.msra.mxu0 0.0
        %1019 = vmatprep.subr.mxu0 0.0
        %1020 = vmatpush1.msra.mxu0 0.0
        %1021 = vmatprep.subr.mxu0 0.0
        %1022 = vmatpush1.msra.mxu0 0.0
        %1023 = vmatprep.subr.mxu0 0.0
        %1024 = vmatpush1.msra.mxu0 0.0
        %1025 = vmatprep.subr.mxu0 0.0
        %1026 = vmatpush1.msra.mxu0 0.0
        %1027 = vmatprep.subr.mxu0 0.0
        %1028 = vmatpush1.msra.mxu0 0.0
        %1029 = vmatprep.subr.mxu0 0.0
        %1030 = vmatpush1.msra.mxu0 0.0
        %1031 = vmatprep.subr.mxu0 0.0
        %1032 = vmatpush1.msra.mxu0 0.0
        %1033 = vmatprep.subr.mxu0 0.0
        %1034 = vmatpush1.msra.mxu0 0.0
        %1035 = vmatprep.subr.mxu0 0.0
        %1036 = vmatpush1.msra.mxu0 0.0
        %1037 = vmatprep.subr.mxu0 0.0
        %1038 = vmatpush1.msra.mxu0 0.0
        %1039 = vmatprep.subr.mxu0 0.0
        %1040 = vmatpush1.msra.mxu0 0.0
        %1041 = vmatprep.subr.mxu0 0.0
        %1042 = vmatpush1.msra.mxu0 0.0
        %1043 = vmatprep.subr.mxu0 0.0
        %1044 = vmatpush1.msra.mxu0 0.0
        %1045 = vmatprep.subr.mxu0 0.0
        %1046 = vmatpush1.msra.mxu0 0.0
        %1047 = vmatprep.subr.mxu0 0.0
        %1048 = vmatpush1.msra.mxu0 0.0
        %1049 = vmatprep.subr.mxu0 0.0
        %1050 = vmatpush1.msra.mxu0 0.0
        %1051 = vmatprep.subr.mxu0 0.0
        %1052 = vmatpush1.msra.mxu0 0.0
        %1053 = vmatprep.subr.mxu0 0.0
        %1054 = vmatpush1.msra.mxu0 0.0
        %1055 = vmatprep.mubr.f32.mxu0 0.0
        %1056 = vmatmul.mubr.f32.gmra.mrb[0].mxu0 %v986
        %v1057 = vpop.f32.mrb[0].mxu0
        %v1058 = vadd.f32 %v314, %v1057
        %v1059 = vpop.f32.mrb[0].mxu0
        %1060 = vmatprep.mubr.f32.mxu0 0.0
        %1061 = vmatmul.mubr.f32.gmra.mrb[0].mxu0 %v989
        %v1062 = vpop.f32.mrb[0].mxu0
        %v1063 = vadd.f32 %v314, %v1062
        %v1064 = vpop.f32.mrb[0].mxu0
        %1065 = vdwg.mxu0
        %v1066 = vmax.f32 %v1058, 0.0
        %v1067 = vmax.f32 %v1063, 0.0
        %1068 = vst.msk [vmem:[#allocation3] sm:$0xff] %vm404, %v1066
        %1069 = vst.msk [vmem:[#allocation3 + $0x10] sm:$0x1] %vm406, %v1067
        %s1070 = scalar_lea.vmem %s304, 128
        %v1071 = vld [vmem:[%s1070] sm:$0xff]
        %v1072 = vld [vmem:[%s1070 + $0x8] sm:$0x1]
        %v1074 = vsel %vm316, %v1071, 0
        %v1077 = vsel %vm316, %v1072, 0
        %1079 = vmatprep.subr.mxu0 0.0
        %1080 = vmatpush1.msra.mxu0 %v305
        %1081 = vmatprep.subr.mxu0 0.0
        %1082 = vmatpush1.msra.mxu0 %v325
        %1083 = vmatprep.subr.mxu0 0.0
        %1084 = vmatpush1.msra.mxu0 0.0
        %1085 = vmatprep.subr.mxu0 0.0
        %1086 = vmatpush1.msra.mxu0 0.0
        %1087 = vmatprep.subr.mxu0 0.0
        %1088 = vmatpush1.msra.mxu0 0.0
        %1089 = vmatprep.subr.mxu0 0.0
        %1090 = vmatpush1.msra.mxu0 0.0
        %1091 = vmatprep.subr.mxu0 0.0
        %1092 = vmatpush1.msra.mxu0 0.0
        %1093 = vmatprep.subr.mxu0 0.0
        %1094 = vmatpush1.msra.mxu0 0.0
        %1095 = vmatprep.subr.mxu0 0.0
        %1096 = vmatpush1.msra.mxu0 0.0
        %1097 = vmatprep.subr.mxu0 0.0
        %1098 = vmatpush1.msra.mxu0 0.0
        %1099 = vmatprep.subr.mxu0 0.0
        %1100 = vmatpush1.msra.mxu0 0.0
        %1101 = vmatprep.subr.mxu0 0.0
        %1102 = vmatpush1.msra.mxu0 0.0
        %1103 = vmatprep.subr.mxu0 0.0
        %1104 = vmatpush1.msra.mxu0 0.0
        %1105 = vmatprep.subr.mxu0 0.0
        %1106 = vmatpush1.msra.mxu0 0.0
        %1107 = vmatprep.subr.mxu0 0.0
        %1108 = vmatpush1.msra.mxu0 0.0
        %1109 = vmatprep.subr.mxu0 0.0
        %1110 = vmatpush1.msra.mxu0 0.0
        %1111 = vmatprep.subr.mxu0 0.0
        %1112 = vmatpush1.msra.mxu0 0.0
        %1113 = vmatprep.subr.mxu0 0.0
        %1114 = vmatpush1.msra.mxu0 0.0
        %1115 = vmatprep.subr.mxu0 0.0
        %1116 = vmatpush1.msra.mxu0 0.0
        %1117 = vmatprep.subr.mxu0 0.0
        %1118 = vmatpush1.msra.mxu0 0.0
        %1119 = vmatprep.subr.mxu0 0.0
        %1120 = vmatpush1.msra.mxu0 0.0
        %1121 = vmatprep.subr.mxu0 0.0
        %1122 = vmatpush1.msra.mxu0 0.0
        %1123 = vmatprep.subr.mxu0 0.0
        %1124 = vmatpush1.msra.mxu0 0.0
        %1125 = vmatprep.subr.mxu0 0.0
        %1126 = vmatpush1.msra.mxu0 0.0
        %1127 = vmatprep.subr.mxu0 0.0
        %1128 = vmatpush1.msra.mxu0 0.0
        %1129 = vmatprep.subr.mxu0 0.0
        %1130 = vmatpush1.msra.mxu0 0.0
        %1131 = vmatprep.subr.mxu0 0.0
        %1132 = vmatpush1.msra.mxu0 0.0
        %1133 = vmatprep.subr.mxu0 0.0
        %1134 = vmatpush1.msra.mxu0 0.0
        %1135 = vmatprep.subr.mxu0 0.0
        %1136 = vmatpush1.msra.mxu0 0.0
        %1137 = vmatprep.subr.mxu0 0.0
        %1138 = vmatpush1.msra.mxu0 0.0
        %1139 = vmatprep.subr.mxu0 0.0
        %1140 = vmatpush1.msra.mxu0 0.0
        %1141 = vmatprep.subr.mxu0 0.0
        %1142 = vmatpush1.msra.mxu0 0.0
        %1143 = vmatprep.mubr.f32.mxu0 0.0
        %1144 = vmatmul.mubr.f32.gmra.mrb[0].mxu0 %v1074
        %v1145 = vpop.f32.mrb[0].mxu0
        %v1146 = vadd.f32 %v314, %v1145
        %v1147 = vpop.f32.mrb[0].mxu0
        %1148 = vmatprep.mubr.f32.mxu0 0.0
        %1149 = vmatmul.mubr.f32.gmra.mrb[0].mxu0 %v1077
        %v1150 = vpop.f32.mrb[0].mxu0
        %v1151 = vadd.f32 %v314, %v1150
        %v1152 = vpop.f32.mrb[0].mxu0
        %1153 = vdwg.mxu0
        %v1154 = vmax.f32 %v1146, 0.0
        %v1155 = vmax.f32 %v1151, 0.0
        %1158 = vrot.lane.b32.xlu0 %v1154, 32
        %v1159 = vpop.permute.xlu0 %1158
        %1160 = vrot.lane.b32.xlu0 %v1155, 32
        %v1161 = vpop.permute.xlu0 %1160
        %1164 = vst.msk [vmem:[#allocation3] sm:$0xff] %vm502, %v1159
        %1165 = vst.msk [vmem:[#allocation3 + $0x10] sm:$0x1] %vm504, %v1161
        %s1166 = scalar_lea.vmem %s304, 144
        %v1167 = vld [vmem:[%s1166] sm:$0xff]
        %v1168 = vld [vmem:[%s1166 + $0x8] sm:$0x1]
        %v1170 = vsel %vm316, %v1167, 0
        %v1173 = vsel %vm316, %v1168, 0
        %1175 = vmatprep.subr.mxu0 0.0
        %1176 = vmatpush1.msra.mxu0 %v305
        %1177 = vmatprep.subr.mxu0 0.0
        %1178 = vmatpush1.msra.mxu0 %v325
        %1179 = vmatprep.subr.mxu0 0.0
        %1180 = vmatpush1.msra.mxu0 0.0
        %1181 = vmatprep.subr.mxu0 0.0
        %1182 = vmatpush1.msra.mxu0 0.0
        %1183 = vmatprep.subr.mxu0 0.0
        %1184 = vmatpush1.msra.mxu0 0.0
        %1185 = vmatprep.subr.mxu0 0.0
        %1186 = vmatpush1.msra.mxu0 0.0
        %1187 = vmatprep.subr.mxu0 0.0
        %1188 = vmatpush1.msra.mxu0 0.0
        %1189 = vmatprep.subr.mxu0 0.0
        %1190 = vmatpush1.msra.mxu0 0.0
        %1191 = vmatprep.subr.mxu0 0.0
        %1192 = vmatpush1.msra.mxu0 0.0
        %1193 = vmatprep.subr.mxu0 0.0
        %1194 = vmatpush1.msra.mxu0 0.0
        %1195 = vmatprep.subr.mxu0 0.0
        %1196 = vmatpush1.msra.mxu0 0.0
        %1197 = vmatprep.subr.mxu0 0.0
        %1198 = vmatpush1.msra.mxu0 0.0
        %1199 = vmatprep.subr.mxu0 0.0
        %1200 = vmatpush1.msra.mxu0 0.0
        %1201 = vmatprep.subr.mxu0 0.0
        %1202 = vmatpush1.msra.mxu0 0.0
        %1203 = vmatprep.subr.mxu0 0.0
        %1204 = vmatpush1.msra.mxu0 0.0
        %1205 = vmatprep.subr.mxu0 0.0
        %1206 = vmatpush1.msra.mxu0 0.0
        %1207 = vmatprep.subr.mxu0 0.0
        %1208 = vmatpush1.msra.mxu0 0.0
        %1209 = vmatprep.subr.mxu0 0.0
        %1210 = vmatpush1.msra.mxu0 0.0
        %1211 = vmatprep.subr.mxu0 0.0
        %1212 = vmatpush1.msra.mxu0 0.0
        %1213 = vmatprep.subr.mxu0 0.0
        %1214 = vmatpush1.msra.mxu0 0.0
        %1215 = vmatprep.subr.mxu0 0.0
        %1216 = vmatpush1.msra.mxu0 0.0
        %1217 = vmatprep.subr.mxu0 0.0
        %1218 = vmatpush1.msra.mxu0 0.0
        %1219 = vmatprep.subr.mxu0 0.0
        %1220 = vmatpush1.msra.mxu0 0.0
        %1221 = vmatprep.subr.mxu0 0.0
        %1222 = vmatpush1.msra.mxu0 0.0
        %1223 = vmatprep.subr.mxu0 0.0
        %1224 = vmatpush1.msra.mxu0 0.0
        %1225 = vmatprep.subr.mxu0 0.0
        %1226 = vmatpush1.msra.mxu0 0.0
        %1227 = vmatprep.subr.mxu0 0.0
        %1228 = vmatpush1.msra.mxu0 0.0
        %1229 = vmatprep.subr.mxu0 0.0
        %1230 = vmatpush1.msra.mxu0 0.0
        %1231 = vmatprep.subr.mxu0 0.0
        %1232 = vmatpush1.msra.mxu0 0.0
        %1233 = vmatprep.subr.mxu0 0.0
        %1234 = vmatpush1.msra.mxu0 0.0
        %1235 = vmatprep.subr.mxu0 0.0
        %1236 = vmatpush1.msra.mxu0 0.0
        %1237 = vmatprep.subr.mxu0 0.0
        %1238 = vmatpush1.msra.mxu0 0.0
        %1239 = vmatprep.mubr.f32.mxu0 0.0
        %1240 = vmatmul.mubr.f32.gmra.mrb[0].mxu0 %v1170
        %v1241 = vpop.f32.mrb[0].mxu0
        %v1242 = vadd.f32 %v314, %v1241
        %v1243 = vpop.f32.mrb[0].mxu0
        %1244 = vmatprep.mubr.f32.mxu0 0.0
        %1245 = vmatmul.mubr.f32.gmra.mrb[0].mxu0 %v1173
        %v1246 = vpop.f32.mrb[0].mxu0
        %v1247 = vadd.f32 %v314, %v1246
        %v1248 = vpop.f32.mrb[0].mxu0
        %1249 = vdwg.mxu0
        %v1250 = vmax.f32 %v1242, 0.0
        %v1251 = vmax.f32 %v1247, 0.0
        %1254 = vrot.lane.b32.xlu0 %v1250, 64
        %v1255 = vpop.permute.xlu0 %1254
        %1256 = vrot.lane.b32.xlu0 %v1251, 64
        %v1257 = vpop.permute.xlu0 %1256
        %1260 = vst.msk [vmem:[#allocation3] sm:$0xff] %vm600, %v1255
        %1261 = vst.msk [vmem:[#allocation3 + $0x10] sm:$0x1] %vm602, %v1257
        %s1262 = scalar_lea.vmem %s304, 160
        %v1263 = vld [vmem:[%s1262] sm:$0xff]
        %v1264 = vld [vmem:[%s1262 + $0x8] sm:$0x1]
        %v1266 = vsel %vm316, %v1263, 0
        %v1269 = vsel %vm316, %v1264, 0
        %1271 = vmatprep.subr.mxu0 0.0
        %1272 = vmatpush1.msra.mxu0 %v305
        %1273 = vmatprep.subr.mxu0 0.0
        %1274 = vmatpush1.msra.mxu0 %v325
        %1275 = vmatprep.subr.mxu0 0.0
        %1276 = vmatpush1.msra.mxu0 0.0
        %1277 = vmatprep.subr.mxu0 0.0
        %1278 = vmatpush1.msra.mxu0 0.0
        %1279 = vmatprep.subr.mxu0 0.0
        %1280 = vmatpush1.msra.mxu0 0.0
        %1281 = vmatprep.subr.mxu0 0.0
        %1282 = vmatpush1.msra.mxu0 0.0
        %1283 = vmatprep.subr.mxu0 0.0
        %1284 = vmatpush1.msra.mxu0 0.0
        %1285 = vmatprep.subr.mxu0 0.0
        %1286 = vmatpush1.msra.mxu0 0.0
        %1287 = vmatprep.subr.mxu0 0.0
        %1288 = vmatpush1.msra.mxu0 0.0
        %1289 = vmatprep.subr.mxu0 0.0
        %1290 = vmatpush1.msra.mxu0 0.0
        %1291 = vmatprep.subr.mxu0 0.0
        %1292 = vmatpush1.msra.mxu0 0.0
        %1293 = vmatprep.subr.mxu0 0.0
        %1294 = vmatpush1.msra.mxu0 0.0
        %1295 = vmatprep.subr.mxu0 0.0
        %1296 = vmatpush1.msra.mxu0 0.0
        %1297 = vmatprep.subr.mxu0 0.0
        %1298 = vmatpush1.msra.mxu0 0.0
        %1299 = vmatprep.subr.mxu0 0.0
        %1300 = vmatpush1.msra.mxu0 0.0
        %1301 = vmatprep.subr.mxu0 0.0
        %1302 = vmatpush1.msra.mxu0 0.0
        %1303 = vmatprep.subr.mxu0 0.0
        %1304 = vmatpush1.msra.mxu0 0.0
        %1305 = vmatprep.subr.mxu0 0.0
        %1306 = vmatpush1.msra.mxu0 0.0
        %1307 = vmatprep.subr.mxu0 0.0
        %1308 = vmatpush1.msra.mxu0 0.0
        %1309 = vmatprep.subr.mxu0 0.0
        %1310 = vmatpush1.msra.mxu0 0.0
        %1311 = vmatprep.subr.mxu0 0.0
        %1312 = vmatpush1.msra.mxu0 0.0
        %1313 = vmatprep.subr.mxu0 0.0
        %1314 = vmatpush1.msra.mxu0 0.0
        %1315 = vmatprep.subr.mxu0 0.0
        %1316 = vmatpush1.msra.mxu0 0.0
        %1317 = vmatprep.subr.mxu0 0.0
        %1318 = vmatpush1.msra.mxu0 0.0
        %1319 = vmatprep.subr.mxu0 0.0
        %1320 = vmatpush1.msra.mxu0 0.0
        %1321 = vmatprep.subr.mxu0 0.0
        %1322 = vmatpush1.msra.mxu0 0.0
        %1323 = vmatprep.subr.mxu0 0.0
        %1324 = vmatpush1.msra.mxu0 0.0
        %1325 = vmatprep.subr.mxu0 0.0
        %1326 = vmatpush1.msra.mxu0 0.0
        %1327 = vmatprep.subr.mxu0 0.0
        %1328 = vmatpush1.msra.mxu0 0.0
        %1329 = vmatprep.subr.mxu0 0.0
        %1330 = vmatpush1.msra.mxu0 0.0
        %1331 = vmatprep.subr.mxu0 0.0
        %1332 = vmatpush1.msra.mxu0 0.0
        %1333 = vmatprep.subr.mxu0 0.0
        %1334 = vmatpush1.msra.mxu0 0.0
        %1335 = vmatprep.mubr.f32.mxu0 0.0
        %1336 = vmatmul.mubr.f32.gmra.mrb[0].mxu0 %v1266
        %v1337 = vpop.f32.mrb[0].mxu0
        %v1338 = vadd.f32 %v314, %v1337
        %v1339 = vpop.f32.mrb[0].mxu0
        %1340 = vmatprep.mubr.f32.mxu0 0.0
        %1341 = vmatmul.mubr.f32.gmra.mrb[0].mxu0 %v1269
        %v1342 = vpop.f32.mrb[0].mxu0
        %v1343 = vadd.f32 %v314, %v1342
        %v1344 = vpop.f32.mrb[0].mxu0
        %1345 = vdwg.mxu0
        %v1346 = vmax.f32 %v1338, 0.0
        %v1347 = vmax.f32 %v1343, 0.0
        %1350 = vrot.lane.b32.xlu0 %v1346, 96
        %v1351 = vpop.permute.xlu0 %1350
        %1352 = vrot.lane.b32.xlu0 %v1347, 96
        %v1353 = vpop.permute.xlu0 %1352
        %1356 = vst.msk [vmem:[#allocation3] sm:$0xff] %vm698, %v1351
        %1357 = vst.msk [vmem:[#allocation3 + $0x10] sm:$0x1] %vm700, %v1353
        %s1358 = scalar_lea.vmem %s304, 176
        %v1359 = vld [vmem:[%s1358] sm:$0xff]
        %v1360 = vld [vmem:[%s1358 + $0x8] sm:$0x1]
        %v1362 = vsel %vm316, %v1359, 0
        %v1365 = vsel %vm316, %v1360, 0
        %1367 = vmatprep.subr.mxu0 0.0
        %1368 = vmatpush1.msra.mxu0 %v305
        %1369 = vmatprep.subr.mxu0 0.0
        %1370 = vmatpush1.msra.mxu0 %v325
        %1371 = vmatprep.subr.mxu0 0.0
        %1372 = vmatpush1.msra.mxu0 0.0
        %1373 = vmatprep.subr.mxu0 0.0
        %1374 = vmatpush1.msra.mxu0 0.0
        %1375 = vmatprep.subr.mxu0 0.0
        %1376 = vmatpush1.msra.mxu0 0.0
        %1377 = vmatprep.subr.mxu0 0.0
        %1378 = vmatpush1.msra.mxu0 0.0
        %1379 = vmatprep.subr.mxu0 0.0
        %1380 = vmatpush1.msra.mxu0 0.0
        %1381 = vmatprep.subr.mxu0 0.0
        %1382 = vmatpush1.msra.mxu0 0.0
        %1383 = vmatprep.subr.mxu0 0.0
        %1384 = vmatpush1.msra.mxu0 0.0
        %1385 = vmatprep.subr.mxu0 0.0
        %1386 = vmatpush1.msra.mxu0 0.0
        %1387 = vmatprep.subr.mxu0 0.0
        %1388 = vmatpush1.msra.mxu0 0.0
        %1389 = vmatprep.subr.mxu0 0.0
        %1390 = vmatpush1.msra.mxu0 0.0
        %1391 = vmatprep.subr.mxu0 0.0
        %1392 = vmatpush1.msra.mxu0 0.0
        %1393 = vmatprep.subr.mxu0 0.0
        %1394 = vmatpush1.msra.mxu0 0.0
        %1395 = vmatprep.subr.mxu0 0.0
        %1396 = vmatpush1.msra.mxu0 0.0
        %1397 = vmatprep.subr.mxu0 0.0
        %1398 = vmatpush1.msra.mxu0 0.0
        %1399 = vmatprep.subr.mxu0 0.0
        %1400 = vmatpush1.msra.mxu0 0.0
        %1401 = vmatprep.subr.mxu0 0.0
        %1402 = vmatpush1.msra.mxu0 0.0
        %1403 = vmatprep.subr.mxu0 0.0
        %1404 = vmatpush1.msra.mxu0 0.0
        %1405 = vmatprep.subr.mxu0 0.0
        %1406 = vmatpush1.msra.mxu0 0.0
        %1407 = vmatprep.subr.mxu0 0.0
        %1408 = vmatpush1.msra.mxu0 0.0
        %1409 = vmatprep.subr.mxu0 0.0
        %1410 = vmatpush1.msra.mxu0 0.0
        %1411 = vmatprep.subr.mxu0 0.0
        %1412 = vmatpush1.msra.mxu0 0.0
        %1413 = vmatprep.subr.mxu0 0.0
        %1414 = vmatpush1.msra.mxu0 0.0
        %1415 = vmatprep.subr.mxu0 0.0
        %1416 = vmatpush1.msra.mxu0 0.0
        %1417 = vmatprep.subr.mxu0 0.0
        %1418 = vmatpush1.msra.mxu0 0.0
        %1419 = vmatprep.subr.mxu0 0.0
        %1420 = vmatpush1.msra.mxu0 0.0
        %1421 = vmatprep.subr.mxu0 0.0
        %1422 = vmatpush1.msra.mxu0 0.0
        %1423 = vmatprep.subr.mxu0 0.0
        %1424 = vmatpush1.msra.mxu0 0.0
        %1425 = vmatprep.subr.mxu0 0.0
        %1426 = vmatpush1.msra.mxu0 0.0
        %1427 = vmatprep.subr.mxu0 0.0
        %1428 = vmatpush1.msra.mxu0 0.0
        %1429 = vmatprep.subr.mxu0 0.0
        %1430 = vmatpush1.msra.mxu0 0.0
        %1431 = vmatprep.mubr.f32.mxu0 0.0
        %1432 = vmatmul.mubr.f32.gmra.mrb[0].mxu0 %v1362
        %v1433 = vpop.f32.mrb[0].mxu0
        %v1434 = vadd.f32 %v314, %v1433
        %v1435 = vpop.f32.mrb[0].mxu0
        %1436 = vmatprep.mubr.f32.mxu0 0.0
        %1437 = vmatmul.mubr.f32.gmra.mrb[0].mxu0 %v1365
        %v1438 = vpop.f32.mrb[0].mxu0
        %v1439 = vadd.f32 %v314, %v1438
        %v1440 = vpop.f32.mrb[0].mxu0
        %1441 = vdwg.mxu0
        %v1442 = vmax.f32 %v1434, 0.0
        %v1443 = vmax.f32 %v1439, 0.0
        %1444 = vst.msk [vmem:[#allocation3 + $0x8] sm:$0xff] %vm404, %v1442
        %1445 = vst.msk [vmem:[#allocation3 + $0x18] sm:$0x1] %vm406, %v1443
        %s1446 = scalar_lea.vmem %s304, 192
        %v1447 = vld [vmem:[%s1446] sm:$0xff]
        %v1448 = vld [vmem:[%s1446 + $0x8] sm:$0x1]
        %v1450 = vsel %vm316, %v1447, 0
        %v1453 = vsel %vm316, %v1448, 0
        %1455 = vmatprep.subr.mxu0 0.0
        %1456 = vmatpush1.msra.mxu0 %v305
        %1457 = vmatprep.subr.mxu0 0.0
        %1458 = vmatpush1.msra.mxu0 %v325
        %1459 = vmatprep.subr.mxu0 0.0
        %1460 = vmatpush1.msra.mxu0 0.0
        %1461 = vmatprep.subr.mxu0 0.0
        %1462 = vmatpush1.msra.mxu0 0.0
        %1463 = vmatprep.subr.mxu0 0.0
        %1464 = vmatpush1.msra.mxu0 0.0
        %1465 = vmatprep.subr.mxu0 0.0
        %1466 = vmatpush1.msra.mxu0 0.0
        %1467 = vmatprep.subr.mxu0 0.0
        %1468 = vmatpush1.msra.mxu0 0.0
        %1469 = vmatprep.subr.mxu0 0.0
        %1470 = vmatpush1.msra.mxu0 0.0
        %1471 = vmatprep.subr.mxu0 0.0
        %1472 = vmatpush1.msra.mxu0 0.0
        %1473 = vmatprep.subr.mxu0 0.0
        %1474 = vmatpush1.msra.mxu0 0.0
        %1475 = vmatprep.subr.mxu0 0.0
        %1476 = vmatpush1.msra.mxu0 0.0
        %1477 = vmatprep.subr.mxu0 0.0
        %1478 = vmatpush1.msra.mxu0 0.0
        %1479 = vmatprep.subr.mxu0 0.0
        %1480 = vmatpush1.msra.mxu0 0.0
        %1481 = vmatprep.subr.mxu0 0.0
        %1482 = vmatpush1.msra.mxu0 0.0
        %1483 = vmatprep.subr.mxu0 0.0
        %1484 = vmatpush1.msra.mxu0 0.0
        %1485 = vmatprep.subr.mxu0 0.0
        %1486 = vmatpush1.msra.mxu0 0.0
        %1487 = vmatprep.subr.mxu0 0.0
        %1488 = vmatpush1.msra.mxu0 0.0
        %1489 = vmatprep.subr.mxu0 0.0
        %1490 = vmatpush1.msra.mxu0 0.0
        %1491 = vmatprep.subr.mxu0 0.0
        %1492 = vmatpush1.msra.mxu0 0.0
        %1493 = vmatprep.subr.mxu0 0.0
        %1494 = vmatpush1.msra.mxu0 0.0
        %1495 = vmatprep.subr.mxu0 0.0
        %1496 = vmatpush1.msra.mxu0 0.0
        %1497 = vmatprep.subr.mxu0 0.0
        %1498 = vmatpush1.msra.mxu0 0.0
        %1499 = vmatprep.subr.mxu0 0.0
        %1500 = vmatpush1.msra.mxu0 0.0
        %1501 = vmatprep.subr.mxu0 0.0
        %1502 = vmatpush1.msra.mxu0 0.0
        %1503 = vmatprep.subr.mxu0 0.0
        %1504 = vmatpush1.msra.mxu0 0.0
        %1505 = vmatprep.subr.mxu0 0.0
        %1506 = vmatpush1.msra.mxu0 0.0
        %1507 = vmatprep.subr.mxu0 0.0
        %1508 = vmatpush1.msra.mxu0 0.0
        %1509 = vmatprep.subr.mxu0 0.0
        %1510 = vmatpush1.msra.mxu0 0.0
        %1511 = vmatprep.subr.mxu0 0.0
        %1512 = vmatpush1.msra.mxu0 0.0
        %1513 = vmatprep.subr.mxu0 0.0
        %1514 = vmatpush1.msra.mxu0 0.0
        %1515 = vmatprep.subr.mxu0 0.0
        %1516 = vmatpush1.msra.mxu0 0.0
        %1517 = vmatprep.subr.mxu0 0.0
        %1518 = vmatpush1.msra.mxu0 0.0
        %1519 = vmatprep.mubr.f32.mxu0 0.0
        %1520 = vmatmul.mubr.f32.gmra.mrb[0].mxu0 %v1450
        %v1521 = vpop.f32.mrb[0].mxu0
        %v1522 = vadd.f32 %v314, %v1521
        %v1523 = vpop.f32.mrb[0].mxu0
        %1524 = vmatprep.mubr.f32.mxu0 0.0
        %1525 = vmatmul.mubr.f32.gmra.mrb[0].mxu0 %v1453
        %v1526 = vpop.f32.mrb[0].mxu0
        %v1527 = vadd.f32 %v314, %v1526
        %v1528 = vpop.f32.mrb[0].mxu0
        %1529 = vdwg.mxu0
        %v1530 = vmax.f32 %v1522, 0.0
        %v1531 = vmax.f32 %v1527, 0.0
        %1534 = vrot.lane.b32.xlu0 %v1530, 32
        %v1535 = vpop.permute.xlu0 %1534
        %1536 = vrot.lane.b32.xlu0 %v1531, 32
        %v1537 = vpop.permute.xlu0 %1536
        %1540 = vst.msk [vmem:[#allocation3 + $0x8] sm:$0xff] %vm502, %v1535
        %1541 = vst.msk [vmem:[#allocation3 + $0x18] sm:$0x1] %vm504, %v1537
        %s1542 = scalar_lea.vmem %s304, 208
        %v1543 = vld [vmem:[%s1542] sm:$0xff]
        %v1544 = vld [vmem:[%s1542 + $0x8] sm:$0x1]
        %v1546 = vsel %vm316, %v1543, 0
        %v1549 = vsel %vm316, %v1544, 0
        %1551 = vmatprep.subr.mxu0 0.0
        %1552 = vmatpush1.msra.mxu0 %v305
        %1553 = vmatprep.subr.mxu0 0.0
        %1554 = vmatpush1.msra.mxu0 %v325
        %1555 = vmatprep.subr.mxu0 0.0
        %1556 = vmatpush1.msra.mxu0 0.0
        %1557 = vmatprep.subr.mxu0 0.0
        %1558 = vmatpush1.msra.mxu0 0.0
        %1559 = vmatprep.subr.mxu0 0.0
        %1560 = vmatpush1.msra.mxu0 0.0
        %1561 = vmatprep.subr.mxu0 0.0
        %1562 = vmatpush1.msra.mxu0 0.0
        %1563 = vmatprep.subr.mxu0 0.0
        %1564 = vmatpush1.msra.mxu0 0.0
        %1565 = vmatprep.subr.mxu0 0.0
        %1566 = vmatpush1.msra.mxu0 0.0
        %1567 = vmatprep.subr.mxu0 0.0
        %1568 = vmatpush1.msra.mxu0 0.0
        %1569 = vmatprep.subr.mxu0 0.0
        %1570 = vmatpush1.msra.mxu0 0.0
        %1571 = vmatprep.subr.mxu0 0.0
        %1572 = vmatpush1.msra.mxu0 0.0
        %1573 = vmatprep.subr.mxu0 0.0
        %1574 = vmatpush1.msra.mxu0 0.0
        %1575 = vmatprep.subr.mxu0 0.0
        %1576 = vmatpush1.msra.mxu0 0.0
        %1577 = vmatprep.subr.mxu0 0.0
        %1578 = vmatpush1.msra.mxu0 0.0
        %1579 = vmatprep.subr.mxu0 0.0
        %1580 = vmatpush1.msra.mxu0 0.0
        %1581 = vmatprep.subr.mxu0 0.0
        %1582 = vmatpush1.msra.mxu0 0.0
        %1583 = vmatprep.subr.mxu0 0.0
        %1584 = vmatpush1.msra.mxu0 0.0
        %1585 = vmatprep.subr.mxu0 0.0
        %1586 = vmatpush1.msra.mxu0 0.0
        %1587 = vmatprep.subr.mxu0 0.0
        %1588 = vmatpush1.msra.mxu0 0.0
        %1589 = vmatprep.subr.mxu0 0.0
        %1590 = vmatpush1.msra.mxu0 0.0
        %1591 = vmatprep.subr.mxu0 0.0
        %1592 = vmatpush1.msra.mxu0 0.0
        %1593 = vmatprep.subr.mxu0 0.0
        %1594 = vmatpush1.msra.mxu0 0.0
        %1595 = vmatprep.subr.mxu0 0.0
        %1596 = vmatpush1.msra.mxu0 0.0
        %1597 = vmatprep.subr.mxu0 0.0
        %1598 = vmatpush1.msra.mxu0 0.0
        %1599 = vmatprep.subr.mxu0 0.0
        %1600 = vmatpush1.msra.mxu0 0.0
        %1601 = vmatprep.subr.mxu0 0.0
        %1602 = vmatpush1.msra.mxu0 0.0
        %1603 = vmatprep.subr.mxu0 0.0
        %1604 = vmatpush1.msra.mxu0 0.0
        %1605 = vmatprep.subr.mxu0 0.0
        %1606 = vmatpush1.msra.mxu0 0.0
        %1607 = vmatprep.subr.mxu0 0.0
        %1608 = vmatpush1.msra.mxu0 0.0
        %1609 = vmatprep.subr.mxu0 0.0
        %1610 = vmatpush1.msra.mxu0 0.0
        %1611 = vmatprep.subr.mxu0 0.0
        %1612 = vmatpush1.msra.mxu0 0.0
        %1613 = vmatprep.subr.mxu0 0.0
        %1614 = vmatpush1.msra.mxu0 0.0
        %1615 = vmatprep.mubr.f32.mxu0 0.0
        %1616 = vmatmul.mubr.f32.gmra.mrb[0].mxu0 %v1546
        %v1617 = vpop.f32.mrb[0].mxu0
        %v1618 = vadd.f32 %v314, %v1617
        %v1619 = vpop.f32.mrb[0].mxu0
        %1620 = vmatprep.mubr.f32.mxu0 0.0
        %1621 = vmatmul.mubr.f32.gmra.mrb[0].mxu0 %v1549
        %v1622 = vpop.f32.mrb[0].mxu0
        %v1623 = vadd.f32 %v314, %v1622
        %v1624 = vpop.f32.mrb[0].mxu0
        %1625 = vdwg.mxu0
        %v1626 = vmax.f32 %v1618, 0.0
        %v1627 = vmax.f32 %v1623, 0.0
        %1630 = vrot.lane.b32.xlu0 %v1626, 64
        %v1631 = vpop.permute.xlu0 %1630
        %1632 = vrot.lane.b32.xlu0 %v1627, 64
        %v1633 = vpop.permute.xlu0 %1632
        %1636 = vst.msk [vmem:[#allocation3 + $0x8] sm:$0xff] %vm600, %v1631
        %1637 = vst.msk [vmem:[#allocation3 + $0x18] sm:$0x1] %vm602, %v1633
        %v1638 = vld [vmem:[#allocation2] sm:$0xfe]
        %v1639 = vld [vmem:[#allocation2 + $0x8] sm:$0xfe]
        %v1640 = vld [vmem:[#allocation2 + $0x10] sm:$0x1]
        %v1641 = vld [vmem:[#allocation2 + $0x18] sm:$0x1]
        %vm1646 = vcmask 1046528
        %v1647 = vrot.slane %v1638, 1
        %v1648 = vrot.slane %v1640, 1
        %v1649 = vsel %vm1646, %v1647, %v1648
        %v1650 = vrot.slane %v1639, 1
        %v1651 = vrot.slane %v1641, 1
        %v1652 = vsel %vm1646, %v1650, %v1651
        %1655 = vst [vmem:[#allocation4] sm:$0xff] %v1649
        %vm1656 = vcmask 785408
        %1657 = vst.msk [vmem:[#allocation4 + $0x8] sm:$0xff] %vm1656, %v1652
        %v1658 = vld [vmem:[%s4] sm:$0x1]
        %v1659 = vld [vmem:[#allocation2] sm:$0xff]
        %v1660 = vld [vmem:[%s3] sm:$0xff]
        %v1661 = vld [vmem:[%s3 + $0x8] sm:$0xff]
        %v1662 = vld [vmem:[%s3 + $0x10] sm:$0xff]
        %v1663 = vld [vmem:[%s3 + $0x18] sm:$0xff]
        %v1664 = vld [vmem:[%s3 + $0x20] sm:$0xff]
        %v1665 = vld [vmem:[%s3 + $0x28] sm:$0xff]
        %v1666 = vld [vmem:[%s3 + $0x30] sm:$0xff]
        %v1667 = vld [vmem:[%s3 + $0x38] sm:$0xff]
        %v1668 = vld [vmem:[%s3 + $0x40] sm:$0xff]
        %v1669 = vld [vmem:[%s3 + $0x48] sm:$0xff]
        %v1670 = vld [vmem:[%s3 + $0x50] sm:$0xff]
        %v1671 = vld [vmem:[%s3 + $0x58] sm:$0xff]
        %v1672 = vld [vmem:[#allocation3] sm:$0xff]
        %s1673 = scalar_lea.vmem %s3, 96
        %v1674 = vld [vmem:[%s1673] sm:$0xff]
        %v1675 = vld [vmem:[%s1673 + $0x8] sm:$0xff]
        %v1676 = vld [vmem:[%s1673 + $0x10] sm:$0xff]
        %v1677 = vld [vmem:[%s1673 + $0x18] sm:$0xff]
        %v1678 = vld [vmem:[%s1673 + $0x20] sm:$0xff]
        %v1679 = vld [vmem:[%s1673 + $0x28] sm:$0xff]
        %v1680 = vld [vmem:[%s1673 + $0x30] sm:$0xff]
        %v1681 = vld [vmem:[%s1673 + $0x38] sm:$0xff]
        %v1682 = vld [vmem:[%s1673 + $0x40] sm:$0xff]
        %v1683 = vld [vmem:[%s1673 + $0x48] sm:$0xff]
        %v1684 = vld [vmem:[%s1673 + $0x50] sm:$0xff]
        %v1685 = vld [vmem:[%s1673 + $0x58] sm:$0xff]
        %v1687 = vsel %vm1656, %v1672, 0
        %1689 = vmatprep.subr.mxu0 0.0
        %1690 = vmatpush1.msra.mxu0 %v1674
        %1691 = vmatprep.subr.mxu0 0.0
        %1692 = vmatpush1.msra.mxu0 %v1675
        %1693 = vmatprep.subr.mxu0 0.0
        %1694 = vmatpush1.msra.mxu0 %v1676
        %1695 = vmatprep.subr.mxu0 0.0
        %1696 = vmatpush1.msra.mxu0 %v1677
        %1697 = vmatprep.subr.mxu0 0.0
        %1698 = vmatpush1.msra.mxu0 %v1678
        %1699 = vmatprep.subr.mxu0 0.0
        %1700 = vmatpush1.msra.mxu0 %v1679
        %1701 = vmatprep.subr.mxu0 0.0
        %1702 = vmatpush1.msra.mxu0 %v1680
        %1703 = vmatprep.subr.mxu0 0.0
        %1704 = vmatpush1.msra.mxu0 %v1681
        %1705 = vmatprep.subr.mxu0 0.0
        %1706 = vmatpush1.msra.mxu0 %v1682
        %1707 = vmatprep.subr.mxu0 0.0
        %1708 = vmatpush1.msra.mxu0 %v1683
        %1709 = vmatprep.subr.mxu0 0.0
        %1710 = vmatpush1.msra.mxu0 %v1684
        %1711 = vmatprep.subr.mxu0 0.0
        %1712 = vmatpush1.msra.mxu0 %v1685
        %1713 = vmatprep.subr.mxu0 0.0
        %1714 = vmatpush1.msra.mxu0 0.0
        %1715 = vmatprep.subr.mxu0 0.0
        %1716 = vmatpush1.msra.mxu0 0.0
        %1717 = vmatprep.subr.mxu0 0.0
        %1718 = vmatpush1.msra.mxu0 0.0
        %1719 = vmatprep.subr.mxu0 0.0
        %1720 = vmatpush1.msra.mxu0 0.0
        %1721 = vmatprep.subr.mxu0 0.0
        %1722 = vmatpush1.msra.mxu0 0.0
        %1723 = vmatprep.subr.mxu0 0.0
        %1724 = vmatpush1.msra.mxu0 0.0
        %1725 = vmatprep.subr.mxu0 0.0
        %1726 = vmatpush1.msra.mxu0 0.0
        %1727 = vmatprep.subr.mxu0 0.0
        %1728 = vmatpush1.msra.mxu0 0.0
        %1729 = vmatprep.subr.mxu0 0.0
        %1730 = vmatpush1.msra.mxu0 0.0
        %1731 = vmatprep.subr.mxu0 0.0
        %1732 = vmatpush1.msra.mxu0 0.0
        %1733 = vmatprep.subr.mxu0 0.0
        %1734 = vmatpush1.msra.mxu0 0.0
        %1735 = vmatprep.subr.mxu0 0.0
        %1736 = vmatpush1.msra.mxu0 0.0
        %1737 = vmatprep.subr.mxu0 0.0
        %1738 = vmatpush1.msra.mxu0 0.0
        %1739 = vmatprep.subr.mxu0 0.0
        %1740 = vmatpush1.msra.mxu0 0.0
        %1741 = vmatprep.subr.mxu0 0.0
        %1742 = vmatpush1.msra.mxu0 0.0
        %1743 = vmatprep.subr.mxu0 0.0
        %1744 = vmatpush1.msra.mxu0 0.0
        %1745 = vmatprep.subr.mxu0 0.0
        %1746 = vmatpush1.msra.mxu0 0.0
        %1747 = vmatprep.subr.mxu0 0.0
        %1748 = vmatpush1.msra.mxu0 0.0
        %1749 = vmatprep.subr.mxu0 0.0
        %1750 = vmatpush1.msra.mxu0 0.0
        %1751 = vmatprep.subr.mxu0 0.0
        %1752 = vmatpush1.msra.mxu0 0.0
        %1753 = vmatprep.mubr.f32.mxu0 0.0
        %1754 = vmatmul.mubr.f32.gmra.mrb[0].mxu0 %v1687
        %v1755 = vpop.f32.mrb[0].mxu0
        %v1756 = vadd.f32 0.0, %v1755
        %v1757 = vpop.f32.mrb[0].mxu0
        %1758 = vdwg.mxu0
        %v1760 = vsel %vm1656, %v1659, 0
        %1762 = vmatprep.subr.mxu0 0.0
        %1763 = vmatpush1.msra.mxu0 %v1660
        %1764 = vmatprep.subr.mxu0 0.0
        %1765 = vmatpush1.msra.mxu0 %v1661
        %1766 = vmatprep.subr.mxu0 0.0
        %1767 = vmatpush1.msra.mxu0 %v1662
        %1768 = vmatprep.subr.mxu0 0.0
        %1769 = vmatpush1.msra.mxu0 %v1663
        %1770 = vmatprep.subr.mxu0 0.0
        %1771 = vmatpush1.msra.mxu0 %v1664
        %1772 = vmatprep.subr.mxu0 0.0
        %1773 = vmatpush1.msra.mxu0 %v1665
        %1774 = vmatprep.subr.mxu0 0.0
        %1775 = vmatpush1.msra.mxu0 %v1666
        %1776 = vmatprep.subr.mxu0 0.0
        %1777 = vmatpush1.msra.mxu0 %v1667
        %1778 = vmatprep.subr.mxu0 0.0
        %1779 = vmatpush1.msra.mxu0 %v1668
        %1780 = vmatprep.subr.mxu0 0.0
        %1781 = vmatpush1.msra.mxu0 %v1669
        %1782 = vmatprep.subr.mxu0 0.0
        %1783 = vmatpush1.msra.mxu0 %v1670
        %1784 = vmatprep.subr.mxu0 0.0
        %1785 = vmatpush1.msra.mxu0 %v1671
        %1786 = vmatprep.subr.mxu0 0.0
        %1787 = vmatpush1.msra.mxu0 0.0
        %1788 = vmatprep.subr.mxu0 0.0
        %1789 = vmatpush1.msra.mxu0 0.0
        %1790 = vmatprep.subr.mxu0 0.0
        %1791 = vmatpush1.msra.mxu0 0.0
        %1792 = vmatprep.subr.mxu0 0.0
        %1793 = vmatpush1.msra.mxu0 0.0
        %1794 = vmatprep.subr.mxu0 0.0
        %1795 = vmatpush1.msra.mxu0 0.0
        %1796 = vmatprep.subr.mxu0 0.0
        %1797 = vmatpush1.msra.mxu0 0.0
        %1798 = vmatprep.subr.mxu0 0.0
        %1799 = vmatpush1.msra.mxu0 0.0
        %1800 = vmatprep.subr.mxu0 0.0
        %1801 = vmatpush1.msra.mxu0 0.0
        %1802 = vmatprep.subr.mxu0 0.0
        %1803 = vmatpush1.msra.mxu0 0.0
        %1804 = vmatprep.subr.mxu0 0.0
        %1805 = vmatpush1.msra.mxu0 0.0
        %1806 = vmatprep.subr.mxu0 0.0
        %1807 = vmatpush1.msra.mxu0 0.0
        %1808 = vmatprep.subr.mxu0 0.0
        %1809 = vmatpush1.msra.mxu0 0.0
        %1810 = vmatprep.subr.mxu0 0.0
        %1811 = vmatpush1.msra.mxu0 0.0
        %1812 = vmatprep.subr.mxu0 0.0
        %1813 = vmatpush1.msra.mxu0 0.0
        %1814 = vmatprep.subr.mxu0 0.0
        %1815 = vmatpush1.msra.mxu0 0.0
        %1816 = vmatprep.subr.mxu0 0.0
        %1817 = vmatpush1.msra.mxu0 0.0
        %1818 = vmatprep.subr.mxu0 0.0
        %1819 = vmatpush1.msra.mxu0 0.0
        %1820 = vmatprep.subr.mxu0 0.0
        %1821 = vmatpush1.msra.mxu0 0.0
        %1822 = vmatprep.subr.mxu0 0.0
        %1823 = vmatpush1.msra.mxu0 0.0
        %1824 = vmatprep.subr.mxu0 0.0
        %1825 = vmatpush1.msra.mxu0 0.0
        %1826 = vmatprep.mubr.f32.mxu0 0.0
        %1827 = vmatmul.mubr.f32.gmra.mrb[0].mxu0 %v1760
        %v1828 = vpop.f32.mrb[0].mxu0
        %v1829 = vadd.f32 %v1756, %v1828
        %v1830 = vpop.f32.mrb[0].mxu0
        %1831 = vdwg.mxu0
        %v1832 = vld [vmem:[#allocation4] sm:$0xff]
        %s1833 = scalar_lea.vmem %s3, 192
        %v1834 = vld [vmem:[%s1833] sm:$0xff]
        %v1835 = vld [vmem:[%s1833 + $0x8] sm:$0xff]
        %v1836 = vld [vmem:[%s1833 + $0x10] sm:$0xff]
        %v1837 = vld [vmem:[%s1833 + $0x18] sm:$0xff]
        %v1838 = vld [vmem:[%s1833 + $0x20] sm:$0xff]
        %v1839 = vld [vmem:[%s1833 + $0x28] sm:$0xff]
        %v1840 = vld [vmem:[%s1833 + $0x30] sm:$0xff]
        %v1841 = vld [vmem:[%s1833 + $0x38] sm:$0xff]
        %v1842 = vld [vmem:[%s1833 + $0x40] sm:$0xff]
        %v1843 = vld [vmem:[%s1833 + $0x48] sm:$0xff]
        %v1844 = vld [vmem:[%s1833 + $0x50] sm:$0xff]
        %v1845 = vld [vmem:[%s1833 + $0x58] sm:$0xff]
        %v1847 = vsel %vm1656, %v1832, 0
        %1849 = vmatprep.subr.mxu0 0.0
        %1850 = vmatpush1.msra.mxu0 %v1834
        %1851 = vmatprep.subr.mxu0 0.0
        %1852 = vmatpush1.msra.mxu0 %v1835
        %1853 = vmatprep.subr.mxu0 0.0
        %1854 = vmatpush1.msra.mxu0 %v1836
        %1855 = vmatprep.subr.mxu0 0.0
        %1856 = vmatpush1.msra.mxu0 %v1837
        %1857 = vmatprep.subr.mxu0 0.0
        %1858 = vmatpush1.msra.mxu0 %v1838
        %1859 = vmatprep.subr.mxu0 0.0
        %1860 = vmatpush1.msra.mxu0 %v1839
        %1861 = vmatprep.subr.mxu0 0.0
        %1862 = vmatpush1.msra.mxu0 %v1840
        %1863 = vmatprep.subr.mxu0 0.0
        %1864 = vmatpush1.msra.mxu0 %v1841
        %1865 = vmatprep.subr.mxu0 0.0
        %1866 = vmatpush1.msra.mxu0 %v1842
        %1867 = vmatprep.subr.mxu0 0.0
        %1868 = vmatpush1.msra.mxu0 %v1843
        %1869 = vmatprep.subr.mxu0 0.0
        %1870 = vmatpush1.msra.mxu0 %v1844
        %1871 = vmatprep.subr.mxu0 0.0
        %1872 = vmatpush1.msra.mxu0 %v1845
        %1873 = vmatprep.subr.mxu0 0.0
        %1874 = vmatpush1.msra.mxu0 0.0
        %1875 = vmatprep.subr.mxu0 0.0
        %1876 = vmatpush1.msra.mxu0 0.0
        %1877 = vmatprep.subr.mxu0 0.0
        %1878 = vmatpush1.msra.mxu0 0.0
        %1879 = vmatprep.subr.mxu0 0.0
        %1880 = vmatpush1.msra.mxu0 0.0
        %1881 = vmatprep.subr.mxu0 0.0
        %1882 = vmatpush1.msra.mxu0 0.0
        %1883 = vmatprep.subr.mxu0 0.0
        %1884 = vmatpush1.msra.mxu0 0.0
        %1885 = vmatprep.subr.mxu0 0.0
        %1886 = vmatpush1.msra.mxu0 0.0
        %1887 = vmatprep.subr.mxu0 0.0
        %1888 = vmatpush1.msra.mxu0 0.0
        %1889 = vmatprep.subr.mxu0 0.0
        %1890 = vmatpush1.msra.mxu0 0.0
        %1891 = vmatprep.subr.mxu0 0.0
        %1892 = vmatpush1.msra.mxu0 0.0
        %1893 = vmatprep.subr.mxu0 0.0
        %1894 = vmatpush1.msra.mxu0 0.0
        %1895 = vmatprep.subr.mxu0 0.0
        %1896 = vmatpush1.msra.mxu0 0.0
        %1897 = vmatprep.subr.mxu0 0.0
        %1898 = vmatpush1.msra.mxu0 0.0
        %1899 = vmatprep.subr.mxu0 0.0
        %1900 = vmatpush1.msra.mxu0 0.0
        %1901 = vmatprep.subr.mxu0 0.0
        %1902 = vmatpush1.msra.mxu0 0.0
        %1903 = vmatprep.subr.mxu0 0.0
        %1904 = vmatpush1.msra.mxu0 0.0
        %1905 = vmatprep.subr.mxu0 0.0
        %1906 = vmatpush1.msra.mxu0 0.0
        %1907 = vmatprep.subr.mxu0 0.0
        %1908 = vmatpush1.msra.mxu0 0.0
        %1909 = vmatprep.subr.mxu0 0.0
        %1910 = vmatpush1.msra.mxu0 0.0
        %1911 = vmatprep.subr.mxu0 0.0
        %1912 = vmatpush1.msra.mxu0 0.0
        %1913 = vmatprep.mubr.f32.mxu0 0.0
        %1914 = vmatmul.mubr.f32.gmra.mrb[0].mxu0 %v1847
        %v1915 = vpop.f32.mrb[0].mxu0
        %v1916 = vadd.f32 0.0, %v1915
        %v1917 = vpop.f32.mrb[0].mxu0
        %1918 = vdwg.mxu0
        %v1919 = vadd.f32 %v1829, %v1916
        %v1921 = vlaneseq
        %v1922 = vshrl.u32 %v1921, 7
        %v1923 = vsub.s32 0, %v1922
        %v1924 = vrot.slane %v1658, %v1923
        %v1926 = vadd.f32 %v1919, %v1924
        %v1927 = vmax.f32 %v1926, 0.0
        %1928 = vst.msk [vmem:[#allocation5] sm:$0xff] %vm404, %v1927
        %v1929 = vld [vmem:[#allocation2] sm:$0xff]
        %v1930 = vld [vmem:[#allocation2 + $0x8] sm:$0xff]
        %v1931 = vld [vmem:[%s3] sm:$0xff]
        %v1932 = vld [vmem:[%s3 + $0x8] sm:$0xff]
        %v1933 = vld [vmem:[%s3 + $0x10] sm:$0xff]
        %v1934 = vld [vmem:[%s3 + $0x18] sm:$0xff]
        %v1935 = vld [vmem:[%s3 + $0x20] sm:$0xff]
        %v1936 = vld [vmem:[%s3 + $0x28] sm:$0xff]
        %v1937 = vld [vmem:[%s3 + $0x30] sm:$0xff]
        %v1938 = vld [vmem:[%s3 + $0x38] sm:$0xff]
        %v1939 = vld [vmem:[%s3 + $0x40] sm:$0xff]
        %v1940 = vld [vmem:[%s3 + $0x48] sm:$0xff]
        %v1941 = vld [vmem:[%s3 + $0x50] sm:$0xff]
        %v1942 = vld [vmem:[%s3 + $0x58] sm:$0xff]
        %v1943 = vld [vmem:[#allocation3] sm:$0xff]
        %v1944 = vld [vmem:[#allocation3 + $0x8] sm:$0xff]
        %v1945 = vld [vmem:[%s1673] sm:$0xff]
        %v1946 = vld [vmem:[%s1673 + $0x8] sm:$0xff]
        %v1947 = vld [vmem:[%s1673 + $0x10] sm:$0xff]
        %v1948 = vld [vmem:[%s1673 + $0x18] sm:$0xff]
        %v1949 = vld [vmem:[%s1673 + $0x20] sm:$0xff]
        %v1950 = vld [vmem:[%s1673 + $0x28] sm:$0xff]
        %v1951 = vld [vmem:[%s1673 + $0x30] sm:$0xff]
        %v1952 = vld [vmem:[%s1673 + $0x38] sm:$0xff]
        %v1953 = vld [vmem:[%s1673 + $0x40] sm:$0xff]
        %v1954 = vld [vmem:[%s1673 + $0x48] sm:$0xff]
        %v1955 = vld [vmem:[%s1673 + $0x50] sm:$0xff]
        %v1956 = vld [vmem:[%s1673 + $0x58] sm:$0xff]
        %1959 = vrot.lane.b32.xlu0 %v1943, 64
        %v1960 = vpop.permute.xlu0 %1959
        %1961 = vrot.lane.b32.xlu0 %v1944, 64
        %v1962 = vpop.permute.xlu0 %1961
        %vm1963 = vcmask 523264
        %v1964 = vsel %vm1963, %v1960, %v1962
        %v1965 = vsel %vm1656, %v1964, 0
        %1967 = vmatprep.subr.mxu0 0.0
        %1968 = vmatpush1.msra.mxu0 %v1945
        %1969 = vmatprep.subr.mxu0 0.0
        %1970 = vmatpush1.msra.mxu0 %v1946
        %1971 = vmatprep.subr.mxu0 0.0
        %1972 = vmatpush1.msra.mxu0 %v1947
        %1973 = vmatprep.subr.mxu0 0.0
        %1974 = vmatpush1.msra.mxu0 %v1948
        %1975 = vmatprep.subr.mxu0 0.0
        %1976 = vmatpush1.msra.mxu0 %v1949
        %1977 = vmatprep.subr.mxu0 0.0
        %1978 = vmatpush1.msra.mxu0 %v1950
        %1979 = vmatprep.subr.mxu0 0.0
        %1980 = vmatpush1.msra.mxu0 %v1951
        %1981 = vmatprep.subr.mxu0 0.0
        %1982 = vmatpush1.msra.mxu0 %v1952
        %1983 = vmatprep.subr.mxu0 0.0
        %1984 = vmatpush1.msra.mxu0 %v1953
        %1985 = vmatprep.subr.mxu0 0.0
        %1986 = vmatpush1.msra.mxu0 %v1954
        %1987 = vmatprep.subr.mxu0 0.0
        %1988 = vmatpush1.msra.mxu0 %v1955
        %1989 = vmatprep.subr.mxu0 0.0
        %1990 = vmatpush1.msra.mxu0 %v1956
        %1991 = vmatprep.subr.mxu0 0.0
        %1992 = vmatpush1.msra.mxu0 0.0
        %1993 = vmatprep.subr.mxu0 0.0
        %1994 = vmatpush1.msra.mxu0 0.0
        %1995 = vmatprep.subr.mxu0 0.0
        %1996 = vmatpush1.msra.mxu0 0.0
        %1997 = vmatprep.subr.mxu0 0.0
        %1998 = vmatpush1.msra.mxu0 0.0
        %1999 = vmatprep.subr.mxu0 0.0
        %2000 = vmatpush1.msra.mxu0 0.0
        %2001 = vmatprep.subr.mxu0 0.0
        %2002 = vmatpush1.msra.mxu0 0.0
        %2003 = vmatprep.subr.mxu0 0.0
        %2004 = vmatpush1.msra.mxu0 0.0
        %2005 = vmatprep.subr.mxu0 0.0
        %2006 = vmatpush1.msra.mxu0 0.0
        %2007 = vmatprep.subr.mxu0 0.0
        %2008 = vmatpush1.msra.mxu0 0.0
        %2009 = vmatprep.subr.mxu0 0.0
        %2010 = vmatpush1.msra.mxu0 0.0
        %2011 = vmatprep.subr.mxu0 0.0
        %2012 = vmatpush1.msra.mxu0 0.0
        %2013 = vmatprep.subr.mxu0 0.0
        %2014 = vmatpush1.msra.mxu0 0.0
        %2015 = vmatprep.subr.mxu0 0.0
        %2016 = vmatpush1.msra.mxu0 0.0
        %2017 = vmatprep.subr.mxu0 0.0
        %2018 = vmatpush1.msra.mxu0 0.0
        %2019 = vmatprep.subr.mxu0 0.0
        %2020 = vmatpush1.msra.mxu0 0.0
        %2021 = vmatprep.subr.mxu0 0.0
        %2022 = vmatpush1.msra.mxu0 0.0
        %2023 = vmatprep.subr.mxu0 0.0
        %2024 = vmatpush1.msra.mxu0 0.0
        %2025 = vmatprep.subr.mxu0 0.0
        %2026 = vmatpush1.msra.mxu0 0.0
        %2027 = vmatprep.subr.mxu0 0.0
        %2028 = vmatpush1.msra.mxu0 0.0
        %2029 = vmatprep.subr.mxu0 0.0
        %2030 = vmatpush1.msra.mxu0 0.0
        %2031 = vmatprep.mubr.f32.mxu0 0.0
        %2032 = vmatmul.mubr.f32.gmra.mrb[0].mxu0 %v1965
        %v2033 = vpop.f32.mrb[0].mxu0
        %v2034 = vadd.f32 0.0, %v2033
        %v2035 = vpop.f32.mrb[0].mxu0
        %2036 = vdwg.mxu0
        %2039 = vrot.lane.b32.xlu0 %v1929, 64
        %v2040 = vpop.permute.xlu0 %2039
        %2041 = vrot.lane.b32.xlu0 %v1930, 64
        %v2042 = vpop.permute.xlu0 %2041
        %v2043 = vsel %vm1963, %v2040, %v2042
        %v2044 = vsel %vm1656, %v2043, 0
        %2046 = vmatprep.subr.mxu0 0.0
        %2047 = vmatpush1.msra.mxu0 %v1931
        %2048 = vmatprep.subr.mxu0 0.0
        %2049 = vmatpush1.msra.mxu0 %v1932
        %2050 = vmatprep.subr.mxu0 0.0
        %2051 = vmatpush1.msra.mxu0 %v1933
        %2052 = vmatprep.subr.mxu0 0.0
        %2053 = vmatpush1.msra.mxu0 %v1934
        %2054 = vmatprep.subr.mxu0 0.0
        %2055 = vmatpush1.msra.mxu0 %v1935
        %2056 = vmatprep.subr.mxu0 0.0
        %2057 = vmatpush1.msra.mxu0 %v1936
        %2058 = vmatprep.subr.mxu0 0.0
        %2059 = vmatpush1.msra.mxu0 %v1937
        %2060 = vmatprep.subr.mxu0 0.0
        %2061 = vmatpush1.msra.mxu0 %v1938
        %2062 = vmatprep.subr.mxu0 0.0
        %2063 = vmatpush1.msra.mxu0 %v1939
        %2064 = vmatprep.subr.mxu0 0.0
        %2065 = vmatpush1.msra.mxu0 %v1940
        %2066 = vmatprep.subr.mxu0 0.0
        %2067 = vmatpush1.msra.mxu0 %v1941
        %2068 = vmatprep.subr.mxu0 0.0
        %2069 = vmatpush1.msra.mxu0 %v1942
        %2070 = vmatprep.subr.mxu0 0.0
        %2071 = vmatpush1.msra.mxu0 0.0
        %2072 = vmatprep.subr.mxu0 0.0
        %2073 = vmatpush1.msra.mxu0 0.0
        %2074 = vmatprep.subr.mxu0 0.0
        %2075 = vmatpush1.msra.mxu0 0.0
        %2076 = vmatprep.subr.mxu0 0.0
        %2077 = vmatpush1.msra.mxu0 0.0
        %2078 = vmatprep.subr.mxu0 0.0
        %2079 = vmatpush1.msra.mxu0 0.0
        %2080 = vmatprep.subr.mxu0 0.0
        %2081 = vmatpush1.msra.mxu0 0.0
        %2082 = vmatprep.subr.mxu0 0.0
        %2083 = vmatpush1.msra.mxu0 0.0
        %2084 = vmatprep.subr.mxu0 0.0
        %2085 = vmatpush1.msra.mxu0 0.0
        %2086 = vmatprep.subr.mxu0 0.0
        %2087 = vmatpush1.msra.mxu0 0.0
        %2088 = vmatprep.subr.mxu0 0.0
        %2089 = vmatpush1.msra.mxu0 0.0
        %2090 = vmatprep.subr.mxu0 0.0
        %2091 = vmatpush1.msra.mxu0 0.0
        %2092 = vmatprep.subr.mxu0 0.0
        %2093 = vmatpush1.msra.mxu0 0.0
        %2094 = vmatprep.subr.mxu0 0.0
        %2095 = vmatpush1.msra.mxu0 0.0
        %2096 = vmatprep.subr.mxu0 0.0
        %2097 = vmatpush1.msra.mxu0 0.0
        %2098 = vmatprep.subr.mxu0 0.0
        %2099 = vmatpush1.msra.mxu0 0.0
        %2100 = vmatprep.subr.mxu0 0.0
        %2101 = vmatpush1.msra.mxu0 0.0
        %2102 = vmatprep.subr.mxu0 0.0
        %2103 = vmatpush1.msra.mxu0 0.0
        %2104 = vmatprep.subr.mxu0 0.0
        %2105 = vmatpush1.msra.mxu0 0.0
        %2106 = vmatprep.subr.mxu0 0.0
        %2107 = vmatpush1.msra.mxu0 0.0
        %2108 = vmatprep.subr.mxu0 0.0
        %2109 = vmatpush1.msra.mxu0 0.0
        %2110 = vmatprep.mubr.f32.mxu0 0.0
        %2111 = vmatmul.mubr.f32.gmra.mrb[0].mxu0 %v2044
        %v2112 = vpop.f32.mrb[0].mxu0
        %v2113 = vadd.f32 %v2034, %v2112
        %v2114 = vpop.f32.mrb[0].mxu0
        %2115 = vdwg.mxu0
        %v2116 = vld [vmem:[#allocation4] sm:$0xff]
        %v2117 = vld [vmem:[#allocation4 + $0x8] sm:$0xff]
        %v2118 = vld [vmem:[%s1833] sm:$0xff]
        %v2119 = vld [vmem:[%s1833 + $0x8] sm:$0xff]
        %v2120 = vld [vmem:[%s1833 + $0x10] sm:$0xff]
        %v2121 = vld [vmem:[%s1833 + $0x18] sm:$0xff]
        %v2122 = vld [vmem:[%s1833 + $0x20] sm:$0xff]
        %v2123 = vld [vmem:[%s1833 + $0x28] sm:$0xff]
        %v2124 = vld [vmem:[%s1833 + $0x30] sm:$0xff]
        %v2125 = vld [vmem:[%s1833 + $0x38] sm:$0xff]
        %v2126 = vld [vmem:[%s1833 + $0x40] sm:$0xff]
        %v2127 = vld [vmem:[%s1833 + $0x48] sm:$0xff]
        %v2128 = vld [vmem:[%s1833 + $0x50] sm:$0xff]
        %v2129 = vld [vmem:[%s1833 + $0x58] sm:$0xff]
        %2132 = vrot.lane.b32.xlu0 %v2116, 64
        %v2133 = vpop.permute.xlu0 %2132
        %2134 = vrot.lane.b32.xlu0 %v2117, 64
        %v2135 = vpop.permute.xlu0 %2134
        %v2136 = vsel %vm1963, %v2133, %v2135
        %v2137 = vsel %vm1656, %v2136, 0
        %2139 = vmatprep.subr.mxu0 0.0
        %2140 = vmatpush1.msra.mxu0 %v2118
        %2141 = vmatprep.subr.mxu0 0.0
        %2142 = vmatpush1.msra.mxu0 %v2119
        %2143 = vmatprep.subr.mxu0 0.0
        %2144 = vmatpush1.msra.mxu0 %v2120
        %2145 = vmatprep.subr.mxu0 0.0
        %2146 = vmatpush1.msra.mxu0 %v2121
        %2147 = vmatprep.subr.mxu0 0.0
        %2148 = vmatpush1.msra.mxu0 %v2122
        %2149 = vmatprep.subr.mxu0 0.0
        %2150 = vmatpush1.msra.mxu0 %v2123
        %2151 = vmatprep.subr.mxu0 0.0
        %2152 = vmatpush1.msra.mxu0 %v2124
        %2153 = vmatprep.subr.mxu0 0.0
        %2154 = vmatpush1.msra.mxu0 %v2125
        %2155 = vmatprep.subr.mxu0 0.0
        %2156 = vmatpush1.msra.mxu0 %v2126
        %2157 = vmatprep.subr.mxu0 0.0
        %2158 = vmatpush1.msra.mxu0 %v2127
        %2159 = vmatprep.subr.mxu0 0.0
        %2160 = vmatpush1.msra.mxu0 %v2128
        %2161 = vmatprep.subr.mxu0 0.0
        %2162 = vmatpush1.msra.mxu0 %v2129
        %2163 = vmatprep.subr.mxu0 0.0
        %2164 = vmatpush1.msra.mxu0 0.0
        %2165 = vmatprep.subr.mxu0 0.0
        %2166 = vmatpush1.msra.mxu0 0.0
        %2167 = vmatprep.subr.mxu0 0.0
        %2168 = vmatpush1.msra.mxu0 0.0
        %2169 = vmatprep.subr.mxu0 0.0
        %2170 = vmatpush1.msra.mxu0 0.0
        %2171 = vmatprep.subr.mxu0 0.0
        %2172 = vmatpush1.msra.mxu0 0.0
        %2173 = vmatprep.subr.mxu0 0.0
        %2174 = vmatpush1.msra.mxu0 0.0
        %2175 = vmatprep.subr.mxu0 0.0
        %2176 = vmatpush1.msra.mxu0 0.0
        %2177 = vmatprep.subr.mxu0 0.0
        %2178 = vmatpush1.msra.mxu0 0.0
        %2179 = vmatprep.subr.mxu0 0.0
        %2180 = vmatpush1.msra.mxu0 0.0
        %2181 = vmatprep.subr.mxu0 0.0
        %2182 = vmatpush1.msra.mxu0 0.0
        %2183 = vmatprep.subr.mxu0 0.0
        %2184 = vmatpush1.msra.mxu0 0.0
        %2185 = vmatprep.subr.mxu0 0.0
        %2186 = vmatpush1.msra.mxu0 0.0
        %2187 = vmatprep.subr.mxu0 0.0
        %2188 = vmatpush1.msra.mxu0 0.0
        %2189 = vmatprep.subr.mxu0 0.0
        %2190 = vmatpush1.msra.mxu0 0.0
        %2191 = vmatprep.subr.mxu0 0.0
        %2192 = vmatpush1.msra.mxu0 0.0
        %2193 = vmatprep.subr.mxu0 0.0
        %2194 = vmatpush1.msra.mxu0 0.0
        %2195 = vmatprep.subr.mxu0 0.0
        %2196 = vmatpush1.msra.mxu0 0.0
        %2197 = vmatprep.subr.mxu0 0.0
        %2198 = vmatpush1.msra.mxu0 0.0
        %2199 = vmatprep.subr.mxu0 0.0
        %2200 = vmatpush1.msra.mxu0 0.0
        %2201 = vmatprep.subr.mxu0 0.0
        %2202 = vmatpush1.msra.mxu0 0.0
        %2203 = vmatprep.mubr.f32.mxu0 0.0
        %2204 = vmatmul.mubr.f32.gmra.mrb[0].mxu0 %v2137
        %v2205 = vpop.f32.mrb[0].mxu0
        %v2206 = vadd.f32 0.0, %v2205
        %v2207 = vpop.f32.mrb[0].mxu0
        %2208 = vdwg.mxu0
        %v2209 = vadd.f32 %v2113, %v2206
        %v2210 = vadd.f32 %v2209, %v1924
        %v2211 = vmax.f32 %v2210, 0.0
        %2213 = vrot.lane.b32.xlu0 %v2211, 32
        %v2214 = vpop.permute.xlu0 %2213
        %2216 = vst.msk [vmem:[#allocation5] sm:$0xff] %vm502, %v2214
        %v2217 = vld [vmem:[#allocation2 + $0x8] sm:$0xff]
        %v2218 = vld [vmem:[%s3] sm:$0xff]
        %v2219 = vld [vmem:[%s3 + $0x8] sm:$0xff]
        %v2220 = vld [vmem:[%s3 + $0x10] sm:$0xff]
        %v2221 = vld [vmem:[%s3 + $0x18] sm:$0xff]
        %v2222 = vld [vmem:[%s3 + $0x20] sm:$0xff]
        %v2223 = vld [vmem:[%s3 + $0x28] sm:$0xff]
        %v2224 = vld [vmem:[%s3 + $0x30] sm:$0xff]
        %v2225 = vld [vmem:[%s3 + $0x38] sm:$0xff]
        %v2226 = vld [vmem:[%s3 + $0x40] sm:$0xff]
        %v2227 = vld [vmem:[%s3 + $0x48] sm:$0xff]
        %v2228 = vld [vmem:[%s3 + $0x50] sm:$0xff]
        %v2229 = vld [vmem:[%s3 + $0x58] sm:$0xff]
        %v2230 = vld [vmem:[#allocation3 + $0x8] sm:$0xff]
        %v2231 = vld [vmem:[%s1673] sm:$0xff]
        %v2232 = vld [vmem:[%s1673 + $0x8] sm:$0xff]
        %v2233 = vld [vmem:[%s1673 + $0x10] sm:$0xff]
        %v2234 = vld [vmem:[%s1673 + $0x18] sm:$0xff]
        %v2235 = vld [vmem:[%s1673 + $0x20] sm:$0xff]
        %v2236 = vld [vmem:[%s1673 + $0x28] sm:$0xff]
        %v2237 = vld [vmem:[%s1673 + $0x30] sm:$0xff]
        %v2238 = vld [vmem:[%s1673 + $0x38] sm:$0xff]
        %v2239 = vld [vmem:[%s1673 + $0x40] sm:$0xff]
        %v2240 = vld [vmem:[%s1673 + $0x48] sm:$0xff]
        %v2241 = vld [vmem:[%s1673 + $0x50] sm:$0xff]
        %v2242 = vld [vmem:[%s1673 + $0x58] sm:$0xff]
        %v2244 = vsel %vm1656, %v2230, 0
        %2246 = vmatprep.subr.mxu0 0.0
        %2247 = vmatpush1.msra.mxu0 %v2231
        %2248 = vmatprep.subr.mxu0 0.0
        %2249 = vmatpush1.msra.mxu0 %v2232
        %2250 = vmatprep.subr.mxu0 0.0
        %2251 = vmatpush1.msra.mxu0 %v2233
        %2252 = vmatprep.subr.mxu0 0.0
        %2253 = vmatpush1.msra.mxu0 %v2234
        %2254 = vmatprep.subr.mxu0 0.0
        %2255 = vmatpush1.msra.mxu0 %v2235
        %2256 = vmatprep.subr.mxu0 0.0
        %2257 = vmatpush1.msra.mxu0 %v2236
        %2258 = vmatprep.subr.mxu0 0.0
        %2259 = vmatpush1.msra.mxu0 %v2237
        %2260 = vmatprep.subr.mxu0 0.0
        %2261 = vmatpush1.msra.mxu0 %v2238
        %2262 = vmatprep.subr.mxu0 0.0
        %2263 = vmatpush1.msra.mxu0 %v2239
        %2264 = vmatprep.subr.mxu0 0.0
        %2265 = vmatpush1.msra.mxu0 %v2240
        %2266 = vmatprep.subr.mxu0 0.0
        %2267 = vmatpush1.msra.mxu0 %v2241
        %2268 = vmatprep.subr.mxu0 0.0
        %2269 = vmatpush1.msra.mxu0 %v2242
        %2270 = vmatprep.subr.mxu0 0.0
        %2271 = vmatpush1.msra.mxu0 0.0
        %2272 = vmatprep.subr.mxu0 0.0
        %2273 = vmatpush1.msra.mxu0 0.0
        %2274 = vmatprep.subr.mxu0 0.0
        %2275 = vmatpush1.msra.mxu0 0.0
        %2276 = vmatprep.subr.mxu0 0.0
        %2277 = vmatpush1.msra.mxu0 0.0
        %2278 = vmatprep.subr.mxu0 0.0
        %2279 = vmatpush1.msra.mxu0 0.0
        %2280 = vmatprep.subr.mxu0 0.0
        %2281 = vmatpush1.msra.mxu0 0.0
        %2282 = vmatprep.subr.mxu0 0.0
        %2283 = vmatpush1.msra.mxu0 0.0
        %2284 = vmatprep.subr.mxu0 0.0
        %2285 = vmatpush1.msra.mxu0 0.0
        %2286 = vmatprep.subr.mxu0 0.0
        %2287 = vmatpush1.msra.mxu0 0.0
        %2288 = vmatprep.subr.mxu0 0.0
        %2289 = vmatpush1.msra.mxu0 0.0
        %2290 = vmatprep.subr.mxu0 0.0
        %2291 = vmatpush1.msra.mxu0 0.0
        %2292 = vmatprep.subr.mxu0 0.0
        %2293 = vmatpush1.msra.mxu0 0.0
        %2294 = vmatprep.subr.mxu0 0.0
        %2295 = vmatpush1.msra.mxu0 0.0
        %2296 = vmatprep.subr.mxu0 0.0
        %2297 = vmatpush1.msra.mxu0 0.0
        %2298 = vmatprep.subr.mxu0 0.0
        %2299 = vmatpush1.msra.mxu0 0.0
        %2300 = vmatprep.subr.mxu0 0.0
        %2301 = vmatpush1.msra.mxu0 0.0
        %2302 = vmatprep.subr.mxu0 0.0
        %2303 = vmatpush1.msra.mxu0 0.0
        %2304 = vmatprep.subr.mxu0 0.0
        %2305 = vmatpush1.msra.mxu0 0.0
        %2306 = vmatprep.subr.mxu0 0.0
        %2307 = vmatpush1.msra.mxu0 0.0
        %2308 = vmatprep.subr.mxu0 0.0
        %2309 = vmatpush1.msra.mxu0 0.0
        %2310 = vmatprep.mubr.f32.mxu0 0.0
        %2311 = vmatmul.mubr.f32.gmra.mrb[0].mxu0 %v2244
        %v2312 = vpop.f32.mrb[0].mxu0
        %v2313 = vadd.f32 0.0, %v2312
        %v2314 = vpop.f32.mrb[0].mxu0
        %2315 = vdwg.mxu0
        %v2317 = vsel %vm1656, %v2217, 0
        %2319 = vmatprep.subr.mxu0 0.0
        %2320 = vmatpush1.msra.mxu0 %v2218
        %2321 = vmatprep.subr.mxu0 0.0
        %2322 = vmatpush1.msra.mxu0 %v2219
        %2323 = vmatprep.subr.mxu0 0.0
        %2324 = vmatpush1.msra.mxu0 %v2220
        %2325 = vmatprep.subr.mxu0 0.0
        %2326 = vmatpush1.msra.mxu0 %v2221
        %2327 = vmatprep.subr.mxu0 0.0
        %2328 = vmatpush1.msra.mxu0 %v2222
        %2329 = vmatprep.subr.mxu0 0.0
        %2330 = vmatpush1.msra.mxu0 %v2223
        %2331 = vmatprep.subr.mxu0 0.0
        %2332 = vmatpush1.msra.mxu0 %v2224
        %2333 = vmatprep.subr.mxu0 0.0
        %2334 = vmatpush1.msra.mxu0 %v2225
        %2335 = vmatprep.subr.mxu0 0.0
        %2336 = vmatpush1.msra.mxu0 %v2226
        %2337 = vmatprep.subr.mxu0 0.0
        %2338 = vmatpush1.msra.mxu0 %v2227
        %2339 = vmatprep.subr.mxu0 0.0
        %2340 = vmatpush1.msra.mxu0 %v2228
        %2341 = vmatprep.subr.mxu0 0.0
        %2342 = vmatpush1.msra.mxu0 %v2229
        %2343 = vmatprep.subr.mxu0 0.0
        %2344 = vmatpush1.msra.mxu0 0.0
        %2345 = vmatprep.subr.mxu0 0.0
        %2346 = vmatpush1.msra.mxu0 0.0
        %2347 = vmatprep.subr.mxu0 0.0
        %2348 = vmatpush1.msra.mxu0 0.0
        %2349 = vmatprep.subr.mxu0 0.0
        %2350 = vmatpush1.msra.mxu0 0.0
        %2351 = vmatprep.subr.mxu0 0.0
        %2352 = vmatpush1.msra.mxu0 0.0
        %2353 = vmatprep.subr.mxu0 0.0
        %2354 = vmatpush1.msra.mxu0 0.0
        %2355 = vmatprep.subr.mxu0 0.0
        %2356 = vmatpush1.msra.mxu0 0.0
        %2357 = vmatprep.subr.mxu0 0.0
        %2358 = vmatpush1.msra.mxu0 0.0
        %2359 = vmatprep.subr.mxu0 0.0
        %2360 = vmatpush1.msra.mxu0 0.0
        %2361 = vmatprep.subr.mxu0 0.0
        %2362 = vmatpush1.msra.mxu0 0.0
        %2363 = vmatprep.subr.mxu0 0.0
        %2364 = vmatpush1.msra.mxu0 0.0
        %2365 = vmatprep.subr.mxu0 0.0
        %2366 = vmatpush1.msra.mxu0 0.0
        %2367 = vmatprep.subr.mxu0 0.0
        %2368 = vmatpush1.msra.mxu0 0.0
        %2369 = vmatprep.subr.mxu0 0.0
        %2370 = vmatpush1.msra.mxu0 0.0
        %2371 = vmatprep.subr.mxu0 0.0
        %2372 = vmatpush1.msra.mxu0 0.0
        %2373 = vmatprep.subr.mxu0 0.0
        %2374 = vmatpush1.msra.mxu0 0.0
        %2375 = vmatprep.subr.mxu0 0.0
        %2376 = vmatpush1.msra.mxu0 0.0
        %2377 = vmatprep.subr.mxu0 0.0
        %2378 = vmatpush1.msra.mxu0 0.0
        %2379 = vmatprep.subr.mxu0 0.0
        %2380 = vmatpush1.msra.mxu0 0.0
        %2381 = vmatprep.subr.mxu0 0.0
        %2382 = vmatpush1.msra.mxu0 0.0
        %2383 = vmatprep.mubr.f32.mxu0 0.0
        %2384 = vmatmul.mubr.f32.gmra.mrb[0].mxu0 %v2317
        %v2385 = vpop.f32.mrb[0].mxu0
        %v2386 = vadd.f32 %v2313, %v2385
        %v2387 = vpop.f32.mrb[0].mxu0
        %2388 = vdwg.mxu0
        %v2389 = vld [vmem:[#allocation4 + $0x8] sm:$0xff]
        %v2390 = vld [vmem:[%s1833] sm:$0xff]
        %v2391 = vld [vmem:[%s1833 + $0x8] sm:$0xff]
        %v2392 = vld [vmem:[%s1833 + $0x10] sm:$0xff]
        %v2393 = vld [vmem:[%s1833 + $0x18] sm:$0xff]
        %v2394 = vld [vmem:[%s1833 + $0x20] sm:$0xff]
        %v2395 = vld [vmem:[%s1833 + $0x28] sm:$0xff]
        %v2396 = vld [vmem:[%s1833 + $0x30] sm:$0xff]
        %v2397 = vld [vmem:[%s1833 + $0x38] sm:$0xff]
        %v2398 = vld [vmem:[%s1833 + $0x40] sm:$0xff]
        %v2399 = vld [vmem:[%s1833 + $0x48] sm:$0xff]
        %v2400 = vld [vmem:[%s1833 + $0x50] sm:$0xff]
        %v2401 = vld [vmem:[%s1833 + $0x58] sm:$0xff]
        %v2403 = vsel %vm1656, %v2389, 0
        %2405 = vmatprep.subr.mxu0 0.0
        %2406 = vmatpush1.msra.mxu0 %v2390
        %2407 = vmatprep.subr.mxu0 0.0
        %2408 = vmatpush1.msra.mxu0 %v2391
        %2409 = vmatprep.subr.mxu0 0.0
        %2410 = vmatpush1.msra.mxu0 %v2392
        %2411 = vmatprep.subr.mxu0 0.0
        %2412 = vmatpush1.msra.mxu0 %v2393
        %2413 = vmatprep.subr.mxu0 0.0
        %2414 = vmatpush1.msra.mxu0 %v2394
        %2415 = vmatprep.subr.mxu0 0.0
        %2416 = vmatpush1.msra.mxu0 %v2395
        %2417 = vmatprep.subr.mxu0 0.0
        %2418 = vmatpush1.msra.mxu0 %v2396
        %2419 = vmatprep.subr.mxu0 0.0
        %2420 = vmatpush1.msra.mxu0 %v2397
        %2421 = vmatprep.subr.mxu0 0.0
        %2422 = vmatpush1.msra.mxu0 %v2398
        %2423 = vmatprep.subr.mxu0 0.0
        %2424 = vmatpush1.msra.mxu0 %v2399
        %2425 = vmatprep.subr.mxu0 0.0
        %2426 = vmatpush1.msra.mxu0 %v2400
        %2427 = vmatprep.subr.mxu0 0.0
        %2428 = vmatpush1.msra.mxu0 %v2401
        %2429 = vmatprep.subr.mxu0 0.0
        %2430 = vmatpush1.msra.mxu0 0.0
        %2431 = vmatprep.subr.mxu0 0.0
        %2432 = vmatpush1.msra.mxu0 0.0
        %2433 = vmatprep.subr.mxu0 0.0
        %2434 = vmatpush1.msra.mxu0 0.0
        %2435 = vmatprep.subr.mxu0 0.0
        %2436 = vmatpush1.msra.mxu0 0.0
        %2437 = vmatprep.subr.mxu0 0.0
        %2438 = vmatpush1.msra.mxu0 0.0
        %2439 = vmatprep.subr.mxu0 0.0
        %2440 = vmatpush1.msra.mxu0 0.0
        %2441 = vmatprep.subr.mxu0 0.0
        %2442 = vmatpush1.msra.mxu0 0.0
        %2443 = vmatprep.subr.mxu0 0.0
        %2444 = vmatpush1.msra.mxu0 0.0
        %2445 = vmatprep.subr.mxu0 0.0
        %2446 = vmatpush1.msra.mxu0 0.0
        %2447 = vmatprep.subr.mxu0 0.0
        %2448 = vmatpush1.msra.mxu0 0.0
        %2449 = vmatprep.subr.mxu0 0.0
        %2450 = vmatpush1.msra.mxu0 0.0
        %2451 = vmatprep.subr.mxu0 0.0
        %2452 = vmatpush1.msra.mxu0 0.0
        %2453 = vmatprep.subr.mxu0 0.0
        %2454 = vmatpush1.msra.mxu0 0.0
        %2455 = vmatprep.subr.mxu0 0.0
        %2456 = vmatpush1.msra.mxu0 0.0
        %2457 = vmatprep.subr.mxu0 0.0
        %2458 = vmatpush1.msra.mxu0 0.0
        %2459 = vmatprep.subr.mxu0 0.0
        %2460 = vmatpush1.msra.mxu0 0.0
        %2461 = vmatprep.subr.mxu0 0.0
        %2462 = vmatpush1.msra.mxu0 0.0
        %2463 = vmatprep.subr.mxu0 0.0
        %2464 = vmatpush1.msra.mxu0 0.0
        %2465 = vmatprep.subr.mxu0 0.0
        %2466 = vmatpush1.msra.mxu0 0.0
        %2467 = vmatprep.subr.mxu0 0.0
        %2468 = vmatpush1.msra.mxu0 0.0
        %2469 = vmatprep.mubr.f32.mxu0 0.0
        %2470 = vmatmul.mubr.f32.gmra.mrb[0].mxu0 %v2403
        %v2471 = vpop.f32.mrb[0].mxu0
        %v2472 = vadd.f32 0.0, %v2471
        %v2473 = vpop.f32.mrb[0].mxu0
        %2474 = vdwg.mxu0
        %v2475 = vadd.f32 %v2386, %v2472
        %v2476 = vadd.f32 %v2475, %v1924
        %v2477 = vmax.f32 %v2476, 0.0
        %2479 = vrot.lane.b32.xlu0 %v2477, 64
        %v2480 = vpop.permute.xlu0 %2479
        %2482 = vst.msk [vmem:[#allocation5] sm:$0xff] %vm600, %v2480
        %v2483 = vld [vmem:[#allocation5] sm:$0xff]
        %v2484 = vld [vmem:[%s5] sm:$0xff]
        %v2485 = vld [vmem:[%s5 + $0x8] sm:$0xff]
        %v2486 = vld [vmem:[%s5 + $0x10] sm:$0xff]
        %v2487 = vld [vmem:[%s5 + $0x18] sm:$0xff]
        %v2488 = vld [vmem:[%s5 + $0x20] sm:$0xff]
        %v2489 = vld [vmem:[%s5 + $0x28] sm:$0xff]
        %v2490 = vld [vmem:[%s5 + $0x30] sm:$0xff]
        %v2491 = vld [vmem:[%s5 + $0x38] sm:$0xff]
        %v2492 = vld [vmem:[%s5 + $0x40] sm:$0xff]
        %v2493 = vld [vmem:[%s5 + $0x48] sm:$0xff]
        %v2494 = vld [vmem:[%s5 + $0x50] sm:$0xff]
        %v2495 = vld [vmem:[%s5 + $0x58] sm:$0xff]
        %v2496 = vld [vmem:[%s6] sm:$0x1]
        %v2498 = vlaneseq
        %v2499 = vshrl.u32 %v2498, 7
        %v2500 = vsub.s32 0, %v2499
        %v2501 = vrot.slane %v2496, %v2500
        %v2504 = vsel %vm1656, %v2483, 0
        %2506 = vmatprep.subr.mxu0 0.0
        %2507 = vmatpush1.msra.mxu0 %v2484
        %2508 = vmatprep.subr.mxu0 0.0
        %2509 = vmatpush1.msra.mxu0 %v2485
        %2510 = vmatprep.subr.mxu0 0.0
        %2511 = vmatpush1.msra.mxu0 %v2486
        %2512 = vmatprep.subr.mxu0 0.0
        %2513 = vmatpush1.msra.mxu0 %v2487
        %2514 = vmatprep.subr.mxu0 0.0
        %2515 = vmatpush1.msra.mxu0 %v2488
        %2516 = vmatprep.subr.mxu0 0.0
        %2517 = vmatpush1.msra.mxu0 %v2489
        %2518 = vmatprep.subr.mxu0 0.0
        %2519 = vmatpush1.msra.mxu0 %v2490
        %2520 = vmatprep.subr.mxu0 0.0
        %2521 = vmatpush1.msra.mxu0 %v2491
        %2522 = vmatprep.subr.mxu0 0.0
        %2523 = vmatpush1.msra.mxu0 %v2492
        %2524 = vmatprep.subr.mxu0 0.0
        %2525 = vmatpush1.msra.mxu0 %v2493
        %2526 = vmatprep.subr.mxu0 0.0
        %2527 = vmatpush1.msra.mxu0 %v2494
        %2528 = vmatprep.subr.mxu0 0.0
        %2529 = vmatpush1.msra.mxu0 %v2495
        %2530 = vmatprep.subr.mxu0 0.0
        %2531 = vmatpush1.msra.mxu0 0.0
        %2532 = vmatprep.subr.mxu0 0.0
        %2533 = vmatpush1.msra.mxu0 0.0
        %2534 = vmatprep.subr.mxu0 0.0
        %2535 = vmatpush1.msra.mxu0 0.0
        %2536 = vmatprep.subr.mxu0 0.0
        %2537 = vmatpush1.msra.mxu0 0.0
        %2538 = vmatprep.subr.mxu0 0.0
        %2539 = vmatpush1.msra.mxu0 0.0
        %2540 = vmatprep.subr.mxu0 0.0
        %2541 = vmatpush1.msra.mxu0 0.0
        %2542 = vmatprep.subr.mxu0 0.0
        %2543 = vmatpush1.msra.mxu0 0.0
        %2544 = vmatprep.subr.mxu0 0.0
        %2545 = vmatpush1.msra.mxu0 0.0
        %2546 = vmatprep.subr.mxu0 0.0
        %2547 = vmatpush1.msra.mxu0 0.0
        %2548 = vmatprep.subr.mxu0 0.0
        %2549 = vmatpush1.msra.mxu0 0.0
        %2550 = vmatprep.subr.mxu0 0.0
        %2551 = vmatpush1.msra.mxu0 0.0
        %2552 = vmatprep.subr.mxu0 0.0
        %2553 = vmatpush1.msra.mxu0 0.0
        %2554 = vmatprep.subr.mxu0 0.0
        %2555 = vmatpush1.msra.mxu0 0.0
        %2556 = vmatprep.subr.mxu0 0.0
        %2557 = vmatpush1.msra.mxu0 0.0
        %2558 = vmatprep.subr.mxu0 0.0
        %2559 = vmatpush1.msra.mxu0 0.0
        %2560 = vmatprep.subr.mxu0 0.0
        %2561 = vmatpush1.msra.mxu0 0.0
        %2562 = vmatprep.subr.mxu0 0.0
        %2563 = vmatpush1.msra.mxu0 0.0
        %2564 = vmatprep.subr.mxu0 0.0
        %2565 = vmatpush1.msra.mxu0 0.0
        %2566 = vmatprep.subr.mxu0 0.0
        %2567 = vmatpush1.msra.mxu0 0.0
        %2568 = vmatprep.subr.mxu0 0.0
        %2569 = vmatpush1.msra.mxu0 0.0
        %2570 = vmatprep.mubr.f32.mxu0 0.0
        %2571 = vmatmul.mubr.f32.gmra.mrb[0].mxu0 %v2504
        %v2572 = vpop.f32.mrb[0].mxu0
        %v2573 = vadd.f32 %v2501, %v2572
        %v2574 = vpop.f32.mrb[0].mxu0
        %2575 = vdwg.mxu0
        %2576 = vst [vmem:[%s295] sm:$0xff] %v2573
        %s2577 = sand.u32 %s197, 1
        %s2578 = scalar_lea.sflag [#allocation7], %s2577
        %s2579 = sand.u32 %s197, 1
        %s2580 = smul.addr %s2579, 8
        %s2581 = scalar_lea.vmem [#allocation6], %s2580
        // Predicated region
        $region49: #{tpu_custom_call.1} parent=47 // pred_check
          %p2582 = pneg %p207
        $region50: #{tpu_custom_call.1} parent=47 // pred_check_branch
          %2584 = sbr.rel (%p2582) target = $region52
        $region51: #{tpu_custom_call.1} parent=47 // pred_region
          %s2586 = ssub.s32 128, 128
          %2587 = vsyncadd %s2578, %s2586
          %s2588 = sadd.s32 %s26, %s25
          %s2589 = smul.addr %s2588, 128
          %s2590 = scalar_lea.hbm %s7, %s2589
          %s2592 = sshll.u32 %s2581, 4
          %s2593 = int_to_ptr.vmem [resolvable:$true] %s2592
          %2595 = dma.vmem_to_hbm [thread:$0]  %s2593, 128, %s2590, %s2578
        $region52: #{tpu_custom_call.1} parent=47 // pred_fallthru
          _
      $region48: #{tpu_custom_call.1} parent=5 // pred_fallthru
        _
      %p2596 = scmp.le.s32.totalorder 2, %s16
      // Predicated region
      $region53: #{tpu_custom_call.1} parent=5 // pred_check
        %p2597 = pneg %p2596
      $region54: #{tpu_custom_call.1} parent=5 // pred_check_branch
        %2599 = sbr.rel (%p2597) target = $region56
      $region55: #{tpu_custom_call.1} parent=5 // pred_region
        %s2600 = ssub.s32 %s16, 2
        // Predicated region
        $region57: #{tpu_custom_call.1} parent=55 // pred_check
          %p2601 = pneg %p213
        $region58: #{tpu_custom_call.1} parent=55 // pred_check_branch
          %2603 = sbr.rel (%p2601) target = $region60
        $region59: #{tpu_custom_call.1} parent=55 // pred_region
          %s2604 = sand.u32 %s198, 1
          %s2605 = scalar_lea.sflag [#allocation7], %s2604
          %s2606 = sand.u32 %s198, 1
          %s2607 = smul.addr %s2606, 8
          %s2608 = scalar_lea.vmem [#allocation6], %s2607
          %2609 = dma.done %s2605, 128
        $region60: #{tpu_custom_call.1} parent=55 // pred_fallthru
          _
      $region56: #{tpu_custom_call.1} parent=5 // pred_fallthru
        _
    $region6: #{tpu_custom_call.1} parent=1 // loop_footer
      %s20 = sadd.s32 1, %s16
    $region7: #{tpu_custom_call.1} parent=1 // loop_footer_branch
      %15 = sbr.rel target = $region3
    $region8: #{tpu_custom_call.1} parent=1 // loop_exit
      _
    %2610 = vsyncpa [#allocation7], 1
    %s2611 = scalar_lea.sflag [#allocation7], 1
    %2612 = vsyncpa %s2611, 1

</llo_original>
